<compile_context>
chip_gen: v5e
topology: v5e:2x2
jax: 0.10.0
libtpu: 0.0.40
codegen_flags: <defaults>
</compile_context>

<pallas_src>
import functools

import numpy as np
import jax
import jax.numpy as jnp
from jax.experimental import pallas as pl
from jax.experimental.pallas import tpu as pltpu


# ---------------------------------------------------------------------------
# Fused forward kernel (single invocation, no grid)
# ---------------------------------------------------------------------------
def _discriminator_kernel(x_ref, s_ref, t_ref, rows_ref, r_ref, rt_ref,
                          out_ref, act0, act1, act2, act3, tap_ref,
                          *, meta, batch, negative_slope, eps):
    """meta[li] = (h, w, cin, cout, ho, wo, stride, bn, bn_idx)   (all static).

    x_ref    : (N*H0, W0*Cin0) f32   input, rows=(n,h), cols=(w,c)
    s_ref    : (5, 64, 32)     bf16  batch-invariant H-tap selection (4*Ho, H), padded
    t_ref    : (5, 4, Kmax, Nmax) bf16 banded W-tap/channel-mix matrices, padded
    rows_ref : (5, 2, Nmax)    f32   [bias, 0] for plain layers, [gamma, beta] for BN
    r_ref    : (3, Nmax, Cmax) f32   channel gather R (Wo*Cout, Cout), padded
    rt_ref   : (3, Cmax, Nmax) f32   R transposed, padded
    act*     : f32 VMEM scratch holding each layer's output activation
    tap_ref  : (4, N*Ho_max, Kmax) f32 VMEM staging for the 4 H-tap slices
    """
    acts = (act0, act1, act2, act3)
    n_layers = len(meta)

    for li, (h, w, cin, cout, ho, wo, _stride, bn, bn_idx) in enumerate(meta):
        k_in = w * cin
        n_out = wo * cout
        m_out = batch * ho
        last = li == n_layers - 1
        src = x_ref if li == 0 else acts[li - 1]

        s_mat = s_ref[li, :4 * ho, :h]                      # bf16 (4*Ho, H)

        # ---- H-axis taps (stride + zero pad): one tiny batch-invariant matmul per
        #      sample, staged into VMEM so the big matmuls below run at M = N*Ho.
        for n in range(batch):
            a_n = src[n * h:(n + 1) * h, :].astype(jnp.bfloat16)          # (H, W*Cin)
            b = jnp.dot(s_mat, a_n, preferred_element_type=jnp.float32)   # (4*Ho, W*Cin)
            for kh in range(4):
                tap_ref[kh, n * ho:(n + 1) * ho, :k_in] = b[kh * ho:(kh + 1) * ho, :]

        # ---- W-axis taps + Cin->Cout mixing: 4 independent MXU matmuls, tree-summed.
        parts = [
            jnp.dot(tap_ref[kh, :m_out, :k_in].astype(jnp.bfloat16),
                    t_ref[li, kh, :k_in, :n_out],
                    preferred_element_type=jnp.float32)
            for kh in range(4)
        ]
        y = (parts[0] + parts[1]) + (parts[2] + parts[3])   # (N*Ho, Wo*Cout) f32

        if bn:
            # Training-mode BatchNorm (batch stats over N,Ho,Wo; biased variance).
            # Conv bias is skipped: a per-channel constant is exactly cancelled by
            # the mean subtraction.  gamma is folded into the rsqrt scale.
            inv_count = 1.0 / float(m_out * wo)
            r_mat = r_ref[bn_idx, :n_out, :cout]
            rt_mat = rt_ref[bn_idx, :cout, :n_out]
            s1 = jnp.sum(y, axis=0, keepdims=True)
            s2 = jnp.sum(y * y, axis=0, keepdims=True)
            mean = jnp.dot(jnp.dot(s1, r_mat, preferred_element_type=jnp.float32),
                           rt_mat, preferred_element_type=jnp.float32) * inv_count
            ex2 = jnp.dot(jnp.dot(s2, r_mat, preferred_element_type=jnp.float32),
                          rt_mat, preferred_element_type=jnp.float32) * inv_count
            var = ex2 - mean * mean
            gamma = rows_ref[li, 0:1, :n_out]
            beta = rows_ref[li, 1:2, :n_out]
            scale = gamma * jax.lax.rsqrt(var + eps)
            shift = beta - mean * scale
            y = y * scale + shift
            y = jnp.where(y > 0, y, negative_slope * y)     # LeakyReLU(0.2)
        else:
            y = y + rows_ref[li, 0:1, :n_out]               # conv bias
            if not last:
                y = jnp.where(y > 0, y, negative_slope * y) # LeakyReLU(0.2)
            # Final layer: raw conv output (no activation), as in the PyTorch model.

        if last:
            out_ref[...] = y
        else:
            acts[li][...] = y


# ---------------------------------------------------------------------------
# One-time shape / weight preprocessing (numpy, outside the kernel)
# ---------------------------------------------------------------------------
def _layer_defs(in_channels, features):
    return (
        (in_channels,   features,     2, False),
        (features,      features * 2, 2, True),
        (features * 2,  features * 4, 2, True),
        (features * 4,  features * 8, 1, True),
        (features * 8,  1,            1, False),
    )


def _prepare(params, batch, height, width, in_channels, features):
    defs = _layer_defs(in_channels, features)
    meta = []
    s_list, t_list, rows_list, r_list, rt_list = [], [], [], [], []
    h, w = height, width
    bn_count = 0

    for li, (cin, cout, stride, bn) in enumerate(defs, start=1):
        ho = (h + 2 - 4) // stride + 1
        wo = (w + 2 - 4) // stride + 1

        # Batch-invariant H-tap selection: S[kh*ho+o, i] = 1 iff i == stride*o+kh-1.
        s = np.zeros((4 * ho, h), np.float32)
        # W-tap selection: m_tap[kw, i, o] = 1 iff i == stride*o+kw-1.
        m_tap = np.zeros((4, w, wo), np.float32)
        for k in range(4):
            for o in range(ho):
                i = stride * o + k - 1
                if 0 <= i < h:
                    s[k * ho + o, i] = 1.0
            for o in range(wo):
                i = stride * o + k - 1
                if 0 <= i < w:
                    m_tap[k, i, o] = 1.0

        w_np = np.asarray(params[f"w{li}"], np.float32)          # (cout, cin, 4, 4)
        w_t = np.transpose(w_np, (2, 3, 1, 0))                   # (kh, kw, cin, cout)
        t = np.einsum("kio,hkcd->hicod", m_tap, w_t).reshape(4, w * cin, wo * cout)

        rows = np.zeros((2, wo * cout), np.float32)
        if bn:
            rows[0] = np.tile(np.asarray(params[f"g{li}"], np.float32), wo)
            rows[1] = np.tile(np.asarray(params[f"be{li}"], np.float32), wo)
            r = np.tile(np.eye(cout, dtype=np.float32), (wo, 1))  # (wo*cout, cout)
            r_list.append(r)
            rt_list.append(np.ascontiguousarray(r.T))
            bn_idx = bn_count
            bn_count += 1
        else:
            rows[0] = np.tile(np.asarray(params[f"b{li}"], np.float32), wo)
            bn_idx = -1

        s_list.append(s)
        t_list.append(t)
        rows_list.append(rows)
        meta.append((h, w, cin, cout, ho, wo, stride, bn, bn_idx))
        h, w = ho, wo

    n_layers = len(defs)
    s_r = max(a.shape[0] for a in s_list)
    s_c = max(a.shape[1] for a in s_list)
    t_k = max(a.shape[1] for a in t_list)
    t_n = max(a.shape[2] for a in t_list)
    r_r = max(a.shape[0] for a in r_list)
    r_c = max(a.shape[1] for a in r_list)

    s_blob = np.zeros((n_layers, s_r, s_c), np.float32)
    t_blob = np.zeros((n_layers, 4, t_k, t_n), np.float32)
    rows_blob = np.zeros((n_layers, 2, t_n), np.float32)
    r_blob = np.zeros((len(r_list), r_r, r_c), np.float32)
    rt_blob = np.zeros((len(r_list), r_c, r_r), np.float32)
    for i in range(n_layers):
        a = s_list[i]; s_blob[i, :a.shape[0], :a.shape[1]] = a
        a = t_list[i]; t_blob[i, :, :a.shape[1], :a.shape[2]] = a
        a = rows_list[i]; rows_blob[i, :, :a.shape[1]] = a
    for i in range(len(r_list)):
        a = r_list[i]; r_blob[i, :a.shape[0], :a.shape[1]] = a
        a = rt_list[i]; rt_blob[i, :a.shape[0], :a.shape[1]] = a

    operands = (
        jnp.asarray(s_blob, jnp.bfloat16),     # selection is 0/1 -> exact in bf16
        jnp.asarray(t_blob, jnp.bfloat16),     # MXU-native weights
        jnp.asarray(rows_blob, jnp.float32),
        jnp.asarray(r_blob, jnp.float32),
        jnp.asarray(rt_blob, jnp.float32),
    )
    return operands, tuple(meta), (t_k, t_n)


def make_discriminator_forward(params, batch, height, width,
                               in_channels=1, features=8):
    operands, meta, (max_k, _max_n) = _prepare(
        params, batch, height, width, in_channels, features)

    ho_last, wo_last, cout_last = meta[-1][4], meta[-1][5], meta[-1][3]
    max_mo = max(batch * m[4] for m in meta)

    kernel = functools.partial(_discriminator_kernel, meta=meta, batch=batch,
                               negative_slope=0.2, eps=1e-5)

    # Per-layer activation scratch (f32) + one tap-staging scratch (f32).
    act_shapes = [(batch * m[4], m[5] * m[3]) for m in meta[:-1]]
    scratch_shapes = ([pltpu.VMEM(sh, jnp.float32) for sh in act_shapes]
                      + [pltpu.VMEM((4, max_mo, max_k), jnp.float32)])

    # Size the VMEM request from the actual footprint (with 2x headroom).
    x_bytes = batch * height * width * in_channels * 4
    op_bytes = sum(int(o.size) * o.dtype.itemsize for o in operands)
    scratch_bytes = (sum(a * b for a, b in act_shapes) + 4 * max_mo * max_k) * 4
    out_bytes = batch * ho_last * wo_last * cout_last * 4
    vmem_limit = int(2 * (x_bytes + op_bytes + scratch_bytes + out_bytes)) + (2 << 20)

    vmem = pl.BlockSpec(memory_space=pltpu.MemorySpace.VMEM)
    fused = pl.pallas_call(
        kernel,
        out_shape=jax.ShapeDtypeStruct((batch * ho_last, wo_last * cout_last),
                                       jnp.float32),
        in_specs=[vmem] * (1 + len(operands)),
        out_specs=vmem,
        scratch_shapes=scratch_shapes,
        compiler_params=pltpu.CompilerParams(vmem_limit_bytes=vmem_limit),
    )

    def forward(x_nchw):
        n, c, hh, ww = x_nchw.shape
        # NCHW -> (N*H, W*C) row/col layout expected by the kernel.
        a0 = jnp.transpose(x_nchw.astype(jnp.float32), (0, 2, 3, 1))
        a0 = a0.reshape(n * hh, ww * c)
        y = fused(a0, *operands)
        # (N*Ho, Wo*Cout) -> NCHW, matching the PyTorch module output.
        return y.reshape(n, ho_last, wo_last, cout_last).transpose(0, 3, 1, 2)

    return forward


# ---------------------------------------------------------------------------
# Parameters (PyTorch layout: Conv2d (Cout, Cin, 4, 4) weights, per-C BN affine)
# ---------------------------------------------------------------------------
def init_params(key, in_channels=1, features=8):
    ch = [in_channels, features, features * 2, features * 4, features * 8, 1]
    params = {}
    keys = jax.random.split(key, 2 * (len(ch) - 1))
    for li in range(5):
        cin, cout = ch[li], ch[li + 1]
        wk, bk = keys[2 * li], keys[2 * li + 1]
        params[f"w{li + 1}"] = 0.05 * jax.random.normal(wk, (cout, cin, 4, 4), jnp.float32)
        params[f"b{li + 1}"] = 0.05 * jax.random.normal(bk, (cout,), jnp.float32)
    for li, c in zip((2, 3, 4), (features * 2, features * 4, features * 8)):
        params[f"g{li}"] = jnp.ones((c,), jnp.float32)
        params[f"be{li}"] = jnp.zeros((c,), jnp.float32)
    return params


if __name__ == "__main__":
    key = jax.random.PRNGKey(0)
    pkey, xkey = jax.random.split(key)

    in_channels, features = 1, 8
    batch, size = 2, 32          # spatial: 32 -> 16 -> 8 -> 4 -> 3 -> 2

    params = init_params(pkey, in_channels=in_channels, features=features)
    x = jax.random.normal(xkey, (batch, in_channels, size, size), jnp.float32)

    forward = make_discriminator_forward(params, batch, size, size,
                                         in_channels=in_channels,
                                         features=features)
    out = forward(x)
    jax.block_until_ready(out)

    assert out.shape == (batch, 1, 2, 2), out.shape
    assert bool(jnp.all(jnp.isfinite(out)))
    print("KERNEL_OK")
</pallas_src>

<mosaic_0001>
module attributes {stable_mosaic.version = 11 : i64} {
  func.func @_discriminator_kernel(%arg0: memref<64x32xf32, #tpu.memory_space<vmem>>, %arg1: memref<5x64x32xbf16, #tpu.memory_space<vmem>>, %arg2: memref<5x4x192x192xbf16, #tpu.memory_space<vmem>>, %arg3: memref<5x2x192xf32, #tpu.memory_space<vmem>>, %arg4: memref<3x192x64xf32, #tpu.memory_space<vmem>>, %arg5: memref<3x64x192xf32, #tpu.memory_space<vmem>>, %arg6: memref<4x2xf32, #tpu.memory_space<vmem>>, %arg7: memref<32x128xf32, #tpu.memory_space<vmem>>, %arg8: memref<16x128xf32, #tpu.memory_space<vmem>>, %arg9: memref<8x128xf32, #tpu.memory_space<vmem>>, %arg10: memref<6x192xf32, #tpu.memory_space<vmem>>, %arg11: memref<4x32x192xf32, #tpu.memory_space<vmem>>) attributes {dimension_semantics = [], scalar_prefetch = 0 : i64, scratch_operands = 5 : i64, tpu.core_type = #tpu.core_type<tc>} {
    %c0 = arith.constant 0 : index
    %c0_0 = arith.constant 0 : index
    %c0_1 = arith.constant 0 : index
    %0 = vector.load %arg1[%c0, %c0_0, %c0_1] : memref<5x64x32xbf16, #tpu.memory_space<vmem>>, vector<1x64x32xbf16>
    %1 = vector.shape_cast %0 : vector<1x64x32xbf16> to vector<64x32xbf16>
    %c0_2 = arith.constant 0 : index
    %c0_3 = arith.constant 0 : index
    %2 = vector.load %arg0[%c0_2, %c0_3] : memref<64x32xf32, #tpu.memory_space<vmem>>, vector<32x32xf32>
    %3 = arith.truncf %2 : vector<32x32xf32> to vector<32x32xbf16>
    %cst = arith.constant dense<0.000000e+00> : vector<64x32xf32>
    %4 = tpu.matmul %1, %3, %cst {dimension_numbers = #tpu.dot_dimension_numbers<[1], [0], [0], [1], [0, 0, 1, 1], [], []>} : vector<64x32xbf16>, vector<32x32xbf16>, vector<64x32xf32> -> vector<64x32xf32>
    %5 = vector.extract_strided_slice %4 {offsets = [0, 0], sizes = [16, 32], strides = [1, 1]} : vector<64x32xf32> to vector<16x32xf32>
    %c0_4 = arith.constant 0 : index
    %c0_5 = arith.constant 0 : index
    %c0_6 = arith.constant 0 : index
    %6 = vector.load %arg11[%c0_4, %c0_5, %c0_6] : memref<4x32x192xf32, #tpu.memory_space<vmem>>, vector<1x16x32xf32>
    %7 = vector.shape_cast %6 : vector<1x16x32xf32> to vector<16x32xf32>
    %8 = vector.shape_cast %5 : vector<16x32xf32> to vector<1x16x32xf32>
    tpu.vector_store %arg11[%c0_4, %c0_5, %c0_6], %8 {strides = array<i32>} : memref<4x32x192xf32, #tpu.memory_space<vmem>>, vector<1x16x32xf32>,
    %9 = vector.extract_strided_slice %4 {offsets = [16, 0], sizes = [16, 32], strides = [1, 1]} : vector<64x32xf32> to vector<16x32xf32>
    %c1 = arith.constant 1 : index
    %c0_7 = arith.constant 0 : index
    %c0_8 = arith.constant 0 : index
    %10 = vector.load %arg11[%c1, %c0_7, %c0_8] : memref<4x32x192xf32, #tpu.memory_space<vmem>>, vector<1x16x32xf32>
    %11 = vector.shape_cast %10 : vector<1x16x32xf32> to vector<16x32xf32>
    %12 = vector.shape_cast %9 : vector<16x32xf32> to vector<1x16x32xf32>
    tpu.vector_store %arg11[%c1, %c0_7, %c0_8], %12 {strides = array<i32>} : memref<4x32x192xf32, #tpu.memory_space<vmem>>, vector<1x16x32xf32>,
    %13 = vector.extract_strided_slice %4 {offsets = [32, 0], sizes = [16, 32], strides = [1, 1]} : vector<64x32xf32> to vector<16x32xf32>
    %c2 = arith.constant 2 : index
    %c0_9 = arith.constant 0 : index
    %c0_10 = arith.constant 0 : index
    %14 = vector.load %arg11[%c2, %c0_9, %c0_10] : memref<4x32x192xf32, #tpu.memory_space<vmem>>, vector<1x16x32xf32>
    %15 = vector.shape_cast %14 : vector<1x16x32xf32> to vector<16x32xf32>
    %16 = vector.shape_cast %13 : vector<16x32xf32> to vector<1x16x32xf32>
    tpu.vector_store %arg11[%c2, %c0_9, %c0_10], %16 {strides = array<i32>} : memref<4x32x192xf32, #tpu.memory_space<vmem>>, vector<1x16x32xf32>,
    %17 = vector.extract_strided_slice %4 {offsets = [48, 0], sizes = [16, 32], strides = [1, 1]} : vector<64x32xf32> to vector<16x32xf32>
    %c3 = arith.constant 3 : index
    %c0_11 = arith.constant 0 : index
    %c0_12 = arith.constant 0 : index
    %18 = vector.load %arg11[%c3, %c0_11, %c0_12] : memref<4x32x192xf32, #tpu.memory_space<vmem>>, vector<1x16x32xf32>
    %19 = vector.shape_cast %18 : vector<1x16x32xf32> to vector<16x32xf32>
    %20 = vector.shape_cast %17 : vector<16x32xf32> to vector<1x16x32xf32>
    tpu.vector_store %arg11[%c3, %c0_11, %c0_12], %20 {strides = array<i32>} : memref<4x32x192xf32, #tpu.memory_space<vmem>>, vector<1x16x32xf32>,
    %c32 = arith.constant 32 : index
    %c0_13 = arith.constant 0 : index
    %21 = vector.load %arg0[%c32, %c0_13] : memref<64x32xf32, #tpu.memory_space<vmem>>, vector<32x32xf32>
    %22 = arith.truncf %21 : vector<32x32xf32> to vector<32x32xbf16>
    %cst_14 = arith.constant dense<0.000000e+00> : vector<64x32xf32>
    %23 = tpu.matmul %1, %22, %cst_14 {dimension_numbers = #tpu.dot_dimension_numbers<[1], [0], [0], [1], [0, 0, 1, 1], [], []>} : vector<64x32xbf16>, vector<32x32xbf16>, vector<64x32xf32> -> vector<64x32xf32>
    %24 = vector.extract_strided_slice %23 {offsets = [0, 0], sizes = [16, 32], strides = [1, 1]} : vector<64x32xf32> to vector<16x32xf32>
    %c0_15 = arith.constant 0 : index
    %c16 = arith.constant 16 : index
    %c0_16 = arith.constant 0 : index
    %25 = vector.load %arg11[%c0_15, %c16, %c0_16] : memref<4x32x192xf32, #tpu.memory_space<vmem>>, vector<1x16x32xf32>
    %26 = vector.shape_cast %25 : vector<1x16x32xf32> to vector<16x32xf32>
    %27 = vector.shape_cast %24 : vector<16x32xf32> to vector<1x16x32xf32>
    tpu.vector_store %arg11[%c0_15, %c16, %c0_16], %27 {strides = array<i32>} : memref<4x32x192xf32, #tpu.memory_space<vmem>>, vector<1x16x32xf32>,
    %28 = vector.extract_strided_slice %23 {offsets = [16, 0], sizes = [16, 32], strides = [1, 1]} : vector<64x32xf32> to vector<16x32xf32>
    %c1_17 = arith.constant 1 : index
    %c16_18 = arith.constant 16 : index
    %c0_19 = arith.constant 0 : index
    %29 = vector.load %arg11[%c1_17, %c16_18, %c0_19] : memref<4x32x192xf32, #tpu.memory_space<vmem>>, vector<1x16x32xf32>
    %30 = vector.shape_cast %29 : vector<1x16x32xf32> to vector<16x32xf32>
    %31 = vector.shape_cast %28 : vector<16x32xf32> to vector<1x16x32xf32>
    tpu.vector_store %arg11[%c1_17, %c16_18, %c0_19], %31 {strides = array<i32>} : memref<4x32x192xf32, #tpu.memory_space<vmem>>, vector<1x16x32xf32>,
    %32 = vector.extract_strided_slice %23 {offsets = [32, 0], sizes = [16, 32], strides = [1, 1]} : vector<64x32xf32> to vector<16x32xf32>
    %c2_20 = arith.constant 2 : index
    %c16_21 = arith.constant 16 : index
    %c0_22 = arith.constant 0 : index
    %33 = vector.load %arg11[%c2_20, %c16_21, %c0_22] : memref<4x32x192xf32, #tpu.memory_space<vmem>>, vector<1x16x32xf32>
    %34 = vector.shape_cast %33 : vector<1x16x32xf32> to vector<16x32xf32>
    %35 = vector.shape_cast %32 : vector<16x32xf32> to vector<1x16x32xf32>
    tpu.vector_store %arg11[%c2_20, %c16_21, %c0_22], %35 {strides = array<i32>} : memref<4x32x192xf32, #tpu.memory_space<vmem>>, vector<1x16x32xf32>,
    %36 = vector.extract_strided_slice %23 {offsets = [48, 0], sizes = [16, 32], strides = [1, 1]} : vector<64x32xf32> to vector<16x32xf32>
    %c3_23 = arith.constant 3 : index
    %c16_24 = arith.constant 16 : index
    %c0_25 = arith.constant 0 : index
    %37 = vector.load %arg11[%c3_23, %c16_24, %c0_25] : memref<4x32x192xf32, #tpu.memory_space<vmem>>, vector<1x16x32xf32>
    %38 = vector.shape_cast %37 : vector<1x16x32xf32> to vector<16x32xf32>
    %39 = vector.shape_cast %36 : vector<16x32xf32> to vector<1x16x32xf32>
    tpu.vector_store %arg11[%c3_23, %c16_24, %c0_25], %39 {strides = array<i32>} : memref<4x32x192xf32, #tpu.memory_space<vmem>>, vector<1x16x32xf32>,
    %c0_26 = arith.constant 0 : index
    %c0_27 = arith.constant 0 : index
    %c0_28 = arith.constant 0 : index
    %40 = vector.load %arg11[%c0_26, %c0_27, %c0_28] : memref<4x32x192xf32, #tpu.memory_space<vmem>>, vector<1x32x32xf32>
    %41 = vector.shape_cast %40 : vector<1x32x32xf32> to vector<32x32xf32>
    %42 = arith.truncf %41 : vector<32x32xf32> to vector<32x32xbf16>
    %c0_29 = arith.constant 0 : index
    %c0_30 = arith.constant 0 : index
    %c0_31 = arith.constant 0 : index
    %c0_32 = arith.constant 0 : index
    %43 = vector.load %arg2[%c0_29, %c0_30, %c0_31, %c0_32] : memref<5x4x192x192xbf16, #tpu.memory_space<vmem>>, vector<1x1x32x128xbf16>
    %44 = vector.shape_cast %43 : vector<1x1x32x128xbf16> to vector<32x128xbf16>
    %cst_33 = arith.constant dense<0.000000e+00> : vector<32x128xf32>
    %45 = tpu.matmul %42, %44, %cst_33 {dimension_numbers = #tpu.dot_dimension_numbers<[1], [0], [0], [1], [0, 0, 1, 1], [], []>} : vector<32x32xbf16>, vector<32x128xbf16>, vector<32x128xf32> -> vector<32x128xf32>
    %c1_34 = arith.constant 1 : index
    %c0_35 = arith.constant 0 : index
    %c0_36 = arith.constant 0 : index
    %46 = vector.load %arg11[%c1_34, %c0_35, %c0_36] : memref<4x32x192xf32, #tpu.memory_space<vmem>>, vector<1x32x32xf32>
    %47 = vector.shape_cast %46 : vector<1x32x32xf32> to vector<32x32xf32>
    %48 = arith.truncf %47 : vector<32x32xf32> to vector<32x32xbf16>
    %c0_37 = arith.constant 0 : index
    %c1_38 = arith.constant 1 : index
    %c0_39 = arith.constant 0 : index
    %c0_40 = arith.constant 0 : index
    %49 = vector.load %arg2[%c0_37, %c1_38, %c0_39, %c0_40] : memref<5x4x192x192xbf16, #tpu.memory_space<vmem>>, vector<1x1x32x128xbf16>
    %50 = vector.shape_cast %49 : vector<1x1x32x128xbf16> to vector<32x128xbf16>
    %cst_41 = arith.constant dense<0.000000e+00> : vector<32x128xf32>
    %51 = tpu.matmul %48, %50, %cst_41 {dimension_numbers = #tpu.dot_dimension_numbers<[1], [0], [0], [1], [0, 0, 1, 1], [], []>} : vector<32x32xbf16>, vector<32x128xbf16>, vector<32x128xf32> -> vector<32x128xf32>
    %c2_42 = arith.constant 2 : index
    %c0_43 = arith.constant 0 : index
    %c0_44 = arith.constant 0 : index
    %52 = vector.load %arg11[%c2_42, %c0_43, %c0_44] : memref<4x32x192xf32, #tpu.memory_space<vmem>>, vector<1x32x32xf32>
    %53 = vector.shape_cast %52 : vector<1x32x32xf32> to vector<32x32xf32>
    %54 = arith.truncf %53 : vector<32x32xf32> to vector<32x32xbf16>
    %c0_45 = arith.constant 0 : index
    %c2_46 = arith.constant 2 : index
    %c0_47 = arith.constant 0 : index
    %c0_48 = arith.constant 0 : index
    %55 = vector.load %arg2[%c0_45, %c2_46, %c0_47, %c0_48] : memref<5x4x192x192xbf16, #tpu.memory_space<vmem>>, vector<1x1x32x128xbf16>
    %56 = vector.shape_cast %55 : vector<1x1x32x128xbf16> to vector<32x128xbf16>
    %cst_49 = arith.constant dense<0.000000e+00> : vector<32x128xf32>
    %57 = tpu.matmul %54, %56, %cst_49 {dimension_numbers = #tpu.dot_dimension_numbers<[1], [0], [0], [1], [0, 0, 1, 1], [], []>} : vector<32x32xbf16>, vector<32x128xbf16>, vector<32x128xf32> -> vector<32x128xf32>
    %c3_50 = arith.constant 3 : index
    %c0_51 = arith.constant 0 : index
    %c0_52 = arith.constant 0 : index
    %58 = vector.load %arg11[%c3_50, %c0_51, %c0_52] : memref<4x32x192xf32, #tpu.memory_space<vmem>>, vector<1x32x32xf32>
    %59 = vector.shape_cast %58 : vector<1x32x32xf32> to vector<32x32xf32>
    %60 = arith.truncf %59 : vector<32x32xf32> to vector<32x32xbf16>
    %c0_53 = arith.constant 0 : index
    %c3_54 = arith.constant 3 : index
    %c0_55 = arith.constant 0 : index
    %c0_56 = arith.constant 0 : index
    %61 = vector.load %arg2[%c0_53, %c3_54, %c0_55, %c0_56] : memref<5x4x192x192xbf16, #tpu.memory_space<vmem>>, vector<1x1x32x128xbf16>
    %62 = vector.shape_cast %61 : vector<1x1x32x128xbf16> to vector<32x128xbf16>
    %cst_57 = arith.constant dense<0.000000e+00> : vector<32x128xf32>
    %63 = tpu.matmul %60, %62, %cst_57 {dimension_numbers = #tpu.dot_dimension_numbers<[1], [0], [0], [1], [0, 0, 1, 1], [], []>} : vector<32x32xbf16>, vector<32x128xbf16>, vector<32x128xf32> -> vector<32x128xf32>
    %64 = arith.addf %45, %51 : vector<32x128xf32>
    %65 = arith.addf %57, %63 : vector<32x128xf32>
    %66 = arith.addf %64, %65 : vector<32x128xf32>
    %c0_58 = arith.constant 0 : index
    %c0_59 = arith.constant 0 : index
    %c0_60 = arith.constant 0 : index
    %67 = vector.load %arg3[%c0_58, %c0_59, %c0_60] : memref<5x2x192xf32, #tpu.memory_space<vmem>>, vector<1x1x128xf32>
    %68 = vector.shape_cast %67 : vector<1x1x128xf32> to vector<1x128xf32>
    %69 = vector.broadcast %68 : vector<1x128xf32> to vector<32x128xf32>
    %70 = arith.addf %66, %69 : vector<32x128xf32>
    %cst_61 = arith.constant 0.000000e+00 : f32
    %71 = vector.broadcast %cst_61 : f32 to vector<32x128xf32>
    %72 = arith.cmpf ogt, %70, %71 : vector<32x128xf32>
    %cst_62 = arith.constant 2.000000e-01 : f32
    %73 = vector.broadcast %cst_62 : f32 to vector<32x128xf32>
    %74 = arith.mulf %73, %70 : vector<32x128xf32>
    %75 = arith.select %72, %70, %74 : vector<32x128xi1>, vector<32x128xf32>
    %c0_63 = arith.constant 0 : index
    %c0_64 = arith.constant 0 : index
    %76 = vector.load %arg7[%c0_63, %c0_64] : memref<32x128xf32, #tpu.memory_space<vmem>>, vector<32x128xf32>
    tpu.vector_store %arg7[%c0_63, %c0_64], %75 {strides = array<i32>} : memref<32x128xf32, #tpu.memory_space<vmem>>, vector<32x128xf32>,
    %c1_65 = arith.constant 1 : index
    %c0_66 = arith.constant 0 : index
    %c0_67 = arith.constant 0 : index
    %77 = vector.load %arg1[%c1_65, %c0_66, %c0_67] : memref<5x64x32xbf16, #tpu.memory_space<vmem>>, vector<1x32x16xbf16>
    %78 = vector.shape_cast %77 : vector<1x32x16xbf16> to vector<32x16xbf16>
    %c0_68 = arith.constant 0 : index
    %c0_69 = arith.constant 0 : index
    %79 = vector.load %arg7[%c0_68, %c0_69] : memref<32x128xf32, #tpu.memory_space<vmem>>, vector<16x128xf32>
    %80 = arith.truncf %79 : vector<16x128xf32> to vector<16x128xbf16>
    %cst_70 = arith.constant dense<0.000000e+00> : vector<32x128xf32>
    %81 = tpu.matmul %78, %80, %cst_70 {dimension_numbers = #tpu.dot_dimension_numbers<[1], [0], [0], [1], [0, 0, 1, 1], [], []>} : vector<32x16xbf16>, vector<16x128xbf16>, vector<32x128xf32> -> vector<32x128xf32>
    %82 = vector.extract_strided_slice %81 {offsets = [0, 0], sizes = [8, 128], strides = [1, 1]} : vector<32x128xf32> to vector<8x128xf32>
    %c0_71 = arith.constant 0 : index
    %c0_72 = arith.constant 0 : index
    %c0_73 = arith.constant 0 : index
    %83 = vector.load %arg11[%c0_71, %c0_72, %c0_73] : memref<4x32x192xf32, #tpu.memory_space<vmem>>, vector<1x8x128xf32>
    %84 = vector.shape_cast %83 : vector<1x8x128xf32> to vector<8x128xf32>
    %85 = vector.shape_cast %82 : vector<8x128xf32> to vector<1x8x128xf32>
    tpu.vector_store %arg11[%c0_71, %c0_72, %c0_73], %85 {strides = array<i32>} : memref<4x32x192xf32, #tpu.memory_space<vmem>>, vector<1x8x128xf32>,
    %86 = vector.extract_strided_slice %81 {offsets = [8, 0], sizes = [8, 128], strides = [1, 1]} : vector<32x128xf32> to vector<8x128xf32>
    %c1_74 = arith.constant 1 : index
    %c0_75 = arith.constant 0 : index
    %c0_76 = arith.constant 0 : index
    %87 = vector.load %arg11[%c1_74, %c0_75, %c0_76] : memref<4x32x192xf32, #tpu.memory_space<vmem>>, vector<1x8x128xf32>
    %88 = vector.shape_cast %87 : vector<1x8x128xf32> to vector<8x128xf32>
    %89 = vector.shape_cast %86 : vector<8x128xf32> to vector<1x8x128xf32>
    tpu.vector_store %arg11[%c1_74, %c0_75, %c0_76], %89 {strides = array<i32>} : memref<4x32x192xf32, #tpu.memory_space<vmem>>, vector<1x8x128xf32>,
    %90 = vector.extract_strided_slice %81 {offsets = [16, 0], sizes = [8, 128], strides = [1, 1]} : vector<32x128xf32> to vector<8x128xf32>
    %c2_77 = arith.constant 2 : index
    %c0_78 = arith.constant 0 : index
    %c0_79 = arith.constant 0 : index
    %91 = vector.load %arg11[%c2_77, %c0_78, %c0_79] : memref<4x32x192xf32, #tpu.memory_space<vmem>>, vector<1x8x128xf32>
    %92 = vector.shape_cast %91 : vector<1x8x128xf32> to vector<8x128xf32>
    %93 = vector.shape_cast %90 : vector<8x128xf32> to vector<1x8x128xf32>
    tpu.vector_store %arg11[%c2_77, %c0_78, %c0_79], %93 {strides = array<i32>} : memref<4x32x192xf32, #tpu.memory_space<vmem>>, vector<1x8x128xf32>,
    %94 = vector.extract_strided_slice %81 {offsets = [24, 0], sizes = [8, 128], strides = [1, 1]} : vector<32x128xf32> to vector<8x128xf32>
    %c3_80 = arith.constant 3 : index
    %c0_81 = arith.constant 0 : index
    %c0_82 = arith.constant 0 : index
    %95 = vector.load %arg11[%c3_80, %c0_81, %c0_82] : memref<4x32x192xf32, #tpu.memory_space<vmem>>, vector<1x8x128xf32>
    %96 = vector.shape_cast %95 : vector<1x8x128xf32> to vector<8x128xf32>
    %97 = vector.shape_cast %94 : vector<8x128xf32> to vector<1x8x128xf32>
    tpu.vector_store %arg11[%c3_80, %c0_81, %c0_82], %97 {strides = array<i32>} : memref<4x32x192xf32, #tpu.memory_space<vmem>>, vector<1x8x128xf32>,
    %c16_83 = arith.constant 16 : index
    %c0_84 = arith.constant 0 : index
    %98 = vector.load %arg7[%c16_83, %c0_84] : memref<32x128xf32, #tpu.memory_space<vmem>>, vector<16x128xf32>
    %99 = arith.truncf %98 : vector<16x128xf32> to vector<16x128xbf16>
    %cst_85 = arith.constant dense<0.000000e+00> : vector<32x128xf32>
    %100 = tpu.matmul %78, %99, %cst_85 {dimension_numbers = #tpu.dot_dimension_numbers<[1], [0], [0], [1], [0, 0, 1, 1], [], []>} : vector<32x16xbf16>, vector<16x128xbf16>, vector<32x128xf32> -> vector<32x128xf32>
    %101 = vector.extract_strided_slice %100 {offsets = [0, 0], sizes = [8, 128], strides = [1, 1]} : vector<32x128xf32> to vector<8x128xf32>
    %c0_86 = arith.constant 0 : index
    %c8 = arith.constant 8 : index
    %c0_87 = arith.constant 0 : index
    %102 = vector.load %arg11[%c0_86, %c8, %c0_87] : memref<4x32x192xf32, #tpu.memory_space<vmem>>, vector<1x8x128xf32>
    %103 = vector.shape_cast %102 : vector<1x8x128xf32> to vector<8x128xf32>
    %104 = vector.shape_cast %101 : vector<8x128xf32> to vector<1x8x128xf32>
    tpu.vector_store %arg11[%c0_86, %c8, %c0_87], %104 {strides = array<i32>} : memref<4x32x192xf32, #tpu.memory_space<vmem>>, vector<1x8x128xf32>,
    %105 = vector.extract_strided_slice %100 {offsets = [8, 0], sizes = [8, 128], strides = [1, 1]} : vector<32x128xf32> to vector<8x128xf32>
    %c1_88 = arith.constant 1 : index
    %c8_89 = arith.constant 8 : index
    %c0_90 = arith.constant 0 : index
    %106 = vector.load %arg11[%c1_88, %c8_89, %c0_90] : memref<4x32x192xf32, #tpu.memory_space<vmem>>, vector<1x8x128xf32>
    %107 = vector.shape_cast %106 : vector<1x8x128xf32> to vector<8x128xf32>
    %108 = vector.shape_cast %105 : vector<8x128xf32> to vector<1x8x128xf32>
    tpu.vector_store %arg11[%c1_88, %c8_89, %c0_90], %108 {strides = array<i32>} : memref<4x32x192xf32, #tpu.memory_space<vmem>>, vector<1x8x128xf32>,
    %109 = vector.extract_strided_slice %100 {offsets = [16, 0], sizes = [8, 128], strides = [1, 1]} : vector<32x128xf32> to vector<8x128xf32>
    %c2_91 = arith.constant 2 : index
    %c8_92 = arith.constant 8 : index
    %c0_93 = arith.constant 0 : index
    %110 = vector.load %arg11[%c2_91, %c8_92, %c0_93] : memref<4x32x192xf32, #tpu.memory_space<vmem>>, vector<1x8x128xf32>
    %111 = vector.shape_cast %110 : vector<1x8x128xf32> to vector<8x128xf32>
    %112 = vector.shape_cast %109 : vector<8x128xf32> to vector<1x8x128xf32>
    tpu.vector_store %arg11[%c2_91, %c8_92, %c0_93], %112 {strides = array<i32>} : memref<4x32x192xf32, #tpu.memory_space<vmem>>, vector<1x8x128xf32>,
    %113 = vector.extract_strided_slice %100 {offsets = [24, 0], sizes = [8, 128], strides = [1, 1]} : vector<32x128xf32> to vector<8x128xf32>
    %c3_94 = arith.constant 3 : index
    %c8_95 = arith.constant 8 : index
    %c0_96 = arith.constant 0 : index
    %114 = vector.load %arg11[%c3_94, %c8_95, %c0_96] : memref<4x32x192xf32, #tpu.memory_space<vmem>>, vector<1x8x128xf32>
    %115 = vector.shape_cast %114 : vector<1x8x128xf32> to vector<8x128xf32>
    %116 = vector.shape_cast %113 : vector<8x128xf32> to vector<1x8x128xf32>
    tpu.vector_store %arg11[%c3_94, %c8_95, %c0_96], %116 {strides = array<i32>} : memref<4x32x192xf32, #tpu.memory_space<vmem>>, vector<1x8x128xf32>,
    %c0_97 = arith.constant 0 : index
    %c0_98 = arith.constant 0 : index
    %c0_99 = arith.constant 0 : index
    %117 = vector.load %arg11[%c0_97, %c0_98, %c0_99] : memref<4x32x192xf32, #tpu.memory_space<vmem>>, vector<1x16x128xf32>
    %118 = vector.shape_cast %117 : vector<1x16x128xf32> to vector<16x128xf32>
    %119 = arith.truncf %118 : vector<16x128xf32> to vector<16x128xbf16>
    %c1_100 = arith.constant 1 : index
    %c0_101 = arith.constant 0 : index
    %c0_102 = arith.constant 0 : index
    %c0_103 = arith.constant 0 : index
    %120 = vector.load %arg2[%c1_100, %c0_101, %c0_102, %c0_103] : memref<5x4x192x192xbf16, #tpu.memory_space<vmem>>, vector<1x1x128x128xbf16>
    %121 = vector.shape_cast %120 : vector<1x1x128x128xbf16> to vector<128x128xbf16>
    %cst_104 = arith.constant dense<0.000000e+00> : vector<16x128xf32>
    %122 = tpu.matmul %119, %121, %cst_104 {dimension_numbers = #tpu.dot_dimension_numbers<[1], [0], [0], [1], [0, 0, 1, 1], [], []>} : vector<16x128xbf16>, vector<128x128xbf16>, vector<16x128xf32> -> vector<16x128xf32>
    %c1_105 = arith.constant 1 : index
    %c0_106 = arith.constant 0 : index
    %c0_107 = arith.constant 0 : index
    %123 = vector.load %arg11[%c1_105, %c0_106, %c0_107] : memref<4x32x192xf32, #tpu.memory_space<vmem>>, vector<1x16x128xf32>
    %124 = vector.shape_cast %123 : vector<1x16x128xf32> to vector<16x128xf32>
    %125 = arith.truncf %124 : vector<16x128xf32> to vector<16x128xbf16>
    %c1_108 = arith.constant 1 : index
    %c1_109 = arith.constant 1 : index
    %c0_110 = arith.constant 0 : index
    %c0_111 = arith.constant 0 : index
    %126 = vector.load %arg2[%c1_108, %c1_109, %c0_110, %c0_111] : memref<5x4x192x192xbf16, #tpu.memory_space<vmem>>, vector<1x1x128x128xbf16>
    %127 = vector.shape_cast %126 : vector<1x1x128x128xbf16> to vector<128x128xbf16>
    %cst_112 = arith.constant dense<0.000000e+00> : vector<16x128xf32>
    %128 = tpu.matmul %125, %127, %cst_112 {dimension_numbers = #tpu.dot_dimension_numbers<[1], [0], [0], [1], [0, 0, 1, 1], [], []>} : vector<16x128xbf16>, vector<128x128xbf16>, vector<16x128xf32> -> vector<16x128xf32>
    %c2_113 = arith.constant 2 : index
    %c0_114 = arith.constant 0 : index
    %c0_115 = arith.constant 0 : index
    %129 = vector.load %arg11[%c2_113, %c0_114, %c0_115] : memref<4x32x192xf32, #tpu.memory_space<vmem>>, vector<1x16x128xf32>
    %130 = vector.shape_cast %129 : vector<1x16x128xf32> to vector<16x128xf32>
    %131 = arith.truncf %130 : vector<16x128xf32> to vector<16x128xbf16>
    %c1_116 = arith.constant 1 : index
    %c2_117 = arith.constant 2 : index
    %c0_118 = arith.constant 0 : index
    %c0_119 = arith.constant 0 : index
    %132 = vector.load %arg2[%c1_116, %c2_117, %c0_118, %c0_119] : memref<5x4x192x192xbf16, #tpu.memory_space<vmem>>, vector<1x1x128x128xbf16>
    %133 = vector.shape_cast %132 : vector<1x1x128x128xbf16> to vector<128x128xbf16>
    %cst_120 = arith.constant dense<0.000000e+00> : vector<16x128xf32>
    %134 = tpu.matmul %131, %133, %cst_120 {dimension_numbers = #tpu.dot_dimension_numbers<[1], [0], [0], [1], [0, 0, 1, 1], [], []>} : vector<16x128xbf16>, vector<128x128xbf16>, vector<16x128xf32> -> vector<16x128xf32>
    %c3_121 = arith.constant 3 : index
    %c0_122 = arith.constant 0 : index
    %c0_123 = arith.constant 0 : index
    %135 = vector.load %arg11[%c3_121, %c0_122, %c0_123] : memref<4x32x192xf32, #tpu.memory_space<vmem>>, vector<1x16x128xf32>
    %136 = vector.shape_cast %135 : vector<1x16x128xf32> to vector<16x128xf32>
    %137 = arith.truncf %136 : vector<16x128xf32> to vector<16x128xbf16>
    %c1_124 = arith.constant 1 : index
    %c3_125 = arith.constant 3 : index
    %c0_126 = arith.constant 0 : index
    %c0_127 = arith.constant 0 : index
    %138 = vector.load %arg2[%c1_124, %c3_125, %c0_126, %c0_127] : memref<5x4x192x192xbf16, #tpu.memory_space<vmem>>, vector<1x1x128x128xbf16>
    %139 = vector.shape_cast %138 : vector<1x1x128x128xbf16> to vector<128x128xbf16>
    %cst_128 = arith.constant dense<0.000000e+00> : vector<16x128xf32>
    %140 = tpu.matmul %137, %139, %cst_128 {dimension_numbers = #tpu.dot_dimension_numbers<[1], [0], [0], [1], [0, 0, 1, 1], [], []>} : vector<16x128xbf16>, vector<128x128xbf16>, vector<16x128xf32> -> vector<16x128xf32>
    %141 = arith.addf %122, %128 : vector<16x128xf32>
    %142 = arith.addf %134, %140 : vector<16x128xf32>
    %143 = arith.addf %141, %142 : vector<16x128xf32>
    %c0_129 = arith.constant 0 : index
    %c0_130 = arith.constant 0 : index
    %c0_131 = arith.constant 0 : index
    %144 = vector.load %arg4[%c0_129, %c0_130, %c0_131] : memref<3x192x64xf32, #tpu.memory_space<vmem>>, vector<1x128x16xf32>
    %145 = vector.shape_cast %144 : vector<1x128x16xf32> to vector<128x16xf32>
    %c0_132 = arith.constant 0 : index
    %c0_133 = arith.constant 0 : index
    %c0_134 = arith.constant 0 : index
    %146 = vector.load %arg5[%c0_132, %c0_133, %c0_134] : memref<3x64x192xf32, #tpu.memory_space<vmem>>, vector<1x16x128xf32>
    %147 = vector.shape_cast %146 : vector<1x16x128xf32> to vector<16x128xf32>
    %cst_135 = arith.constant dense<0.000000e+00> : vector<128xf32>
    %148 = vector.multi_reduction <add>, %143, %cst_135 [0] : vector<16x128xf32> to vector<128xf32>
    %149 = vector.shape_cast %148 : vector<128xf32> to vector<1x128xf32>
    %150 = arith.mulf %143, %143 : vector<16x128xf32>
    %cst_136 = arith.constant dense<0.000000e+00> : vector<128xf32>
    %151 = vector.multi_reduction <add>, %150, %cst_136 [0] : vector<16x128xf32> to vector<128xf32>
    %152 = vector.shape_cast %151 : vector<128xf32> to vector<1x128xf32>
    %cst_137 = arith.constant dense<0.000000e+00> : vector<1x16xf32>
    %153 = tpu.matmul %149, %145, %cst_137 {dimension_numbers = #tpu.dot_dimension_numbers<[1], [0], [0], [1], [0, 0, 1, 1], [], []>} : vector<1x128xf32>, vector<128x16xf32>, vector<1x16xf32> -> vector<1x16xf32>
    %cst_138 = arith.constant dense<0.000000e+00> : vector<1x128xf32>
    %154 = tpu.matmul %153, %147, %cst_138 {dimension_numbers = #tpu.dot_dimension_numbers<[1], [0], [0], [1], [0, 0, 1, 1], [], []>} : vector<1x16xf32>, vector<16x128xf32>, vector<1x128xf32> -> vector<1x128xf32>
    %cst_139 = arith.constant 7.812500e-03 : f32
    %155 = vector.broadcast %cst_139 : f32 to vector<1x128xf32>
    %156 = arith.mulf %154, %155 : vector<1x128xf32>
    %cst_140 = arith.constant dense<0.000000e+00> : vector<1x16xf32>
    %157 = tpu.matmul %152, %145, %cst_140 {dimension_numbers = #tpu.dot_dimension_numbers<[1], [0], [0], [1], [0, 0, 1, 1], [], []>} : vector<1x128xf32>, vector<128x16xf32>, vector<1x16xf32> -> vector<1x16xf32>
    %cst_141 = arith.constant dense<0.000000e+00> : vector<1x128xf32>
    %158 = tpu.matmul %157, %147, %cst_141 {dimension_numbers = #tpu.dot_dimension_numbers<[1], [0], [0], [1], [0, 0, 1, 1], [], []>} : vector<1x16xf32>, vector<16x128xf32>, vector<1x128xf32> -> vector<1x128xf32>
    %cst_142 = arith.constant 7.812500e-03 : f32
    %159 = vector.broadcast %cst_142 : f32 to vector<1x128xf32>
    %160 = arith.mulf %158, %159 : vector<1x128xf32>
    %161 = arith.mulf %156, %156 : vector<1x128xf32>
    %162 = arith.subf %160, %161 : vector<1x128xf32>
    %c1_143 = arith.constant 1 : index
    %c0_144 = arith.constant 0 : index
    %c0_145 = arith.constant 0 : index
    %163 = vector.load %arg3[%c1_143, %c0_144, %c0_145] : memref<5x2x192xf32, #tpu.memory_space<vmem>>, vector<1x1x128xf32>
    %164 = vector.shape_cast %163 : vector<1x1x128xf32> to vector<1x128xf32>
    %c1_146 = arith.constant 1 : index
    %c1_147 = arith.constant 1 : index
    %c0_148 = arith.constant 0 : index
    %165 = vector.load %arg3[%c1_146, %c1_147, %c0_148] : memref<5x2x192xf32, #tpu.memory_space<vmem>>, vector<1x1x128xf32>
    %166 = vector.shape_cast %165 : vector<1x1x128xf32> to vector<1x128xf32>
    %cst_149 = arith.constant 9.99999974E-6 : f32
    %167 = vector.broadcast %cst_149 : f32 to vector<1x128xf32>
    %168 = arith.addf %162, %167 : vector<1x128xf32>
    %169 = math.rsqrt %168 : vector<1x128xf32>
    %170 = arith.mulf %164, %169 : vector<1x128xf32>
    %171 = arith.mulf %156, %170 : vector<1x128xf32>
    %172 = arith.subf %166, %171 : vector<1x128xf32>
    %173 = vector.broadcast %170 : vector<1x128xf32> to vector<16x128xf32>
    %174 = arith.mulf %143, %173 : vector<16x128xf32>
    %175 = vector.broadcast %172 : vector<1x128xf32> to vector<16x128xf32>
    %176 = arith.addf %174, %175 : vector<16x128xf32>
    %cst_150 = arith.constant 0.000000e+00 : f32
    %177 = vector.broadcast %cst_150 : f32 to vector<16x128xf32>
    %178 = arith.cmpf ogt, %176, %177 : vector<16x128xf32>
    %cst_151 = arith.constant 2.000000e-01 : f32
    %179 = vector.broadcast %cst_151 : f32 to vector<16x128xf32>
    %180 = arith.mulf %179, %176 : vector<16x128xf32>
    %181 = arith.select %178, %176, %180 : vector<16x128xi1>, vector<16x128xf32>
    %c0_152 = arith.constant 0 : index
    %c0_153 = arith.constant 0 : index
    %182 = vector.load %arg8[%c0_152, %c0_153] : memref<16x128xf32, #tpu.memory_space<vmem>>, vector<16x128xf32>
    tpu.vector_store %arg8[%c0_152, %c0_153], %181 {strides = array<i32>} : memref<16x128xf32, #tpu.memory_space<vmem>>, vector<16x128xf32>,
    %c2_154 = arith.constant 2 : index
    %c0_155 = arith.constant 0 : index
    %c0_156 = arith.constant 0 : index
    %183 = vector.load %arg1[%c2_154, %c0_155, %c0_156] : memref<5x64x32xbf16, #tpu.memory_space<vmem>>, vector<1x16x8xbf16>
    %184 = vector.shape_cast %183 : vector<1x16x8xbf16> to vector<16x8xbf16>
    %c0_157 = arith.constant 0 : index
    %c0_158 = arith.constant 0 : index
    %185 = vector.load %arg8[%c0_157, %c0_158] : memref<16x128xf32, #tpu.memory_space<vmem>>, vector<8x128xf32>
    %186 = arith.truncf %185 : vector<8x128xf32> to vector<8x128xbf16>
    %cst_159 = arith.constant dense<0.000000e+00> : vector<16x128xf32>
    %187 = tpu.matmul %184, %186, %cst_159 {dimension_numbers = #tpu.dot_dimension_numbers<[1], [0], [0], [1], [0, 0, 1, 1], [], []>} : vector<16x8xbf16>, vector<8x128xbf16>, vector<16x128xf32> -> vector<16x128xf32>
    %188 = vector.extract_strided_slice %187 {offsets = [0, 0], sizes = [4, 128], strides = [1, 1]} : vector<16x128xf32> to vector<4x128xf32>
    %c0_160 = arith.constant 0 : index
    %c0_161 = arith.constant 0 : index
    %c0_162 = arith.constant 0 : index
    %189 = vector.load %arg11[%c0_160, %c0_161, %c0_162] : memref<4x32x192xf32, #tpu.memory_space<vmem>>, vector<1x4x128xf32>
    %190 = vector.shape_cast %189 : vector<1x4x128xf32> to vector<4x128xf32>
    %191 = vector.shape_cast %188 : vector<4x128xf32> to vector<1x4x128xf32>
    tpu.vector_store %arg11[%c0_160, %c0_161, %c0_162], %191 {strides = array<i32>} : memref<4x32x192xf32, #tpu.memory_space<vmem>>, vector<1x4x128xf32>,
    %192 = vector.extract_strided_slice %187 {offsets = [4, 0], sizes = [4, 128], strides = [1, 1]} : vector<16x128xf32> to vector<4x128xf32>
    %c1_163 = arith.constant 1 : index
    %c0_164 = arith.constant 0 : index
    %c0_165 = arith.constant 0 : index
    %193 = vector.load %arg11[%c1_163, %c0_164, %c0_165] : memref<4x32x192xf32, #tpu.memory_space<vmem>>, vector<1x4x128xf32>
    %194 = vector.shape_cast %193 : vector<1x4x128xf32> to vector<4x128xf32>
    %195 = vector.shape_cast %192 : vector<4x128xf32> to vector<1x4x128xf32>
    tpu.vector_store %arg11[%c1_163, %c0_164, %c0_165], %195 {strides = array<i32>} : memref<4x32x192xf32, #tpu.memory_space<vmem>>, vector<1x4x128xf32>,
    %196 = vector.extract_strided_slice %187 {offsets = [8, 0], sizes = [4, 128], strides = [1, 1]} : vector<16x128xf32> to vector<4x128xf32>
    %c2_166 = arith.constant 2 : index
    %c0_167 = arith.constant 0 : index
    %c0_168 = arith.constant 0 : index
    %197 = vector.load %arg11[%c2_166, %c0_167, %c0_168] : memref<4x32x192xf32, #tpu.memory_space<vmem>>, vector<1x4x128xf32>
    %198 = vector.shape_cast %197 : vector<1x4x128xf32> to vector<4x128xf32>
    %199 = vector.shape_cast %196 : vector<4x128xf32> to vector<1x4x128xf32>
    tpu.vector_store %arg11[%c2_166, %c0_167, %c0_168], %199 {strides = array<i32>} : memref<4x32x192xf32, #tpu.memory_space<vmem>>, vector<1x4x128xf32>,
    %200 = vector.extract_strided_slice %187 {offsets = [12, 0], sizes = [4, 128], strides = [1, 1]} : vector<16x128xf32> to vector<4x128xf32>
    %c3_169 = arith.constant 3 : index
    %c0_170 = arith.constant 0 : index
    %c0_171 = arith.constant 0 : index
    %201 = vector.load %arg11[%c3_169, %c0_170, %c0_171] : memref<4x32x192xf32, #tpu.memory_space<vmem>>, vector<1x4x128xf32>
    %202 = vector.shape_cast %201 : vector<1x4x128xf32> to vector<4x128xf32>
    %203 = vector.shape_cast %200 : vector<4x128xf32> to vector<1x4x128xf32>
    tpu.vector_store %arg11[%c3_169, %c0_170, %c0_171], %203 {strides = array<i32>} : memref<4x32x192xf32, #tpu.memory_space<vmem>>, vector<1x4x128xf32>,
    %c8_172 = arith.constant 8 : index
    %c0_173 = arith.constant 0 : index
    %204 = vector.load %arg8[%c8_172, %c0_173] : memref<16x128xf32, #tpu.memory_space<vmem>>, vector<8x128xf32>
    %205 = arith.truncf %204 : vector<8x128xf32> to vector<8x128xbf16>
    %cst_174 = arith.constant dense<0.000000e+00> : vector<16x128xf32>
    %206 = tpu.matmul %184, %205, %cst_174 {dimension_numbers = #tpu.dot_dimension_numbers<[1], [0], [0], [1], [0, 0, 1, 1], [], []>} : vector<16x8xbf16>, vector<8x128xbf16>, vector<16x128xf32> -> vector<16x128xf32>
    %207 = vector.extract_strided_slice %206 {offsets = [0, 0], sizes = [4, 128], strides = [1, 1]} : vector<16x128xf32> to vector<4x128xf32>
    %c0_175 = arith.constant 0 : index
    %c4 = arith.constant 4 : index
    %c0_176 = arith.constant 0 : index
    %208 = vector.load %arg11[%c0_175, %c4, %c0_176] : memref<4x32x192xf32, #tpu.memory_space<vmem>>, vector<1x4x128xf32>
    %209 = vector.shape_cast %208 : vector<1x4x128xf32> to vector<4x128xf32>
    %210 = vector.shape_cast %207 : vector<4x128xf32> to vector<1x4x128xf32>
    tpu.vector_store %arg11[%c0_175, %c4, %c0_176], %210 {strides = array<i32>} : memref<4x32x192xf32, #tpu.memory_space<vmem>>, vector<1x4x128xf32>,
    %211 = vector.extract_strided_slice %206 {offsets = [4, 0], sizes = [4, 128], strides = [1, 1]} : vector<16x128xf32> to vector<4x128xf32>
    %c1_177 = arith.constant 1 : index
    %c4_178 = arith.constant 4 : index
    %c0_179 = arith.constant 0 : index
    %212 = vector.load %arg11[%c1_177, %c4_178, %c0_179] : memref<4x32x192xf32, #tpu.memory_space<vmem>>, vector<1x4x128xf32>
    %213 = vector.shape_cast %212 : vector<1x4x128xf32> to vector<4x128xf32>
    %214 = vector.shape_cast %211 : vector<4x128xf32> to vector<1x4x128xf32>
    tpu.vector_store %arg11[%c1_177, %c4_178, %c0_179], %214 {strides = array<i32>} : memref<4x32x192xf32, #tpu.memory_space<vmem>>, vector<1x4x128xf32>,
    %215 = vector.extract_strided_slice %206 {offsets = [8, 0], sizes = [4, 128], strides = [1, 1]} : vector<16x128xf32> to vector<4x128xf32>
    %c2_180 = arith.constant 2 : index
    %c4_181 = arith.constant 4 : index
    %c0_182 = arith.constant 0 : index
    %216 = vector.load %arg11[%c2_180, %c4_181, %c0_182] : memref<4x32x192xf32, #tpu.memory_space<vmem>>, vector<1x4x128xf32>
    %217 = vector.shape_cast %216 : vector<1x4x128xf32> to vector<4x128xf32>
    %218 = vector.shape_cast %215 : vector<4x128xf32> to vector<1x4x128xf32>
    tpu.vector_store %arg11[%c2_180, %c4_181, %c0_182], %218 {strides = array<i32>} : memref<4x32x192xf32, #tpu.memory_space<vmem>>, vector<1x4x128xf32>,
    %219 = vector.extract_strided_slice %206 {offsets = [12, 0], sizes = [4, 128], strides = [1, 1]} : vector<16x128xf32> to vector<4x128xf32>
    %c3_183 = arith.constant 3 : index
    %c4_184 = arith.constant 4 : index
    %c0_185 = arith.constant 0 : index
    %220 = vector.load %arg11[%c3_183, %c4_184, %c0_185] : memref<4x32x192xf32, #tpu.memory_space<vmem>>, vector<1x4x128xf32>
    %221 = vector.shape_cast %220 : vector<1x4x128xf32> to vector<4x128xf32>
    %222 = vector.shape_cast %219 : vector<4x128xf32> to vector<1x4x128xf32>
    tpu.vector_store %arg11[%c3_183, %c4_184, %c0_185], %222 {strides = array<i32>} : memref<4x32x192xf32, #tpu.memory_space<vmem>>, vector<1x4x128xf32>,
    %c0_186 = arith.constant 0 : index
    %c0_187 = arith.constant 0 : index
    %c0_188 = arith.constant 0 : index
    %223 = vector.load %arg11[%c0_186, %c0_187, %c0_188] : memref<4x32x192xf32, #tpu.memory_space<vmem>>, vector<1x8x128xf32>
    %224 = vector.shape_cast %223 : vector<1x8x128xf32> to vector<8x128xf32>
    %225 = arith.truncf %224 : vector<8x128xf32> to vector<8x128xbf16>
    %c2_189 = arith.constant 2 : index
    %c0_190 = arith.constant 0 : index
    %c0_191 = arith.constant 0 : index
    %c0_192 = arith.constant 0 : index
    %226 = vector.load %arg2[%c2_189, %c0_190, %c0_191, %c0_192] : memref<5x4x192x192xbf16, #tpu.memory_space<vmem>>, vector<1x1x128x128xbf16>
    %227 = vector.shape_cast %226 : vector<1x1x128x128xbf16> to vector<128x128xbf16>
    %cst_193 = arith.constant dense<0.000000e+00> : vector<8x128xf32>
    %228 = tpu.matmul %225, %227, %cst_193 {dimension_numbers = #tpu.dot_dimension_numbers<[1], [0], [0], [1], [0, 0, 1, 1], [], []>} : vector<8x128xbf16>, vector<128x128xbf16>, vector<8x128xf32> -> vector<8x128xf32>
    %c1_194 = arith.constant 1 : index
    %c0_195 = arith.constant 0 : index
    %c0_196 = arith.constant 0 : index
    %229 = vector.load %arg11[%c1_194, %c0_195, %c0_196] : memref<4x32x192xf32, #tpu.memory_space<vmem>>, vector<1x8x128xf32>
    %230 = vector.shape_cast %229 : vector<1x8x128xf32> to vector<8x128xf32>
    %231 = arith.truncf %230 : vector<8x128xf32> to vector<8x128xbf16>
    %c2_197 = arith.constant 2 : index
    %c1_198 = arith.constant 1 : index
    %c0_199 = arith.constant 0 : index
    %c0_200 = arith.constant 0 : index
    %232 = vector.load %arg2[%c2_197, %c1_198, %c0_199, %c0_200] : memref<5x4x192x192xbf16, #tpu.memory_space<vmem>>, vector<1x1x128x128xbf16>
    %233 = vector.shape_cast %232 : vector<1x1x128x128xbf16> to vector<128x128xbf16>
    %cst_201 = arith.constant dense<0.000000e+00> : vector<8x128xf32>
    %234 = tpu.matmul %231, %233, %cst_201 {dimension_numbers = #tpu.dot_dimension_numbers<[1], [0], [0], [1], [0, 0, 1, 1], [], []>} : vector<8x128xbf16>, vector<128x128xbf16>, vector<8x128xf32> -> vector<8x128xf32>
    %c2_202 = arith.constant 2 : index
    %c0_203 = arith.constant 0 : index
    %c0_204 = arith.constant 0 : index
    %235 = vector.load %arg11[%c2_202, %c0_203, %c0_204] : memref<4x32x192xf32, #tpu.memory_space<vmem>>, vector<1x8x128xf32>
    %236 = vector.shape_cast %235 : vector<1x8x128xf32> to vector<8x128xf32>
    %237 = arith.truncf %236 : vector<8x128xf32> to vector<8x128xbf16>
    %c2_205 = arith.constant 2 : index
    %c2_206 = arith.constant 2 : index
    %c0_207 = arith.constant 0 : index
    %c0_208 = arith.constant 0 : index
    %238 = vector.load %arg2[%c2_205, %c2_206, %c0_207, %c0_208] : memref<5x4x192x192xbf16, #tpu.memory_space<vmem>>, vector<1x1x128x128xbf16>
    %239 = vector.shape_cast %238 : vector<1x1x128x128xbf16> to vector<128x128xbf16>
    %cst_209 = arith.constant dense<0.000000e+00> : vector<8x128xf32>
    %240 = tpu.matmul %237, %239, %cst_209 {dimension_numbers = #tpu.dot_dimension_numbers<[1], [0], [0], [1], [0, 0, 1, 1], [], []>} : vector<8x128xbf16>, vector<128x128xbf16>, vector<8x128xf32> -> vector<8x128xf32>
    %c3_210 = arith.constant 3 : index
    %c0_211 = arith.constant 0 : index
    %c0_212 = arith.constant 0 : index
    %241 = vector.load %arg11[%c3_210, %c0_211, %c0_212] : memref<4x32x192xf32, #tpu.memory_space<vmem>>, vector<1x8x128xf32>
    %242 = vector.shape_cast %241 : vector<1x8x128xf32> to vector<8x128xf32>
    %243 = arith.truncf %242 : vector<8x128xf32> to vector<8x128xbf16>
    %c2_213 = arith.constant 2 : index
    %c3_214 = arith.constant 3 : index
    %c0_215 = arith.constant 0 : index
    %c0_216 = arith.constant 0 : index
    %244 = vector.load %arg2[%c2_213, %c3_214, %c0_215, %c0_216] : memref<5x4x192x192xbf16, #tpu.memory_space<vmem>>, vector<1x1x128x128xbf16>
    %245 = vector.shape_cast %244 : vector<1x1x128x128xbf16> to vector<128x128xbf16>
    %cst_217 = arith.constant dense<0.000000e+00> : vector<8x128xf32>
    %246 = tpu.matmul %243, %245, %cst_217 {dimension_numbers = #tpu.dot_dimension_numbers<[1], [0], [0], [1], [0, 0, 1, 1], [], []>} : vector<8x128xbf16>, vector<128x128xbf16>, vector<8x128xf32> -> vector<8x128xf32>
    %247 = arith.addf %228, %234 : vector<8x128xf32>
    %248 = arith.addf %240, %246 : vector<8x128xf32>
    %249 = arith.addf %247, %248 : vector<8x128xf32>
    %c1_218 = arith.constant 1 : index
    %c0_219 = arith.constant 0 : index
    %c0_220 = arith.constant 0 : index
    %250 = vector.load %arg4[%c1_218, %c0_219, %c0_220] : memref<3x192x64xf32, #tpu.memory_space<vmem>>, vector<1x128x32xf32>
    %251 = vector.shape_cast %250 : vector<1x128x32xf32> to vector<128x32xf32>
    %c1_221 = arith.constant 1 : index
    %c0_222 = arith.constant 0 : index
    %c0_223 = arith.constant 0 : index
    %252 = vector.load %arg5[%c1_221, %c0_222, %c0_223] : memref<3x64x192xf32, #tpu.memory_space<vmem>>, vector<1x32x128xf32>
    %253 = vector.shape_cast %252 : vector<1x32x128xf32> to vector<32x128xf32>
    %cst_224 = arith.constant dense<0.000000e+00> : vector<128xf32>
    %254 = vector.multi_reduction <add>, %249, %cst_224 [0] : vector<8x128xf32> to vector<128xf32>
    %255 = vector.shape_cast %254 : vector<128xf32> to vector<1x128xf32>
    %256 = arith.mulf %249, %249 : vector<8x128xf32>
    %cst_225 = arith.constant dense<0.000000e+00> : vector<128xf32>
    %257 = vector.multi_reduction <add>, %256, %cst_225 [0] : vector<8x128xf32> to vector<128xf32>
    %258 = vector.shape_cast %257 : vector<128xf32> to vector<1x128xf32>
    %cst_226 = arith.constant dense<0.000000e+00> : vector<1x32xf32>
    %259 = tpu.matmul %255, %251, %cst_226 {dimension_numbers = #tpu.dot_dimension_numbers<[1], [0], [0], [1], [0, 0, 1, 1], [], []>} : vector<1x128xf32>, vector<128x32xf32>, vector<1x32xf32> -> vector<1x32xf32>
    %cst_227 = arith.constant dense<0.000000e+00> : vector<1x128xf32>
    %260 = tpu.matmul %259, %253, %cst_227 {dimension_numbers = #tpu.dot_dimension_numbers<[1], [0], [0], [1], [0, 0, 1, 1], [], []>} : vector<1x32xf32>, vector<32x128xf32>, vector<1x128xf32> -> vector<1x128xf32>
    %cst_228 = arith.constant 3.125000e-02 : f32
    %261 = vector.broadcast %cst_228 : f32 to vector<1x128xf32>
    %262 = arith.mulf %260, %261 : vector<1x128xf32>
    %cst_229 = arith.constant dense<0.000000e+00> : vector<1x32xf32>
    %263 = tpu.matmul %258, %251, %cst_229 {dimension_numbers = #tpu.dot_dimension_numbers<[1], [0], [0], [1], [0, 0, 1, 1], [], []>} : vector<1x128xf32>, vector<128x32xf32>, vector<1x32xf32> -> vector<1x32xf32>
    %cst_230 = arith.constant dense<0.000000e+00> : vector<1x128xf32>
    %264 = tpu.matmul %263, %253, %cst_230 {dimension_numbers = #tpu.dot_dimension_numbers<[1], [0], [0], [1], [0, 0, 1, 1], [], []>} : vector<1x32xf32>, vector<32x128xf32>, vector<1x128xf32> -> vector<1x128xf32>
    %cst_231 = arith.constant 3.125000e-02 : f32
    %265 = vector.broadcast %cst_231 : f32 to vector<1x128xf32>
    %266 = arith.mulf %264, %265 : vector<1x128xf32>
    %267 = arith.mulf %262, %262 : vector<1x128xf32>
    %268 = arith.subf %266, %267 : vector<1x128xf32>
    %c2_232 = arith.constant 2 : index
    %c0_233 = arith.constant 0 : index
    %c0_234 = arith.constant 0 : index
    %269 = vector.load %arg3[%c2_232, %c0_233, %c0_234] : memref<5x2x192xf32, #tpu.memory_space<vmem>>, vector<1x1x128xf32>
    %270 = vector.shape_cast %269 : vector<1x1x128xf32> to vector<1x128xf32>
    %c2_235 = arith.constant 2 : index
    %c1_236 = arith.constant 1 : index
    %c0_237 = arith.constant 0 : index
    %271 = vector.load %arg3[%c2_235, %c1_236, %c0_237] : memref<5x2x192xf32, #tpu.memory_space<vmem>>, vector<1x1x128xf32>
    %272 = vector.shape_cast %271 : vector<1x1x128xf32> to vector<1x128xf32>
    %cst_238 = arith.constant 9.99999974E-6 : f32
    %273 = vector.broadcast %cst_238 : f32 to vector<1x128xf32>
    %274 = arith.addf %268, %273 : vector<1x128xf32>
    %275 = math.rsqrt %274 : vector<1x128xf32>
    %276 = arith.mulf %270, %275 : vector<1x128xf32>
    %277 = arith.mulf %262, %276 : vector<1x128xf32>
    %278 = arith.subf %272, %277 : vector<1x128xf32>
    %279 = vector.broadcast %276 : vector<1x128xf32> to vector<8x128xf32>
    %280 = arith.mulf %249, %279 : vector<8x128xf32>
    %281 = vector.broadcast %278 : vector<1x128xf32> to vector<8x128xf32>
    %282 = arith.addf %280, %281 : vector<8x128xf32>
    %cst_239 = arith.constant 0.000000e+00 : f32
    %283 = vector.broadcast %cst_239 : f32 to vector<8x128xf32>
    %284 = arith.cmpf ogt, %282, %283 : vector<8x128xf32>
    %cst_240 = arith.constant 2.000000e-01 : f32
    %285 = vector.broadcast %cst_240 : f32 to vector<8x128xf32>
    %286 = arith.mulf %285, %282 : vector<8x128xf32>
    %287 = arith.select %284, %282, %286 : vector<8x128xi1>, vector<8x128xf32>
    %c0_241 = arith.constant 0 : index
    %c0_242 = arith.constant 0 : index
    %288 = vector.load %arg9[%c0_241, %c0_242] : memref<8x128xf32, #tpu.memory_space<vmem>>, vector<8x128xf32>
    tpu.vector_store %arg9[%c0_241, %c0_242], %287 {strides = array<i32>} : memref<8x128xf32, #tpu.memory_space<vmem>>, vector<8x128xf32>,
    %c3_243 = arith.constant 3 : index
    %c0_244 = arith.constant 0 : index
    %c0_245 = arith.constant 0 : index
    %289 = vector.load %arg1[%c3_243, %c0_244, %c0_245] : memref<5x64x32xbf16, #tpu.memory_space<vmem>>, vector<1x12x4xbf16>
    %290 = vector.shape_cast %289 : vector<1x12x4xbf16> to vector<12x4xbf16>
    %c0_246 = arith.constant 0 : index
    %c0_247 = arith.constant 0 : index
    %291 = vector.load %arg9[%c0_246, %c0_247] : memref<8x128xf32, #tpu.memory_space<vmem>>, vector<4x128xf32>
    %292 = arith.truncf %291 : vector<4x128xf32> to vector<4x128xbf16>
    %cst_248 = arith.constant dense<0.000000e+00> : vector<12x128xf32>
    %293 = tpu.matmul %290, %292, %cst_248 {dimension_numbers = #tpu.dot_dimension_numbers<[1], [0], [0], [1], [0, 0, 1, 1], [], []>} : vector<12x4xbf16>, vector<4x128xbf16>, vector<12x128xf32> -> vector<12x128xf32>
    %294 = vector.extract_strided_slice %293 {offsets = [0, 0], sizes = [3, 128], strides = [1, 1]} : vector<12x128xf32> to vector<3x128xf32>
    %c0_249 = arith.constant 0 : index
    %c0_250 = arith.constant 0 : index
    %c0_251 = arith.constant 0 : index
    %295 = vector.load %arg11[%c0_249, %c0_250, %c0_251] : memref<4x32x192xf32, #tpu.memory_space<vmem>>, vector<1x3x128xf32>
    %296 = vector.shape_cast %295 : vector<1x3x128xf32> to vector<3x128xf32>
    %297 = vector.shape_cast %294 : vector<3x128xf32> to vector<1x3x128xf32>
    tpu.vector_store %arg11[%c0_249, %c0_250, %c0_251], %297 {strides = array<i32>} : memref<4x32x192xf32, #tpu.memory_space<vmem>>, vector<1x3x128xf32>,
    %298 = vector.extract_strided_slice %293 {offsets = [3, 0], sizes = [3, 128], strides = [1, 1]} : vector<12x128xf32> to vector<3x128xf32>
    %c1_252 = arith.constant 1 : index
    %c0_253 = arith.constant 0 : index
    %c0_254 = arith.constant 0 : index
    %299 = vector.load %arg11[%c1_252, %c0_253, %c0_254] : memref<4x32x192xf32, #tpu.memory_space<vmem>>, vector<1x3x128xf32>
    %300 = vector.shape_cast %299 : vector<1x3x128xf32> to vector<3x128xf32>
    %301 = vector.shape_cast %298 : vector<3x128xf32> to vector<1x3x128xf32>
    tpu.vector_store %arg11[%c1_252, %c0_253, %c0_254], %301 {strides = array<i32>} : memref<4x32x192xf32, #tpu.memory_space<vmem>>, vector<1x3x128xf32>,
    %302 = vector.extract_strided_slice %293 {offsets = [6, 0], sizes = [3, 128], strides = [1, 1]} : vector<12x128xf32> to vector<3x128xf32>
    %c2_255 = arith.constant 2 : index
    %c0_256 = arith.constant 0 : index
    %c0_257 = arith.constant 0 : index
    %303 = vector.load %arg11[%c2_255, %c0_256, %c0_257] : memref<4x32x192xf32, #tpu.memory_space<vmem>>, vector<1x3x128xf32>
    %304 = vector.shape_cast %303 : vector<1x3x128xf32> to vector<3x128xf32>
    %305 = vector.shape_cast %302 : vector<3x128xf32> to vector<1x3x128xf32>
    tpu.vector_store %arg11[%c2_255, %c0_256, %c0_257], %305 {strides = array<i32>} : memref<4x32x192xf32, #tpu.memory_space<vmem>>, vector<1x3x128xf32>,
    %306 = vector.extract_strided_slice %293 {offsets = [9, 0], sizes = [3, 128], strides = [1, 1]} : vector<12x128xf32> to vector<3x128xf32>
    %c3_258 = arith.constant 3 : index
    %c0_259 = arith.constant 0 : index
    %c0_260 = arith.constant 0 : index
    %307 = vector.load %arg11[%c3_258, %c0_259, %c0_260] : memref<4x32x192xf32, #tpu.memory_space<vmem>>, vector<1x3x128xf32>
    %308 = vector.shape_cast %307 : vector<1x3x128xf32> to vector<3x128xf32>
    %309 = vector.shape_cast %306 : vector<3x128xf32> to vector<1x3x128xf32>
    tpu.vector_store %arg11[%c3_258, %c0_259, %c0_260], %309 {strides = array<i32>} : memref<4x32x192xf32, #tpu.memory_space<vmem>>, vector<1x3x128xf32>,
    %c4_261 = arith.constant 4 : index
    %c0_262 = arith.constant 0 : index
    %310 = vector.load %arg9[%c4_261, %c0_262] : memref<8x128xf32, #tpu.memory_space<vmem>>, vector<4x128xf32>
    %311 = arith.truncf %310 : vector<4x128xf32> to vector<4x128xbf16>
    %cst_263 = arith.constant dense<0.000000e+00> : vector<12x128xf32>
    %312 = tpu.matmul %290, %311, %cst_263 {dimension_numbers = #tpu.dot_dimension_numbers<[1], [0], [0], [1], [0, 0, 1, 1], [], []>} : vector<12x4xbf16>, vector<4x128xbf16>, vector<12x128xf32> -> vector<12x128xf32>
    %313 = vector.extract_strided_slice %312 {offsets = [0, 0], sizes = [3, 128], strides = [1, 1]} : vector<12x128xf32> to vector<3x128xf32>
    %c0_264 = arith.constant 0 : index
    %c3_265 = arith.constant 3 : index
    %c0_266 = arith.constant 0 : index
    %314 = vector.load %arg11[%c0_264, %c3_265, %c0_266] : memref<4x32x192xf32, #tpu.memory_space<vmem>>, vector<1x3x128xf32>
    %315 = vector.shape_cast %314 : vector<1x3x128xf32> to vector<3x128xf32>
    %316 = vector.shape_cast %313 : vector<3x128xf32> to vector<1x3x128xf32>
    tpu.vector_store %arg11[%c0_264, %c3_265, %c0_266], %316 {strides = array<i32>} : memref<4x32x192xf32, #tpu.memory_space<vmem>>, vector<1x3x128xf32>,
    %317 = vector.extract_strided_slice %312 {offsets = [3, 0], sizes = [3, 128], strides = [1, 1]} : vector<12x128xf32> to vector<3x128xf32>
    %c1_267 = arith.constant 1 : index
    %c3_268 = arith.constant 3 : index
    %c0_269 = arith.constant 0 : index
    %318 = vector.load %arg11[%c1_267, %c3_268, %c0_269] : memref<4x32x192xf32, #tpu.memory_space<vmem>>, vector<1x3x128xf32>
    %319 = vector.shape_cast %318 : vector<1x3x128xf32> to vector<3x128xf32>
    %320 = vector.shape_cast %317 : vector<3x128xf32> to vector<1x3x128xf32>
    tpu.vector_store %arg11[%c1_267, %c3_268, %c0_269], %320 {strides = array<i32>} : memref<4x32x192xf32, #tpu.memory_space<vmem>>, vector<1x3x128xf32>,
    %321 = vector.extract_strided_slice %312 {offsets = [6, 0], sizes = [3, 128], strides = [1, 1]} : vector<12x128xf32> to vector<3x128xf32>
    %c2_270 = arith.constant 2 : index
    %c3_271 = arith.constant 3 : index
    %c0_272 = arith.constant 0 : index
    %322 = vector.load %arg11[%c2_270, %c3_271, %c0_272] : memref<4x32x192xf32, #tpu.memory_space<vmem>>, vector<1x3x128xf32>
    %323 = vector.shape_cast %322 : vector<1x3x128xf32> to vector<3x128xf32>
    %324 = vector.shape_cast %321 : vector<3x128xf32> to vector<1x3x128xf32>
    tpu.vector_store %arg11[%c2_270, %c3_271, %c0_272], %324 {strides = array<i32>} : memref<4x32x192xf32, #tpu.memory_space<vmem>>, vector<1x3x128xf32>,
    %325 = vector.extract_strided_slice %312 {offsets = [9, 0], sizes = [3, 128], strides = [1, 1]} : vector<12x128xf32> to vector<3x128xf32>
    %c3_273 = arith.constant 3 : index
    %c3_274 = arith.constant 3 : index
    %c0_275 = arith.constant 0 : index
    %326 = vector.load %arg11[%c3_273, %c3_274, %c0_275] : memref<4x32x192xf32, #tpu.memory_space<vmem>>, vector<1x3x128xf32>
    %327 = vector.shape_cast %326 : vector<1x3x128xf32> to vector<3x128xf32>
    %328 = vector.shape_cast %325 : vector<3x128xf32> to vector<1x3x128xf32>
    tpu.vector_store %arg11[%c3_273, %c3_274, %c0_275], %328 {strides = array<i32>} : memref<4x32x192xf32, #tpu.memory_space<vmem>>, vector<1x3x128xf32>,
    %c0_276 = arith.constant 0 : index
    %c0_277 = arith.constant 0 : index
    %c0_278 = arith.constant 0 : index
    %329 = vector.load %arg11[%c0_276, %c0_277, %c0_278] : memref<4x32x192xf32, #tpu.memory_space<vmem>>, vector<1x6x128xf32>
    %330 = vector.shape_cast %329 : vector<1x6x128xf32> to vector<6x128xf32>
    %331 = arith.truncf %330 : vector<6x128xf32> to vector<6x128xbf16>
    %c3_279 = arith.constant 3 : index
    %c0_280 = arith.constant 0 : index
    %c0_281 = arith.constant 0 : index
    %c0_282 = arith.constant 0 : index
    %332 = vector.load %arg2[%c3_279, %c0_280, %c0_281, %c0_282] : memref<5x4x192x192xbf16, #tpu.memory_space<vmem>>, vector<1x1x128x192xbf16>
    %333 = vector.shape_cast %332 : vector<1x1x128x192xbf16> to vector<128x192xbf16>
    %cst_283 = arith.constant dense<0.000000e+00> : vector<6x192xf32>
    %334 = tpu.matmul %331, %333, %cst_283 {dimension_numbers = #tpu.dot_dimension_numbers<[1], [0], [0], [1], [0, 0, 1, 1], [], []>} : vector<6x128xbf16>, vector<128x192xbf16>, vector<6x192xf32> -> vector<6x192xf32>
    %c1_284 = arith.constant 1 : index
    %c0_285 = arith.constant 0 : index
    %c0_286 = arith.constant 0 : index
    %335 = vector.load %arg11[%c1_284, %c0_285, %c0_286] : memref<4x32x192xf32, #tpu.memory_space<vmem>>, vector<1x6x128xf32>
    %336 = vector.shape_cast %335 : vector<1x6x128xf32> to vector<6x128xf32>
    %337 = arith.truncf %336 : vector<6x128xf32> to vector<6x128xbf16>
    %c3_287 = arith.constant 3 : index
    %c1_288 = arith.constant 1 : index
    %c0_289 = arith.constant 0 : index
    %c0_290 = arith.constant 0 : index
    %338 = vector.load %arg2[%c3_287, %c1_288, %c0_289, %c0_290] : memref<5x4x192x192xbf16, #tpu.memory_space<vmem>>, vector<1x1x128x192xbf16>
    %339 = vector.shape_cast %338 : vector<1x1x128x192xbf16> to vector<128x192xbf16>
    %cst_291 = arith.constant dense<0.000000e+00> : vector<6x192xf32>
    %340 = tpu.matmul %337, %339, %cst_291 {dimension_numbers = #tpu.dot_dimension_numbers<[1], [0], [0], [1], [0, 0, 1, 1], [], []>} : vector<6x128xbf16>, vector<128x192xbf16>, vector<6x192xf32> -> vector<6x192xf32>
    %c2_292 = arith.constant 2 : index
    %c0_293 = arith.constant 0 : index
    %c0_294 = arith.constant 0 : index
    %341 = vector.load %arg11[%c2_292, %c0_293, %c0_294] : memref<4x32x192xf32, #tpu.memory_space<vmem>>, vector<1x6x128xf32>
    %342 = vector.shape_cast %341 : vector<1x6x128xf32> to vector<6x128xf32>
    %343 = arith.truncf %342 : vector<6x128xf32> to vector<6x128xbf16>
    %c3_295 = arith.constant 3 : index
    %c2_296 = arith.constant 2 : index
    %c0_297 = arith.constant 0 : index
    %c0_298 = arith.constant 0 : index
    %344 = vector.load %arg2[%c3_295, %c2_296, %c0_297, %c0_298] : memref<5x4x192x192xbf16, #tpu.memory_space<vmem>>, vector<1x1x128x192xbf16>
    %345 = vector.shape_cast %344 : vector<1x1x128x192xbf16> to vector<128x192xbf16>
    %cst_299 = arith.constant dense<0.000000e+00> : vector<6x192xf32>
    %346 = tpu.matmul %343, %345, %cst_299 {dimension_numbers = #tpu.dot_dimension_numbers<[1], [0], [0], [1], [0, 0, 1, 1], [], []>} : vector<6x128xbf16>, vector<128x192xbf16>, vector<6x192xf32> -> vector<6x192xf32>
    %c3_300 = arith.constant 3 : index
    %c0_301 = arith.constant 0 : index
    %c0_302 = arith.constant 0 : index
    %347 = vector.load %arg11[%c3_300, %c0_301, %c0_302] : memref<4x32x192xf32, #tpu.memory_space<vmem>>, vector<1x6x128xf32>
    %348 = vector.shape_cast %347 : vector<1x6x128xf32> to vector<6x128xf32>
    %349 = arith.truncf %348 : vector<6x128xf32> to vector<6x128xbf16>
    %c3_303 = arith.constant 3 : index
    %c3_304 = arith.constant 3 : index
    %c0_305 = arith.constant 0 : index
    %c0_306 = arith.constant 0 : index
    %350 = vector.load %arg2[%c3_303, %c3_304, %c0_305, %c0_306] : memref<5x4x192x192xbf16, #tpu.memory_space<vmem>>, vector<1x1x128x192xbf16>
    %351 = vector.shape_cast %350 : vector<1x1x128x192xbf16> to vector<128x192xbf16>
    %cst_307 = arith.constant dense<0.000000e+00> : vector<6x192xf32>
    %352 = tpu.matmul %349, %351, %cst_307 {dimension_numbers = #tpu.dot_dimension_numbers<[1], [0], [0], [1], [0, 0, 1, 1], [], []>} : vector<6x128xbf16>, vector<128x192xbf16>, vector<6x192xf32> -> vector<6x192xf32>
    %353 = arith.addf %334, %340 : vector<6x192xf32>
    %354 = arith.addf %346, %352 : vector<6x192xf32>
    %355 = arith.addf %353, %354 : vector<6x192xf32>
    %c2_308 = arith.constant 2 : index
    %c0_309 = arith.constant 0 : index
    %c0_310 = arith.constant 0 : index
    %356 = vector.load %arg4[%c2_308, %c0_309, %c0_310] : memref<3x192x64xf32, #tpu.memory_space<vmem>>, vector<1x192x64xf32>
    %357 = vector.shape_cast %356 : vector<1x192x64xf32> to vector<192x64xf32>
    %c2_311 = arith.constant 2 : index
    %c0_312 = arith.constant 0 : index
    %c0_313 = arith.constant 0 : index
    %358 = vector.load %arg5[%c2_311, %c0_312, %c0_313] : memref<3x64x192xf32, #tpu.memory_space<vmem>>, vector<1x64x192xf32>
    %359 = vector.shape_cast %358 : vector<1x64x192xf32> to vector<64x192xf32>
    %cst_314 = arith.constant dense<0.000000e+00> : vector<192xf32>
    %360 = vector.multi_reduction <add>, %355, %cst_314 [0] : vector<6x192xf32> to vector<192xf32>
    %361 = vector.shape_cast %360 : vector<192xf32> to vector<1x192xf32>
    %362 = arith.mulf %355, %355 : vector<6x192xf32>
    %cst_315 = arith.constant dense<0.000000e+00> : vector<192xf32>
    %363 = vector.multi_reduction <add>, %362, %cst_315 [0] : vector<6x192xf32> to vector<192xf32>
    %364 = vector.shape_cast %363 : vector<192xf32> to vector<1x192xf32>
    %cst_316 = arith.constant dense<0.000000e+00> : vector<1x64xf32>
    %365 = tpu.matmul %361, %357, %cst_316 {dimension_numbers = #tpu.dot_dimension_numbers<[1], [0], [0], [1], [0, 0, 1, 1], [], []>} : vector<1x192xf32>, vector<192x64xf32>, vector<1x64xf32> -> vector<1x64xf32>
    %cst_317 = arith.constant dense<0.000000e+00> : vector<1x192xf32>
    %366 = tpu.matmul %365, %359, %cst_317 {dimension_numbers = #tpu.dot_dimension_numbers<[1], [0], [0], [1], [0, 0, 1, 1], [], []>} : vector<1x64xf32>, vector<64x192xf32>, vector<1x192xf32> -> vector<1x192xf32>
    %cst_318 = arith.constant 0.055555556 : f32
    %367 = vector.broadcast %cst_318 : f32 to vector<1x192xf32>
    %368 = arith.mulf %366, %367 : vector<1x192xf32>
    %cst_319 = arith.constant dense<0.000000e+00> : vector<1x64xf32>
    %369 = tpu.matmul %364, %357, %cst_319 {dimension_numbers = #tpu.dot_dimension_numbers<[1], [0], [0], [1], [0, 0, 1, 1], [], []>} : vector<1x192xf32>, vector<192x64xf32>, vector<1x64xf32> -> vector<1x64xf32>
    %cst_320 = arith.constant dense<0.000000e+00> : vector<1x192xf32>
    %370 = tpu.matmul %369, %359, %cst_320 {dimension_numbers = #tpu.dot_dimension_numbers<[1], [0], [0], [1], [0, 0, 1, 1], [], []>} : vector<1x64xf32>, vector<64x192xf32>, vector<1x192xf32> -> vector<1x192xf32>
    %cst_321 = arith.constant 0.055555556 : f32
    %371 = vector.broadcast %cst_321 : f32 to vector<1x192xf32>
    %372 = arith.mulf %370, %371 : vector<1x192xf32>
    %373 = arith.mulf %368, %368 : vector<1x192xf32>
    %374 = arith.subf %372, %373 : vector<1x192xf32>
    %c3_322 = arith.constant 3 : index
    %c0_323 = arith.constant 0 : index
    %c0_324 = arith.constant 0 : index
    %375 = vector.load %arg3[%c3_322, %c0_323, %c0_324] : memref<5x2x192xf32, #tpu.memory_space<vmem>>, vector<1x1x192xf32>
    %376 = vector.shape_cast %375 : vector<1x1x192xf32> to vector<1x192xf32>
    %c3_325 = arith.constant 3 : index
    %c1_326 = arith.constant 1 : index
    %c0_327 = arith.constant 0 : index
    %377 = vector.load %arg3[%c3_325, %c1_326, %c0_327] : memref<5x2x192xf32, #tpu.memory_space<vmem>>, vector<1x1x192xf32>
    %378 = vector.shape_cast %377 : vector<1x1x192xf32> to vector<1x192xf32>
    %cst_328 = arith.constant 9.99999974E-6 : f32
    %379 = vector.broadcast %cst_328 : f32 to vector<1x192xf32>
    %380 = arith.addf %374, %379 : vector<1x192xf32>
    %381 = math.rsqrt %380 : vector<1x192xf32>
    %382 = arith.mulf %376, %381 : vector<1x192xf32>
    %383 = arith.mulf %368, %382 : vector<1x192xf32>
    %384 = arith.subf %378, %383 : vector<1x192xf32>
    %385 = vector.broadcast %382 : vector<1x192xf32> to vector<6x192xf32>
    %386 = arith.mulf %355, %385 : vector<6x192xf32>
    %387 = vector.broadcast %384 : vector<1x192xf32> to vector<6x192xf32>
    %388 = arith.addf %386, %387 : vector<6x192xf32>
    %cst_329 = arith.constant 0.000000e+00 : f32
    %389 = vector.broadcast %cst_329 : f32 to vector<6x192xf32>
    %390 = arith.cmpf ogt, %388, %389 : vector<6x192xf32>
    %cst_330 = arith.constant 2.000000e-01 : f32
    %391 = vector.broadcast %cst_330 : f32 to vector<6x192xf32>
    %392 = arith.mulf %391, %388 : vector<6x192xf32>
    %393 = arith.select %390, %388, %392 : vector<6x192xi1>, vector<6x192xf32>
    %c0_331 = arith.constant 0 : index
    %c0_332 = arith.constant 0 : index
    %394 = vector.load %arg10[%c0_331, %c0_332] : memref<6x192xf32, #tpu.memory_space<vmem>>, vector<6x192xf32>
    tpu.vector_store %arg10[%c0_331, %c0_332], %393 {strides = array<i32>} : memref<6x192xf32, #tpu.memory_space<vmem>>, vector<6x192xf32>,
    %c4_333 = arith.constant 4 : index
    %c0_334 = arith.constant 0 : index
    %c0_335 = arith.constant 0 : index
    %395 = vector.load %arg1[%c4_333, %c0_334, %c0_335] : memref<5x64x32xbf16, #tpu.memory_space<vmem>>, vector<1x8x3xbf16>
    %396 = vector.shape_cast %395 : vector<1x8x3xbf16> to vector<8x3xbf16>
    %c0_336 = arith.constant 0 : index
    %c0_337 = arith.constant 0 : index
    %397 = vector.load %arg10[%c0_336, %c0_337] : memref<6x192xf32, #tpu.memory_space<vmem>>, vector<3x192xf32>
    %398 = arith.truncf %397 : vector<3x192xf32> to vector<3x192xbf16>
    %cst_338 = arith.constant dense<0.000000e+00> : vector<8x192xf32>
    %399 = tpu.matmul %396, %398, %cst_338 {dimension_numbers = #tpu.dot_dimension_numbers<[1], [0], [0], [1], [0, 0, 1, 1], [], []>} : vector<8x3xbf16>, vector<3x192xbf16>, vector<8x192xf32> -> vector<8x192xf32>
    %400 = vector.extract_strided_slice %399 {offsets = [0, 0], sizes = [2, 192], strides = [1, 1]} : vector<8x192xf32> to vector<2x192xf32>
    %c0_339 = arith.constant 0 : index
    %c0_340 = arith.constant 0 : index
    %c0_341 = arith.constant 0 : index
    %401 = vector.load %arg11[%c0_339, %c0_340, %c0_341] : memref<4x32x192xf32, #tpu.memory_space<vmem>>, vector<1x2x192xf32>
    %402 = vector.shape_cast %401 : vector<1x2x192xf32> to vector<2x192xf32>
    %403 = vector.shape_cast %400 : vector<2x192xf32> to vector<1x2x192xf32>
    tpu.vector_store %arg11[%c0_339, %c0_340, %c0_341], %403 {strides = array<i32>} : memref<4x32x192xf32, #tpu.memory_space<vmem>>, vector<1x2x192xf32>,
    %404 = vector.extract_strided_slice %399 {offsets = [2, 0], sizes = [2, 192], strides = [1, 1]} : vector<8x192xf32> to vector<2x192xf32>
    %c1_342 = arith.constant 1 : index
    %c0_343 = arith.constant 0 : index
    %c0_344 = arith.constant 0 : index
    %405 = vector.load %arg11[%c1_342, %c0_343, %c0_344] : memref<4x32x192xf32, #tpu.memory_space<vmem>>, vector<1x2x192xf32>
    %406 = vector.shape_cast %405 : vector<1x2x192xf32> to vector<2x192xf32>
    %407 = vector.shape_cast %404 : vector<2x192xf32> to vector<1x2x192xf32>
    tpu.vector_store %arg11[%c1_342, %c0_343, %c0_344], %407 {strides = array<i32>} : memref<4x32x192xf32, #tpu.memory_space<vmem>>, vector<1x2x192xf32>,
    %408 = vector.extract_strided_slice %399 {offsets = [4, 0], sizes = [2, 192], strides = [1, 1]} : vector<8x192xf32> to vector<2x192xf32>
    %c2_345 = arith.constant 2 : index
    %c0_346 = arith.constant 0 : index
    %c0_347 = arith.constant 0 : index
    %409 = vector.load %arg11[%c2_345, %c0_346, %c0_347] : memref<4x32x192xf32, #tpu.memory_space<vmem>>, vector<1x2x192xf32>
    %410 = vector.shape_cast %409 : vector<1x2x192xf32> to vector<2x192xf32>
    %411 = vector.shape_cast %408 : vector<2x192xf32> to vector<1x2x192xf32>
    tpu.vector_store %arg11[%c2_345, %c0_346, %c0_347], %411 {strides = array<i32>} : memref<4x32x192xf32, #tpu.memory_space<vmem>>, vector<1x2x192xf32>,
    %412 = vector.extract_strided_slice %399 {offsets = [6, 0], sizes = [2, 192], strides = [1, 1]} : vector<8x192xf32> to vector<2x192xf32>
    %c3_348 = arith.constant 3 : index
    %c0_349 = arith.constant 0 : index
    %c0_350 = arith.constant 0 : index
    %413 = vector.load %arg11[%c3_348, %c0_349, %c0_350] : memref<4x32x192xf32, #tpu.memory_space<vmem>>, vector<1x2x192xf32>
    %414 = vector.shape_cast %413 : vector<1x2x192xf32> to vector<2x192xf32>
    %415 = vector.shape_cast %412 : vector<2x192xf32> to vector<1x2x192xf32>
    tpu.vector_store %arg11[%c3_348, %c0_349, %c0_350], %415 {strides = array<i32>} : memref<4x32x192xf32, #tpu.memory_space<vmem>>, vector<1x2x192xf32>,
    %c3_351 = arith.constant 3 : index
    %c0_352 = arith.constant 0 : index
    %416 = vector.load %arg10[%c3_351, %c0_352] : memref<6x192xf32, #tpu.memory_space<vmem>>, vector<3x192xf32>
    %417 = arith.truncf %416 : vector<3x192xf32> to vector<3x192xbf16>
    %cst_353 = arith.constant dense<0.000000e+00> : vector<8x192xf32>
    %418 = tpu.matmul %396, %417, %cst_353 {dimension_numbers = #tpu.dot_dimension_numbers<[1], [0], [0], [1], [0, 0, 1, 1], [], []>} : vector<8x3xbf16>, vector<3x192xbf16>, vector<8x192xf32> -> vector<8x192xf32>
    %419 = vector.extract_strided_slice %418 {offsets = [0, 0], sizes = [2, 192], strides = [1, 1]} : vector<8x192xf32> to vector<2x192xf32>
    %c0_354 = arith.constant 0 : index
    %c2_355 = arith.constant 2 : index
    %c0_356 = arith.constant 0 : index
    %420 = vector.load %arg11[%c0_354, %c2_355, %c0_356] : memref<4x32x192xf32, #tpu.memory_space<vmem>>, vector<1x2x192xf32>
    %421 = vector.shape_cast %420 : vector<1x2x192xf32> to vector<2x192xf32>
    %422 = vector.shape_cast %419 : vector<2x192xf32> to vector<1x2x192xf32>
    tpu.vector_store %arg11[%c0_354, %c2_355, %c0_356], %422 {strides = array<i32>} : memref<4x32x192xf32, #tpu.memory_space<vmem>>, vector<1x2x192xf32>,
    %423 = vector.extract_strided_slice %418 {offsets = [2, 0], sizes = [2, 192], strides = [1, 1]} : vector<8x192xf32> to vector<2x192xf32>
    %c1_357 = arith.constant 1 : index
    %c2_358 = arith.constant 2 : index
    %c0_359 = arith.constant 0 : index
    %424 = vector.load %arg11[%c1_357, %c2_358, %c0_359] : memref<4x32x192xf32, #tpu.memory_space<vmem>>, vector<1x2x192xf32>
    %425 = vector.shape_cast %424 : vector<1x2x192xf32> to vector<2x192xf32>
    %426 = vector.shape_cast %423 : vector<2x192xf32> to vector<1x2x192xf32>
    tpu.vector_store %arg11[%c1_357, %c2_358, %c0_359], %426 {strides = array<i32>} : memref<4x32x192xf32, #tpu.memory_space<vmem>>, vector<1x2x192xf32>,
    %427 = vector.extract_strided_slice %418 {offsets = [4, 0], sizes = [2, 192], strides = [1, 1]} : vector<8x192xf32> to vector<2x192xf32>
    %c2_360 = arith.constant 2 : index
    %c2_361 = arith.constant 2 : index
    %c0_362 = arith.constant 0 : index
    %428 = vector.load %arg11[%c2_360, %c2_361, %c0_362] : memref<4x32x192xf32, #tpu.memory_space<vmem>>, vector<1x2x192xf32>
    %429 = vector.shape_cast %428 : vector<1x2x192xf32> to vector<2x192xf32>
    %430 = vector.shape_cast %427 : vector<2x192xf32> to vector<1x2x192xf32>
    tpu.vector_store %arg11[%c2_360, %c2_361, %c0_362], %430 {strides = array<i32>} : memref<4x32x192xf32, #tpu.memory_space<vmem>>, vector<1x2x192xf32>,
    %431 = vector.extract_strided_slice %418 {offsets = [6, 0], sizes = [2, 192], strides = [1, 1]} : vector<8x192xf32> to vector<2x192xf32>
    %c3_363 = arith.constant 3 : index
    %c2_364 = arith.constant 2 : index
    %c0_365 = arith.constant 0 : index
    %432 = vector.load %arg11[%c3_363, %c2_364, %c0_365] : memref<4x32x192xf32, #tpu.memory_space<vmem>>, vector<1x2x192xf32>
    %433 = vector.shape_cast %432 : vector<1x2x192xf32> to vector<2x192xf32>
    %434 = vector.shape_cast %431 : vector<2x192xf32> to vector<1x2x192xf32>
    tpu.vector_store %arg11[%c3_363, %c2_364, %c0_365], %434 {strides = array<i32>} : memref<4x32x192xf32, #tpu.memory_space<vmem>>, vector<1x2x192xf32>,
    %c0_366 = arith.constant 0 : index
    %c0_367 = arith.constant 0 : index
    %c0_368 = arith.constant 0 : index
    %435 = vector.load %arg11[%c0_366, %c0_367, %c0_368] : memref<4x32x192xf32, #tpu.memory_space<vmem>>, vector<1x4x192xf32>
    %436 = vector.shape_cast %435 : vector<1x4x192xf32> to vector<4x192xf32>
    %437 = arith.truncf %436 : vector<4x192xf32> to vector<4x192xbf16>
    %c4_369 = arith.constant 4 : index
    %c0_370 = arith.constant 0 : index
    %c0_371 = arith.constant 0 : index
    %c0_372 = arith.constant 0 : index
    %438 = vector.load %arg2[%c4_369, %c0_370, %c0_371, %c0_372] : memref<5x4x192x192xbf16, #tpu.memory_space<vmem>>, vector<1x1x192x2xbf16>
    %439 = vector.shape_cast %438 : vector<1x1x192x2xbf16> to vector<192x2xbf16>
    %cst_373 = arith.constant dense<0.000000e+00> : vector<4x2xf32>
    %440 = tpu.matmul %437, %439, %cst_373 {dimension_numbers = #tpu.dot_dimension_numbers<[1], [0], [0], [1], [0, 0, 1, 1], [], []>} : vector<4x192xbf16>, vector<192x2xbf16>, vector<4x2xf32> -> vector<4x2xf32>
    %c1_374 = arith.constant 1 : index
    %c0_375 = arith.constant 0 : index
    %c0_376 = arith.constant 0 : index
    %441 = vector.load %arg11[%c1_374, %c0_375, %c0_376] : memref<4x32x192xf32, #tpu.memory_space<vmem>>, vector<1x4x192xf32>
    %442 = vector.shape_cast %441 : vector<1x4x192xf32> to vector<4x192xf32>
    %443 = arith.truncf %442 : vector<4x192xf32> to vector<4x192xbf16>
    %c4_377 = arith.constant 4 : index
    %c1_378 = arith.constant 1 : index
    %c0_379 = arith.constant 0 : index
    %c0_380 = arith.constant 0 : index
    %444 = vector.load %arg2[%c4_377, %c1_378, %c0_379, %c0_380] : memref<5x4x192x192xbf16, #tpu.memory_space<vmem>>, vector<1x1x192x2xbf16>
    %445 = vector.shape_cast %444 : vector<1x1x192x2xbf16> to vector<192x2xbf16>
    %cst_381 = arith.constant dense<0.000000e+00> : vector<4x2xf32>
    %446 = tpu.matmul %443, %445, %cst_381 {dimension_numbers = #tpu.dot_dimension_numbers<[1], [0], [0], [1], [0, 0, 1, 1], [], []>} : vector<4x192xbf16>, vector<192x2xbf16>, vector<4x2xf32> -> vector<4x2xf32>
    %c2_382 = arith.constant 2 : index
    %c0_383 = arith.constant 0 : index
    %c0_384 = arith.constant 0 : index
    %447 = vector.load %arg11[%c2_382, %c0_383, %c0_384] : memref<4x32x192xf32, #tpu.memory_space<vmem>>, vector<1x4x192xf32>
    %448 = vector.shape_cast %447 : vector<1x4x192xf32> to vector<4x192xf32>
    %449 = arith.truncf %448 : vector<4x192xf32> to vector<4x192xbf16>
    %c4_385 = arith.constant 4 : index
    %c2_386 = arith.constant 2 : index
    %c0_387 = arith.constant 0 : index
    %c0_388 = arith.constant 0 : index
    %450 = vector.load %arg2[%c4_385, %c2_386, %c0_387, %c0_388] : memref<5x4x192x192xbf16, #tpu.memory_space<vmem>>, vector<1x1x192x2xbf16>
    %451 = vector.shape_cast %450 : vector<1x1x192x2xbf16> to vector<192x2xbf16>
    %cst_389 = arith.constant dense<0.000000e+00> : vector<4x2xf32>
    %452 = tpu.matmul %449, %451, %cst_389 {dimension_numbers = #tpu.dot_dimension_numbers<[1], [0], [0], [1], [0, 0, 1, 1], [], []>} : vector<4x192xbf16>, vector<192x2xbf16>, vector<4x2xf32> -> vector<4x2xf32>
    %c3_390 = arith.constant 3 : index
    %c0_391 = arith.constant 0 : index
    %c0_392 = arith.constant 0 : index
    %453 = vector.load %arg11[%c3_390, %c0_391, %c0_392] : memref<4x32x192xf32, #tpu.memory_space<vmem>>, vector<1x4x192xf32>
    %454 = vector.shape_cast %453 : vector<1x4x192xf32> to vector<4x192xf32>
    %455 = arith.truncf %454 : vector<4x192xf32> to vector<4x192xbf16>
    %c4_393 = arith.constant 4 : index
    %c3_394 = arith.constant 3 : index
    %c0_395 = arith.constant 0 : index
    %c0_396 = arith.constant 0 : index
    %456 = vector.load %arg2[%c4_393, %c3_394, %c0_395, %c0_396] : memref<5x4x192x192xbf16, #tpu.memory_space<vmem>>, vector<1x1x192x2xbf16>
    %457 = vector.shape_cast %456 : vector<1x1x192x2xbf16> to vector<192x2xbf16>
    %cst_397 = arith.constant dense<0.000000e+00> : vector<4x2xf32>
    %458 = tpu.matmul %455, %457, %cst_397 {dimension_numbers = #tpu.dot_dimension_numbers<[1], [0], [0], [1], [0, 0, 1, 1], [], []>} : vector<4x192xbf16>, vector<192x2xbf16>, vector<4x2xf32> -> vector<4x2xf32>
    %459 = arith.addf %440, %446 : vector<4x2xf32>
    %460 = arith.addf %452, %458 : vector<4x2xf32>
    %461 = arith.addf %459, %460 : vector<4x2xf32>
    %c4_398 = arith.constant 4 : index
    %c0_399 = arith.constant 0 : index
    %c0_400 = arith.constant 0 : index
    %462 = vector.load %arg3[%c4_398, %c0_399, %c0_400] : memref<5x2x192xf32, #tpu.memory_space<vmem>>, vector<1x1x2xf32>
    %463 = vector.shape_cast %462 : vector<1x1x2xf32> to vector<1x2xf32>
    %464 = vector.broadcast %463 : vector<1x2xf32> to vector<4x2xf32>
    %465 = arith.addf %461, %464 : vector<4x2xf32>
    %c0_401 = arith.constant 0 : index
    %c0_402 = arith.constant 0 : index
    %466 = vector.load %arg6[%c0_401, %c0_402] : memref<4x2xf32, #tpu.memory_space<vmem>>, vector<4x2xf32>
    tpu.vector_store %arg6[%c0_401, %c0_402], %465 {strides = array<i32>} : memref<4x2xf32, #tpu.memory_space<vmem>>, vector<4x2xf32>,
    return
  }
}

</mosaic_0001>

<llo_original>
// kernel: tpu_custom_call.1
$region0: #{tpu_custom_call.1}
  #allocation0 [shape = 'u32[]', space=smem, size = 0x4, offset = 0x4, fixed_abs, tag = 'smem constant byte address 0x4 - core index']
  #allocation1 [shape = 'u32[72,128]{1,0:T(1,128)}', space=vmem, size = 0x9000, scoped, tag = 'internal scratch']
  #allocation2 [shape = 'f32[32,128]{1,0:T(8,128)}', space=vmem, size = 0x4000, scoped, tag = 'scratch operand']
  #allocation3 [shape = 'f32[16,128]{1,0:T(8,128)}', space=vmem, size = 0x2000, scoped, tag = 'scratch operand']
  #allocation4 [shape = 'f32[8,128]{1,0:T(8,128)}', space=vmem, size = 0x1000, scoped, tag = 'scratch operand']
  #allocation5 [shape = 'f32[6,192]{1,0:T(8,128)}', space=vmem, size = 0x2000, scoped, tag = 'scratch operand']
  #allocation6 [shape = 'f32[4,32,192]{2,1,0:T(8,128)}', space=vmem, size = 0x20000, scoped, tag = 'scratch operand']
  %s0 = inlined_call_operand.vmem [shape: f32[64,32], index: 0, kind: input, shape index: {}]
  %s1 = inlined_call_operand.vmem [shape: bf16[5,64,32], index: 1, kind: input, shape index: {}]
  %s2 = inlined_call_operand.hbm [shape: bf16[5,4,192,192], index: 2, kind: input, shape index: {}]
  %s3 = inlined_call_operand.hbm [shape: f32[5,2,192], index: 3, kind: input, shape index: {}]
  %s4 = inlined_call_operand.vmem [shape: f32[3,192,64], index: 4, kind: input, shape index: {}]
  %s5 = inlined_call_operand.hbm [shape: f32[3,64,192], index: 5, kind: input, shape index: {}]
  %s6 = inlined_call_operand.vmem [shape: f32[4,2], index: 6, kind: output, shape index: {}]
  %s7 = sld [smem:[#allocation0]]
  $region46: #{tpu_custom_call.1} parent=0
    _
  %s9 = ssub.s32 1, %s7
  %s10 = scalar_select 0, %s9, %s7
  $region1: #{tpu_custom_call.1} parent=0
    #allocation7 [shape = 'u8[1966080]{0}', space=vmem, size = 0x1e0000, scoped, tag = 'input window, operand 2, single buffered']
    #allocation8 [shape = 's32[1]{0}', space=sflag, size = 0x4, scoped, tag = 'scoped memory for tpu_custom_call.1']
    #allocation9 [shape = 'u8[10240]{0}', space=vmem, size = 0x2800, scoped, tag = 'input window, operand 3, single buffered']
    #allocation10 [shape = 's32[1]{0}', space=sflag, size = 0x4, scoped, tag = 'scoped memory for tpu_custom_call.1']
    #allocation11 [shape = 'u8[196608]{0}', space=vmem, size = 0x30000, scoped, tag = 'input window, operand 5, single buffered']
    %11 = vsyncpa [#allocation8], 0
    %12 = vsyncpa [#allocation10], 0
    // Predicated region
    $region2: #{tpu_custom_call.1} parent=1 // pred_check
      _
    $region3: #{tpu_custom_call.1} parent=1 // pred_check_branch
      %14 = sbr.rel (0) target = $region5
    $region4: #{tpu_custom_call.1} parent=1 // pred_region
      _
    $region5: #{tpu_custom_call.1} parent=1 // pred_fallthru
      _
    // Predicated region
    $region6: #{tpu_custom_call.1} parent=1 // pred_check
      _
    $region7: #{tpu_custom_call.1} parent=1 // pred_check_branch
      %16 = sbr.rel (0) target = $region9
    $region8: #{tpu_custom_call.1} parent=1 // pred_region
      _
    $region9: #{tpu_custom_call.1} parent=1 // pred_fallthru
      _
    // Predicated region
    $region10: #{tpu_custom_call.1} parent=1 // pred_check
      _
    $region11: #{tpu_custom_call.1} parent=1 // pred_check_branch
      %18 = sbr.rel (0) target = $region13
    $region12: #{tpu_custom_call.1} parent=1 // pred_region
      %20 = vsyncadd [#allocation8], 0
      %s21 = sshll.u32 %s2, 4
      %s22 = int_to_ptr.hbm [resolvable:$true] %s21
      %s23 = sshll.u32 [#allocation7], 4
      %s24 = int_to_ptr.vmem [resolvable:$true] %s23
      %29 = dma.hbm_to_vmem [thread:$0]  %s22, 61440, %s24, [#allocation8], 128, 128, 8
    $region13: #{tpu_custom_call.1} parent=1 // pred_fallthru
      _
    // Predicated region
    $region14: #{tpu_custom_call.1} parent=1 // pred_check
      _
    $region15: #{tpu_custom_call.1} parent=1 // pred_check_branch
      %31 = sbr.rel (0) target = $region17
    $region16: #{tpu_custom_call.1} parent=1 // pred_region
      %33 = vsyncadd [#allocation10], 0
      %s34 = sshll.u32 %s3, 4
      %s35 = int_to_ptr.hbm [resolvable:$true] %s34
      %s36 = sshll.u32 [#allocation9], 4
      %s37 = int_to_ptr.vmem [resolvable:$true] %s36
      %42 = dma.hbm_to_vmem [thread:$0]  %s35, 320, %s37, [#allocation10], 64, 64, 4
    $region17: #{tpu_custom_call.1} parent=1 // pred_fallthru
      _
    // Predicated region
    $region18: #{tpu_custom_call.1} parent=1 // pred_check
      _
    $region19: #{tpu_custom_call.1} parent=1 // pred_check_branch
      %44 = sbr.rel (0) target = $region21
    $region20: #{tpu_custom_call.1} parent=1 // pred_region
      _
    $region21: #{tpu_custom_call.1} parent=1 // pred_fallthru
      _
    // Predicated region
    $region22: #{tpu_custom_call.1} parent=1 // pred_check
      _
    $region23: #{tpu_custom_call.1} parent=1 // pred_check_branch
      %46 = sbr.rel (0) target = $region25
    $region24: #{tpu_custom_call.1} parent=1 // pred_region
      %48 = vsyncadd [#allocation10], 0
      %s49 = sshll.u32 %s5, 4
      %s50 = int_to_ptr.hbm [resolvable:$true] %s49
      %s51 = sshll.u32 [#allocation11], 4
      %s52 = int_to_ptr.vmem [resolvable:$true] %s51
      %57 = dma.hbm_to_vmem [thread:$0]  %s50, 6144, %s52, [#allocation10], 256, 256, 16
    $region25: #{tpu_custom_call.1} parent=1 // pred_fallthru
      _
    // Predicated region
    $region26: #{tpu_custom_call.1} parent=1 // pred_check
      _
    $region27: #{tpu_custom_call.1} parent=1 // pred_check_branch
      %59 = sbr.rel (0) target = $region29
    $region28: #{tpu_custom_call.1} parent=1 // pred_region
      %61 = dma.done [#allocation8], 61440
    $region29: #{tpu_custom_call.1} parent=1 // pred_fallthru
      _
    // Predicated region
    $region30: #{tpu_custom_call.1} parent=1 // pred_check
      _
    $region31: #{tpu_custom_call.1} parent=1 // pred_check_branch
      %63 = sbr.rel (0) target = $region33
    $region32: #{tpu_custom_call.1} parent=1 // pred_region
      %65 = dma.done [#allocation10], 320
    $region33: #{tpu_custom_call.1} parent=1 // pred_fallthru
      _
    // Predicated region
    $region34: #{tpu_custom_call.1} parent=1 // pred_check
      _
    $region35: #{tpu_custom_call.1} parent=1 // pred_check_branch
      %67 = sbr.rel (0) target = $region37
    $region36: #{tpu_custom_call.1} parent=1 // pred_region
      %69 = dma.done [#allocation10], 6144
    $region37: #{tpu_custom_call.1} parent=1 // pred_fallthru
      _
    %v71 = vld [vmem:[%s1] sm:$0xf]
    %v72 = vld [vmem:[%s1 + $0x4] sm:$0xf]
    %v73 = vld [vmem:[%s1 + $0x8] sm:$0xf]
    %v74 = vld [vmem:[%s1 + $0xc] sm:$0xf]
    %v75 = vld [vmem:[%s1 + $0x10] sm:$0xf]
    %v76 = vld [vmem:[%s1 + $0x14] sm:$0xf]
    %v77 = vld [vmem:[%s1 + $0x18] sm:$0xf]
    %v78 = vld [vmem:[%s1 + $0x1c] sm:$0xf]
    %v79 = vld [vmem:[%s0] sm:$0xff]
    %v80 = vld [vmem:[%s0 + $0x8] sm:$0xff]
    %v81 = vld [vmem:[%s0 + $0x10] sm:$0xff]
    %v82 = vld [vmem:[%s0 + $0x18] sm:$0xff]
    %v83 = vpack.c.bf16 %v80, %v79
    %v84 = vpack.c.bf16 %v82, %v81
    %v93 = vunpack.c.l.b16 %v71
    %v94 = vunpack.c.l.b16 %v72
    %v95 = vunpack.c.l.b16 %v73
    %v96 = vunpack.c.l.b16 %v74
    %v97 = vunpack.c.l.b16 %v75
    %v98 = vunpack.c.l.b16 %v76
    %v99 = vunpack.c.l.b16 %v77
    %v100 = vunpack.c.l.b16 %v78
    %v101 = vpack.c.b16 %v94, %v93
    %v102 = vpack.c.b16 %v96, %v95
    %v103 = vpack.c.b16 %v98, %v97
    %v104 = vpack.c.b16 %v100, %v99
    %vm105 = vcmask 261120
    %v107 = vsel %vm105, %v101, 0
    %v110 = vsel %vm105, %v102, 0
    %v113 = vsel %vm105, %v103, 0
    %v116 = vsel %vm105, %v104, 0
    %118 = vmatpush.bf16.msra.mxu0 0
    %119 = vmatpush.bf16.msra.mxu0 0
    %120 = vmatpush.bf16.msra.mxu0 0
    %121 = vmatpush.bf16.msra.mxu0 0
    %122 = vmatpush.bf16.msra.mxu0 0
    %123 = vmatpush.bf16.msra.mxu0 0
    %124 = vmatpush.bf16.msra.mxu0 %v84
    %125 = vmatpush.bf16.msra.mxu0 %v83
    %126 = vmatmul.bf16.gmra.mxu0 %v107
    %v127 = vpop.f32.mrf.mxu0
    %v128 = vadd.f32 0.0, %v127
    %v129 = vpop.f32.mrf.mxu0
    %v130 = vadd.f32 0.0, %v129
    %131 = vmatmul.bf16.gmra.mxu0 %v110
    %v132 = vpop.f32.mrf.mxu0
    %v133 = vadd.f32 0.0, %v132
    %v134 = vpop.f32.mrf.mxu0
    %v135 = vadd.f32 0.0, %v134
    %136 = vmatmul.bf16.gmra.mxu0 %v113
    %v137 = vpop.f32.mrf.mxu0
    %v138 = vadd.f32 0.0, %v137
    %v139 = vpop.f32.mrf.mxu0
    %v140 = vadd.f32 0.0, %v139
    %141 = vmatmul.bf16.gmra.mxu0 %v116
    %v142 = vpop.f32.mrf.mxu0
    %v143 = vadd.f32 0.0, %v142
    %v144 = vpop.f32.mrf.mxu0
    %v145 = vadd.f32 0.0, %v144
    %146 = vdwg.mxu0
    %147 = vst.msk [vmem:[#allocation6] sm:$0xff] %vm105, %v128
    %148 = vst.msk [vmem:[#allocation6 + $0x10] sm:$0xff] %vm105, %v130
    %s149 = scalar_lea.vmem [#allocation6], 64
    %150 = vst.msk [vmem:[%s149] sm:$0xff] %vm105, %v133
    %151 = vst.msk [vmem:[%s149 + $0x10] sm:$0xff] %vm105, %v135
    %s152 = scalar_lea.vmem [#allocation6], 128
    %153 = vst.msk [vmem:[%s152] sm:$0xff] %vm105, %v138
    %154 = vst.msk [vmem:[%s152 + $0x10] sm:$0xff] %vm105, %v140
    %s155 = scalar_lea.vmem [#allocation6], 192
    %156 = vst.msk [vmem:[%s155] sm:$0xff] %vm105, %v143
    %157 = vst.msk [vmem:[%s155 + $0x10] sm:$0xff] %vm105, %v145
    %v158 = vld [vmem:[%s0 + $0x20] sm:$0xff]
    %v159 = vld [vmem:[%s0 + $0x28] sm:$0xff]
    %v160 = vld [vmem:[%s0 + $0x30] sm:$0xff]
    %v161 = vld [vmem:[%s0 + $0x38] sm:$0xff]
    %v162 = vpack.c.bf16 %v159, %v158
    %v163 = vpack.c.bf16 %v161, %v160
    %164 = vmatpush.bf16.msra.mxu0 0
    %165 = vmatpush.bf16.msra.mxu0 0
    %166 = vmatpush.bf16.msra.mxu0 0
    %167 = vmatpush.bf16.msra.mxu0 0
    %168 = vmatpush.bf16.msra.mxu0 0
    %169 = vmatpush.bf16.msra.mxu0 0
    %170 = vmatpush.bf16.msra.mxu0 %v163
    %171 = vmatpush.bf16.msra.mxu0 %v162
    %172 = vmatmul.bf16.gmra.mxu0 %v107
    %v173 = vpop.f32.mrf.mxu0
    %v174 = vadd.f32 0.0, %v173
    %v175 = vpop.f32.mrf.mxu0
    %v176 = vadd.f32 0.0, %v175
    %177 = vmatmul.bf16.gmra.mxu0 %v110
    %v178 = vpop.f32.mrf.mxu0
    %v179 = vadd.f32 0.0, %v178
    %v180 = vpop.f32.mrf.mxu0
    %v181 = vadd.f32 0.0, %v180
    %182 = vmatmul.bf16.gmra.mxu0 %v113
    %v183 = vpop.f32.mrf.mxu0
    %v184 = vadd.f32 0.0, %v183
    %v185 = vpop.f32.mrf.mxu0
    %v186 = vadd.f32 0.0, %v185
    %187 = vmatmul.bf16.gmra.mxu0 %v116
    %v188 = vpop.f32.mrf.mxu0
    %v189 = vadd.f32 0.0, %v188
    %v190 = vpop.f32.mrf.mxu0
    %v191 = vadd.f32 0.0, %v190
    %192 = vdwg.mxu0
    %193 = vst.msk [vmem:[#allocation6 + $0x20] sm:$0xff] %vm105, %v174
    %194 = vst.msk [vmem:[#allocation6 + $0x30] sm:$0xff] %vm105, %v176
    %195 = vst.msk [vmem:[%s149 + $0x20] sm:$0xff] %vm105, %v179
    %196 = vst.msk [vmem:[%s149 + $0x30] sm:$0xff] %vm105, %v181
    %197 = vst.msk [vmem:[%s152 + $0x20] sm:$0xff] %vm105, %v184
    %198 = vst.msk [vmem:[%s152 + $0x30] sm:$0xff] %vm105, %v186
    %199 = vst.msk [vmem:[%s155 + $0x20] sm:$0xff] %vm105, %v189
    %200 = vst.msk [vmem:[%s155 + $0x30] sm:$0xff] %vm105, %v191
    %v201 = vld [vmem:[#allocation6] sm:$0xff]
    %v202 = vld [vmem:[#allocation6 + $0x10] sm:$0xff]
    %v203 = vld [vmem:[#allocation6 + $0x20] sm:$0xff]
    %v204 = vld [vmem:[#allocation6 + $0x30] sm:$0xff]
    %v205 = vpack.c.bf16 %v202, %v201
    %v206 = vpack.c.bf16 %v204, %v203
    %v207 = vld [vmem:[#allocation7] sm:$0xf]
    %v208 = vld [vmem:[#allocation7 + $0x8] sm:$0xf]
    %v209 = vld [vmem:[#allocation7 + $0x10] sm:$0xf]
    %v210 = vld [vmem:[#allocation7 + $0x18] sm:$0xf]
    %v211 = vld [vmem:[%s149] sm:$0xff]
    %v212 = vld [vmem:[%s149 + $0x10] sm:$0xff]
    %v213 = vld [vmem:[%s149 + $0x20] sm:$0xff]
    %v214 = vld [vmem:[%s149 + $0x30] sm:$0xff]
    %v215 = vpack.c.bf16 %v212, %v211
    %v216 = vpack.c.bf16 %v214, %v213
    %s217 = scalar_lea.vmem [#allocation7], 192
    %v218 = vld [vmem:[%s217] sm:$0xf]
    %v219 = vld [vmem:[%s217 + $0x8] sm:$0xf]
    %v220 = vld [vmem:[%s217 + $0x10] sm:$0xf]
    %v221 = vld [vmem:[%s217 + $0x18] sm:$0xf]
    %v226 = vunpack.c.l.b16 %v218
    %v227 = vunpack.c.l.b16 %v219
    %v228 = vunpack.c.l.b16 %v220
    %v229 = vunpack.c.l.b16 %v221
    %v230 = vpack.c.b16 %v227, %v226
    %v231 = vpack.c.b16 %v229, %v228
    %v235 = vsel %vm105, %v215, 0
    %v238 = vsel %vm105, %v216, 0
    %240 = vmatpush.bf16.msra.mxu0 0
    %241 = vmatpush.bf16.msra.mxu0 0
    %242 = vmatpush.bf16.msra.mxu0 0
    %243 = vmatpush.bf16.msra.mxu0 0
    %244 = vmatpush.bf16.msra.mxu0 0
    %245 = vmatpush.bf16.msra.mxu0 0
    %246 = vmatpush.bf16.msra.mxu0 %v231
    %247 = vmatpush.bf16.msra.mxu0 %v230
    %248 = vmatmul.bf16.gmra.mxu0 %v235
    %v249 = vpop.f32.mrf.mxu0
    %v250 = vadd.f32 0.0, %v249
    %v251 = vpop.f32.mrf.mxu0
    %v252 = vadd.f32 0.0, %v251
    %253 = vmatmul.bf16.gmra.mxu0 %v238
    %v254 = vpop.f32.mrf.mxu0
    %v255 = vadd.f32 0.0, %v254
    %v256 = vpop.f32.mrf.mxu0
    %v257 = vadd.f32 0.0, %v256
    %258 = vdwg.mxu0
    %v259 = vld [vmem:[%s152] sm:$0xff]
    %v260 = vld [vmem:[%s152 + $0x10] sm:$0xff]
    %v261 = vld [vmem:[%s152 + $0x20] sm:$0xff]
    %v262 = vld [vmem:[%s152 + $0x30] sm:$0xff]
    %v263 = vpack.c.bf16 %v260, %v259
    %v264 = vpack.c.bf16 %v262, %v261
    %s265 = scalar_lea.vmem [#allocation7], 384
    %v266 = vld [vmem:[%s265] sm:$0xf]
    %v267 = vld [vmem:[%s265 + $0x8] sm:$0xf]
    %v268 = vld [vmem:[%s265 + $0x10] sm:$0xf]
    %v269 = vld [vmem:[%s265 + $0x18] sm:$0xf]
    %v270 = vld [vmem:[%s155] sm:$0xff]
    %v271 = vld [vmem:[%s155 + $0x10] sm:$0xff]
    %v272 = vld [vmem:[%s155 + $0x20] sm:$0xff]
    %v273 = vld [vmem:[%s155 + $0x30] sm:$0xff]
    %v274 = vpack.c.bf16 %v271, %v270
    %v275 = vpack.c.bf16 %v273, %v272
    %s276 = scalar_lea.vmem [#allocation7], 576
    %v277 = vld [vmem:[%s276] sm:$0xf]
    %v278 = vld [vmem:[%s276 + $0x8] sm:$0xf]
    %v279 = vld [vmem:[%s276 + $0x10] sm:$0xf]
    %v280 = vld [vmem:[%s276 + $0x18] sm:$0xf]
    %v285 = vunpack.c.l.b16 %v277
    %v286 = vunpack.c.l.b16 %v278
    %v287 = vunpack.c.l.b16 %v279
    %v288 = vunpack.c.l.b16 %v280
    %v289 = vpack.c.b16 %v286, %v285
    %v290 = vpack.c.b16 %v288, %v287
    %v294 = vsel %vm105, %v274, 0
    %v297 = vsel %vm105, %v275, 0
    %299 = vmatpush.bf16.msra.mxu0 0
    %300 = vmatpush.bf16.msra.mxu0 0
    %301 = vmatpush.bf16.msra.mxu0 0
    %302 = vmatpush.bf16.msra.mxu0 0
    %303 = vmatpush.bf16.msra.mxu0 0
    %304 = vmatpush.bf16.msra.mxu0 0
    %305 = vmatpush.bf16.msra.mxu0 %v290
    %306 = vmatpush.bf16.msra.mxu0 %v289
    %307 = vmatmul.bf16.gmra.mxu0 %v294
    %v308 = vpop.f32.mrf.mxu0
    %v309 = vadd.f32 0.0, %v308
    %v310 = vpop.f32.mrf.mxu0
    %v311 = vadd.f32 0.0, %v310
    %312 = vmatmul.bf16.gmra.mxu0 %v297
    %v313 = vpop.f32.mrf.mxu0
    %v314 = vadd.f32 0.0, %v313
    %v315 = vpop.f32.mrf.mxu0
    %v316 = vadd.f32 0.0, %v315
    %317 = vdwg.mxu0
    %v322 = vunpack.c.l.b16 %v207
    %v323 = vunpack.c.l.b16 %v208
    %v324 = vunpack.c.l.b16 %v209
    %v325 = vunpack.c.l.b16 %v210
    %v326 = vpack.c.b16 %v323, %v322
    %v327 = vpack.c.b16 %v325, %v324
    %v331 = vsel %vm105, %v205, 0
    %v334 = vsel %vm105, %v206, 0
    %336 = vmatpush.bf16.msra.mxu0 0
    %337 = vmatpush.bf16.msra.mxu0 0
    %338 = vmatpush.bf16.msra.mxu0 0
    %339 = vmatpush.bf16.msra.mxu0 0
    %340 = vmatpush.bf16.msra.mxu0 0
    %341 = vmatpush.bf16.msra.mxu0 0
    %342 = vmatpush.bf16.msra.mxu0 %v327
    %343 = vmatpush.bf16.msra.mxu0 %v326
    %344 = vmatmul.bf16.gmra.mxu0 %v331
    %v345 = vpop.f32.mrf.mxu0
    %v346 = vadd.f32 %v250, %v345
    %v347 = vpop.f32.mrf.mxu0
    %v348 = vadd.f32 %v252, %v347
    %349 = vmatmul.bf16.gmra.mxu0 %v334
    %v350 = vpop.f32.mrf.mxu0
    %v351 = vadd.f32 %v255, %v350
    %v352 = vpop.f32.mrf.mxu0
    %v353 = vadd.f32 %v257, %v352
    %354 = vdwg.mxu0
    %v359 = vunpack.c.l.b16 %v266
    %v360 = vunpack.c.l.b16 %v267
    %v361 = vunpack.c.l.b16 %v268
    %v362 = vunpack.c.l.b16 %v269
    %v363 = vpack.c.b16 %v360, %v359
    %v364 = vpack.c.b16 %v362, %v361
    %v368 = vsel %vm105, %v263, 0
    %v371 = vsel %vm105, %v264, 0
    %373 = vmatpush.bf16.msra.mxu0 0
    %374 = vmatpush.bf16.msra.mxu0 0
    %375 = vmatpush.bf16.msra.mxu0 0
    %376 = vmatpush.bf16.msra.mxu0 0
    %377 = vmatpush.bf16.msra.mxu0 0
    %378 = vmatpush.bf16.msra.mxu0 0
    %379 = vmatpush.bf16.msra.mxu0 %v364
    %380 = vmatpush.bf16.msra.mxu0 %v363
    %381 = vmatmul.bf16.gmra.mxu0 %v368
    %v382 = vpop.f32.mrf.mxu0
    %v383 = vadd.f32 %v309, %v382
    %v384 = vpop.f32.mrf.mxu0
    %v385 = vadd.f32 %v311, %v384
    %386 = vmatmul.bf16.gmra.mxu0 %v371
    %v387 = vpop.f32.mrf.mxu0
    %v388 = vadd.f32 %v314, %v387
    %v389 = vpop.f32.mrf.mxu0
    %v390 = vadd.f32 %v316, %v389
    %391 = vdwg.mxu0
    %v392 = vadd.f32 %v346, %v383
    %v393 = vadd.f32 %v348, %v385
    %v394 = vadd.f32 %v351, %v388
    %v395 = vadd.f32 %v353, %v390
    %v396 = vld [vmem:[#allocation9] sm:$0x1]
    %v397 = vperm.slane %v396, 0
    %v398 = vadd.f32 %v392, %v397
    %v399 = vadd.f32 %v393, %v397
    %v400 = vadd.f32 %v394, %v397
    %v401 = vadd.f32 %v395, %v397
    %vm402 = vcmp.gt.f32.partialorder %v398, 0.0
    %vm403 = vcmp.gt.f32.partialorder %v399, 0.0
    %vm404 = vcmp.gt.f32.partialorder %v400, 0.0
    %vm405 = vcmp.gt.f32.partialorder %v401, 0.0
    %v406 = vmul.f32 %v398, 0.2
    %v407 = vmul.f32 %v399, 0.2
    %v408 = vmul.f32 %v400, 0.2
    %v409 = vmul.f32 %v401, 0.2
    %v410 = vsel %vm402, %v398, %v406
    %v411 = vsel %vm403, %v399, %v407
    %v412 = vsel %vm404, %v400, %v408
    %v413 = vsel %vm405, %v401, %v409
    %414 = vst [vmem:[#allocation2] sm:$0xff] %v410
    %415 = vst [vmem:[#allocation2 + $0x8] sm:$0xff] %v411
    %416 = vst [vmem:[#allocation2 + $0x10] sm:$0xff] %v412
    %417 = vst [vmem:[#allocation2 + $0x18] sm:$0xff] %v413
    %s418 = scalar_lea.vmem %s1, 32
    %v419 = vld [vmem:[%s418] sm:$0xf]
    %v420 = vld [vmem:[%s418 + $0x4] sm:$0xf]
    %v421 = vld [vmem:[%s418 + $0x8] sm:$0xf]
    %v422 = vld [vmem:[%s418 + $0xc] sm:$0xf]
    %v423 = vld [vmem:[#allocation2] sm:$0xff]
    %v424 = vld [vmem:[#allocation2 + $0x8] sm:$0xff]
    %v425 = vpack.c.bf16 %v424, %v423
    %v430 = vunpack.c.l.b16 %v419
    %v431 = vunpack.c.l.b16 %v420
    %v432 = vunpack.c.l.b16 %v421
    %v433 = vunpack.c.l.b16 %v422
    %v434 = vpack.c.b16 %v431, %v430
    %v435 = vpack.c.b16 %v433, %v432
    %vm436 = vcmask 130048
    %v438 = vsel %vm436, %v434, 0
    %v441 = vsel %vm436, %v435, 0
    %443 = vmatpush.bf16.msra.mxu0 0
    %444 = vmatpush.bf16.msra.mxu0 0
    %445 = vmatpush.bf16.msra.mxu0 0
    %446 = vmatpush.bf16.msra.mxu0 0
    %447 = vmatpush.bf16.msra.mxu0 0
    %448 = vmatpush.bf16.msra.mxu0 0
    %449 = vmatpush.bf16.msra.mxu0 0
    %450 = vmatpush.bf16.msra.mxu0 %v425
    %451 = vmatmul.bf16.gmra.mxu0 %v438
    %v452 = vpop.f32.mrf.mxu0
    %v453 = vadd.f32 0.0, %v452
    %v454 = vpop.f32.mrf.mxu0
    %v455 = vadd.f32 0.0, %v454
    %456 = vmatmul.bf16.gmra.mxu0 %v441
    %v457 = vpop.f32.mrf.mxu0
    %v458 = vadd.f32 0.0, %v457
    %v459 = vpop.f32.mrf.mxu0
    %v460 = vadd.f32 0.0, %v459
    %461 = vdwg.mxu0
    %462 = vst [vmem:[#allocation6] sm:$0xff] %v453
    %463 = vst [vmem:[%s149] sm:$0xff] %v455
    %464 = vst [vmem:[%s152] sm:$0xff] %v458
    %465 = vst [vmem:[%s155] sm:$0xff] %v460
    %v466 = vld [vmem:[#allocation2 + $0x10] sm:$0xff]
    %v467 = vld [vmem:[#allocation2 + $0x18] sm:$0xff]
    %v468 = vpack.c.bf16 %v467, %v466
    %469 = vmatpush.bf16.msra.mxu0 0
    %470 = vmatpush.bf16.msra.mxu0 0
    %471 = vmatpush.bf16.msra.mxu0 0
    %472 = vmatpush.bf16.msra.mxu0 0
    %473 = vmatpush.bf16.msra.mxu0 0
    %474 = vmatpush.bf16.msra.mxu0 0
    %475 = vmatpush.bf16.msra.mxu0 0
    %476 = vmatpush.bf16.msra.mxu0 %v468
    %477 = vmatmul.bf16.gmra.mxu0 %v438
    %v478 = vpop.f32.mrf.mxu0
    %v479 = vadd.f32 0.0, %v478
    %v480 = vpop.f32.mrf.mxu0
    %v481 = vadd.f32 0.0, %v480
    %482 = vmatmul.bf16.gmra.mxu0 %v441
    %v483 = vpop.f32.mrf.mxu0
    %v484 = vadd.f32 0.0, %v483
    %v485 = vpop.f32.mrf.mxu0
    %v486 = vadd.f32 0.0, %v485
    %487 = vdwg.mxu0
    %488 = vst [vmem:[#allocation6 + $0x10] sm:$0xff] %v479
    %489 = vst [vmem:[%s149 + $0x10] sm:$0xff] %v481
    %490 = vst [vmem:[%s152 + $0x10] sm:$0xff] %v484
    %491 = vst [vmem:[%s155 + $0x10] sm:$0xff] %v486
    %v492 = vld [vmem:[#allocation6] sm:$0xff]
    %v493 = vld [vmem:[#allocation6 + $0x10] sm:$0xff]
    %v494 = vpack.c.bf16 %v493, %v492
    %s495 = scalar_lea.vmem [#allocation7], 768
    %v496 = vld [vmem:[%s495] sm:$0xf]
    %v497 = vld [vmem:[%s495 + $0x8] sm:$0xf]
    %v498 = vld [vmem:[%s495 + $0x10] sm:$0xf]
    %v499 = vld [vmem:[%s495 + $0x18] sm:$0xf]
    %v500 = vld [vmem:[%s495 + $0x20] sm:$0xf]
    %v501 = vld [vmem:[%s495 + $0x28] sm:$0xf]
    %v502 = vld [vmem:[%s495 + $0x30] sm:$0xf]
    %v503 = vld [vmem:[%s495 + $0x38] sm:$0xf]
    %v504 = vld [vmem:[%s495 + $0x40] sm:$0xf]
    %v505 = vld [vmem:[%s495 + $0x48] sm:$0xf]
    %v506 = vld [vmem:[%s495 + $0x50] sm:$0xf]
    %v507 = vld [vmem:[%s495 + $0x58] sm:$0xf]
    %v508 = vld [vmem:[%s495 + $0x60] sm:$0xf]
    %v509 = vld [vmem:[%s495 + $0x68] sm:$0xf]
    %v510 = vld [vmem:[%s495 + $0x70] sm:$0xf]
    %v511 = vld [vmem:[%s495 + $0x78] sm:$0xf]
    %v512 = vld [vmem:[%s149] sm:$0xff]
    %v513 = vld [vmem:[%s149 + $0x10] sm:$0xff]
    %v514 = vpack.c.bf16 %v513, %v512
    %s515 = scalar_lea.vmem [#allocation7], 960
    %v516 = vld [vmem:[%s515] sm:$0xf]
    %v517 = vld [vmem:[%s515 + $0x8] sm:$0xf]
    %v518 = vld [vmem:[%s515 + $0x10] sm:$0xf]
    %v519 = vld [vmem:[%s515 + $0x18] sm:$0xf]
    %v520 = vld [vmem:[%s515 + $0x20] sm:$0xf]
    %v521 = vld [vmem:[%s515 + $0x28] sm:$0xf]
    %v522 = vld [vmem:[%s515 + $0x30] sm:$0xf]
    %v523 = vld [vmem:[%s515 + $0x38] sm:$0xf]
    %v524 = vld [vmem:[%s515 + $0x40] sm:$0xf]
    %v525 = vld [vmem:[%s515 + $0x48] sm:$0xf]
    %v526 = vld [vmem:[%s515 + $0x50] sm:$0xf]
    %v527 = vld [vmem:[%s515 + $0x58] sm:$0xf]
    %v528 = vld [vmem:[%s515 + $0x60] sm:$0xf]
    %v529 = vld [vmem:[%s515 + $0x68] sm:$0xf]
    %v530 = vld [vmem:[%s515 + $0x70] sm:$0xf]
    %v531 = vld [vmem:[%s515 + $0x78] sm:$0xf]
    %v548 = vunpack.c.l.b16 %v516
    %v549 = vunpack.c.l.b16 %v517
    %v550 = vunpack.c.l.b16 %v518
    %v551 = vunpack.c.l.b16 %v519
    %v552 = vunpack.c.l.b16 %v520
    %v553 = vunpack.c.l.b16 %v521
    %v554 = vunpack.c.l.b16 %v522
    %v555 = vunpack.c.l.b16 %v523
    %v556 = vunpack.c.l.b16 %v524
    %v557 = vunpack.c.l.b16 %v525
    %v558 = vunpack.c.l.b16 %v526
    %v559 = vunpack.c.l.b16 %v527
    %v560 = vunpack.c.l.b16 %v528
    %v561 = vunpack.c.l.b16 %v529
    %v562 = vunpack.c.l.b16 %v530
    %v563 = vunpack.c.l.b16 %v531
    %v564 = vpack.c.b16 %v549, %v548
    %v565 = vpack.c.b16 %v551, %v550
    %v566 = vpack.c.b16 %v553, %v552
    %v567 = vpack.c.b16 %v555, %v554
    %v568 = vpack.c.b16 %v557, %v556
    %v569 = vpack.c.b16 %v559, %v558
    %v570 = vpack.c.b16 %v561, %v560
    %v571 = vpack.c.b16 %v563, %v562
    %580 = vmatpush.bf16.msra.mxu0 %v571
    %581 = vmatpush.bf16.msra.mxu0 %v570
    %582 = vmatpush.bf16.msra.mxu0 %v569
    %583 = vmatpush.bf16.msra.mxu0 %v568
    %584 = vmatpush.bf16.msra.mxu0 %v567
    %585 = vmatpush.bf16.msra.mxu0 %v566
    %586 = vmatpush.bf16.msra.mxu0 %v565
    %587 = vmatpush.bf16.msra.mxu0 %v564
    %588 = vmatmul.bf16.gmra.mxu0 %v514
    %v589 = vpop.f32.mrf.mxu0
    %v590 = vadd.f32 0.0, %v589
    %v591 = vpop.f32.mrf.mxu0
    %v592 = vadd.f32 0.0, %v591
    %593 = vdwg.mxu0
    %v594 = vld [vmem:[%s152] sm:$0xff]
    %v595 = vld [vmem:[%s152 + $0x10] sm:$0xff]
    %v596 = vpack.c.bf16 %v595, %v594
    %s597 = scalar_lea.vmem [#allocation7], 1152
    %v598 = vld [vmem:[%s597] sm:$0xf]
    %v599 = vld [vmem:[%s597 + $0x8] sm:$0xf]
    %v600 = vld [vmem:[%s597 + $0x10] sm:$0xf]
    %v601 = vld [vmem:[%s597 + $0x18] sm:$0xf]
    %v602 = vld [vmem:[%s597 + $0x20] sm:$0xf]
    %v603 = vld [vmem:[%s597 + $0x28] sm:$0xf]
    %v604 = vld [vmem:[%s597 + $0x30] sm:$0xf]
    %v605 = vld [vmem:[%s597 + $0x38] sm:$0xf]
    %v606 = vld [vmem:[%s597 + $0x40] sm:$0xf]
    %v607 = vld [vmem:[%s597 + $0x48] sm:$0xf]
    %v608 = vld [vmem:[%s597 + $0x50] sm:$0xf]
    %v609 = vld [vmem:[%s597 + $0x58] sm:$0xf]
    %v610 = vld [vmem:[%s597 + $0x60] sm:$0xf]
    %v611 = vld [vmem:[%s597 + $0x68] sm:$0xf]
    %v612 = vld [vmem:[%s597 + $0x70] sm:$0xf]
    %v613 = vld [vmem:[%s597 + $0x78] sm:$0xf]
    %v614 = vld [vmem:[%s155] sm:$0xff]
    %v615 = vld [vmem:[%s155 + $0x10] sm:$0xff]
    %v616 = vpack.c.bf16 %v615, %v614
    %s617 = scalar_lea.vmem [#allocation7], 1344
    %v618 = vld [vmem:[%s617] sm:$0xf]
    %v619 = vld [vmem:[%s617 + $0x8] sm:$0xf]
    %v620 = vld [vmem:[%s617 + $0x10] sm:$0xf]
    %v621 = vld [vmem:[%s617 + $0x18] sm:$0xf]
    %v622 = vld [vmem:[%s617 + $0x20] sm:$0xf]
    %v623 = vld [vmem:[%s617 + $0x28] sm:$0xf]
    %v624 = vld [vmem:[%s617 + $0x30] sm:$0xf]
    %v625 = vld [vmem:[%s617 + $0x38] sm:$0xf]
    %v626 = vld [vmem:[%s617 + $0x40] sm:$0xf]
    %v627 = vld [vmem:[%s617 + $0x48] sm:$0xf]
    %v628 = vld [vmem:[%s617 + $0x50] sm:$0xf]
    %v629 = vld [vmem:[%s617 + $0x58] sm:$0xf]
    %v630 = vld [vmem:[%s617 + $0x60] sm:$0xf]
    %v631 = vld [vmem:[%s617 + $0x68] sm:$0xf]
    %v632 = vld [vmem:[%s617 + $0x70] sm:$0xf]
    %v633 = vld [vmem:[%s617 + $0x78] sm:$0xf]
    %v650 = vunpack.c.l.b16 %v618
    %v651 = vunpack.c.l.b16 %v619
    %v652 = vunpack.c.l.b16 %v620
    %v653 = vunpack.c.l.b16 %v621
    %v654 = vunpack.c.l.b16 %v622
    %v655 = vunpack.c.l.b16 %v623
    %v656 = vunpack.c.l.b16 %v624
    %v657 = vunpack.c.l.b16 %v625
    %v658 = vunpack.c.l.b16 %v626
    %v659 = vunpack.c.l.b16 %v627
    %v660 = vunpack.c.l.b16 %v628
    %v661 = vunpack.c.l.b16 %v629
    %v662 = vunpack.c.l.b16 %v630
    %v663 = vunpack.c.l.b16 %v631
    %v664 = vunpack.c.l.b16 %v632
    %v665 = vunpack.c.l.b16 %v633
    %v666 = vpack.c.b16 %v651, %v650
    %v667 = vpack.c.b16 %v653, %v652
    %v668 = vpack.c.b16 %v655, %v654
    %v669 = vpack.c.b16 %v657, %v656
    %v670 = vpack.c.b16 %v659, %v658
    %v671 = vpack.c.b16 %v661, %v660
    %v672 = vpack.c.b16 %v663, %v662
    %v673 = vpack.c.b16 %v665, %v664
    %682 = vmatpush.bf16.msra.mxu0 %v673
    %683 = vmatpush.bf16.msra.mxu0 %v672
    %684 = vmatpush.bf16.msra.mxu0 %v671
    %685 = vmatpush.bf16.msra.mxu0 %v670
    %686 = vmatpush.bf16.msra.mxu0 %v669
    %687 = vmatpush.bf16.msra.mxu0 %v668
    %688 = vmatpush.bf16.msra.mxu0 %v667
    %689 = vmatpush.bf16.msra.mxu0 %v666
    %690 = vmatmul.bf16.gmra.mxu0 %v616
    %v691 = vpop.f32.mrf.mxu0
    %v692 = vadd.f32 0.0, %v691
    %v693 = vpop.f32.mrf.mxu0
    %v694 = vadd.f32 0.0, %v693
    %695 = vdwg.mxu0
    %v712 = vunpack.c.l.b16 %v496
    %v713 = vunpack.c.l.b16 %v497
    %v714 = vunpack.c.l.b16 %v498
    %v715 = vunpack.c.l.b16 %v499
    %v716 = vunpack.c.l.b16 %v500
    %v717 = vunpack.c.l.b16 %v501
    %v718 = vunpack.c.l.b16 %v502
    %v719 = vunpack.c.l.b16 %v503
    %v720 = vunpack.c.l.b16 %v504
    %v721 = vunpack.c.l.b16 %v505
    %v722 = vunpack.c.l.b16 %v506
    %v723 = vunpack.c.l.b16 %v507
    %v724 = vunpack.c.l.b16 %v508
    %v725 = vunpack.c.l.b16 %v509
    %v726 = vunpack.c.l.b16 %v510
    %v727 = vunpack.c.l.b16 %v511
    %v728 = vpack.c.b16 %v713, %v712
    %v729 = vpack.c.b16 %v715, %v714
    %v730 = vpack.c.b16 %v717, %v716
    %v731 = vpack.c.b16 %v719, %v718
    %v732 = vpack.c.b16 %v721, %v720
    %v733 = vpack.c.b16 %v723, %v722
    %v734 = vpack.c.b16 %v725, %v724
    %v735 = vpack.c.b16 %v727, %v726
    %744 = vmatpush.bf16.msra.mxu0 %v735
    %745 = vmatpush.bf16.msra.mxu0 %v734
    %746 = vmatpush.bf16.msra.mxu0 %v733
    %747 = vmatpush.bf16.msra.mxu0 %v732
    %748 = vmatpush.bf16.msra.mxu0 %v731
    %749 = vmatpush.bf16.msra.mxu0 %v730
    %750 = vmatpush.bf16.msra.mxu0 %v729
    %751 = vmatpush.bf16.msra.mxu0 %v728
    %752 = vmatmul.bf16.gmra.mxu0 %v494
    %v753 = vpop.f32.mrf.mxu0
    %v754 = vadd.f32 %v590, %v753
    %v755 = vpop.f32.mrf.mxu0
    %v756 = vadd.f32 %v592, %v755
    %757 = vdwg.mxu0
    %v774 = vunpack.c.l.b16 %v598
    %v775 = vunpack.c.l.b16 %v599
    %v776 = vunpack.c.l.b16 %v600
    %v777 = vunpack.c.l.b16 %v601
    %v778 = vunpack.c.l.b16 %v602
    %v779 = vunpack.c.l.b16 %v603
    %v780 = vunpack.c.l.b16 %v604
    %v781 = vunpack.c.l.b16 %v605
    %v782 = vunpack.c.l.b16 %v606
    %v783 = vunpack.c.l.b16 %v607
    %v784 = vunpack.c.l.b16 %v608
    %v785 = vunpack.c.l.b16 %v609
    %v786 = vunpack.c.l.b16 %v610
    %v787 = vunpack.c.l.b16 %v611
    %v788 = vunpack.c.l.b16 %v612
    %v789 = vunpack.c.l.b16 %v613
    %v790 = vpack.c.b16 %v775, %v774
    %v791 = vpack.c.b16 %v777, %v776
    %v792 = vpack.c.b16 %v779, %v778
    %v793 = vpack.c.b16 %v781, %v780
    %v794 = vpack.c.b16 %v783, %v782
    %v795 = vpack.c.b16 %v785, %v784
    %v796 = vpack.c.b16 %v787, %v786
    %v797 = vpack.c.b16 %v789, %v788
    %806 = vmatpush.bf16.msra.mxu0 %v797
    %807 = vmatpush.bf16.msra.mxu0 %v796
    %808 = vmatpush.bf16.msra.mxu0 %v795
    %809 = vmatpush.bf16.msra.mxu0 %v794
    %810 = vmatpush.bf16.msra.mxu0 %v793
    %811 = vmatpush.bf16.msra.mxu0 %v792
    %812 = vmatpush.bf16.msra.mxu0 %v791
    %813 = vmatpush.bf16.msra.mxu0 %v790
    %814 = vmatmul.bf16.gmra.mxu0 %v596
    %v815 = vpop.f32.mrf.mxu0
    %v816 = vadd.f32 %v692, %v815
    %v817 = vpop.f32.mrf.mxu0
    %v818 = vadd.f32 %v694, %v817
    %819 = vdwg.mxu0
    %v820 = vadd.f32 %v754, %v816
    %v821 = vadd.f32 %v756, %v818
    %v822 = vld [vmem:[%s4] sm:$0xff]
    %v823 = vld [vmem:[%s4 + $0x8] sm:$0xff]
    %v824 = vld [vmem:[%s4 + $0x10] sm:$0xff]
    %v825 = vld [vmem:[%s4 + $0x18] sm:$0xff]
    %v826 = vld [vmem:[%s4 + $0x20] sm:$0xff]
    %v827 = vld [vmem:[%s4 + $0x28] sm:$0xff]
    %v828 = vld [vmem:[%s4 + $0x30] sm:$0xff]
    %v829 = vld [vmem:[%s4 + $0x38] sm:$0xff]
    %v830 = vld [vmem:[%s4 + $0x40] sm:$0xff]
    %v831 = vld [vmem:[%s4 + $0x48] sm:$0xff]
    %v832 = vld [vmem:[%s4 + $0x50] sm:$0xff]
    %v833 = vld [vmem:[%s4 + $0x58] sm:$0xff]
    %v834 = vld [vmem:[%s4 + $0x60] sm:$0xff]
    %v835 = vld [vmem:[%s4 + $0x68] sm:$0xff]
    %v836 = vld [vmem:[%s4 + $0x70] sm:$0xff]
    %v837 = vld [vmem:[%s4 + $0x78] sm:$0xff]
    %v838 = vld [vmem:[#allocation11] sm:$0xff]
    %v839 = vld [vmem:[#allocation11 + $0x10] sm:$0xff]
    %v840 = vadd.f32 %v820, %v821
    %v841 = vrot.slane %v840, 4
    %v842 = vadd.f32 %v840, %v841
    %v843 = vrot.slane %v842, 2
    %v844 = vadd.f32 %v842, %v843
    %v845 = vrot.slane %v844, 1
    %v846 = vadd.f32 %v844, %v845
    %v847 = vmul.f32 %v820, %v820
    %v848 = vmul.f32 %v821, %v821
    %v849 = vadd.f32 %v847, %v848
    %v850 = vrot.slane %v849, 4
    %v851 = vadd.f32 %v849, %v850
    %v852 = vrot.slane %v851, 2
    %v853 = vadd.f32 %v851, %v852
    %v854 = vrot.slane %v853, 1
    %v855 = vadd.f32 %v853, %v854
    %856 = vmatpush.msra.mxu0 %v837
    %857 = vmatpush.msra.mxu0 %v836
    %858 = vmatpush.msra.mxu0 %v835
    %859 = vmatpush.msra.mxu0 %v834
    %860 = vmatpush.msra.mxu0 %v833
    %861 = vmatpush.msra.mxu0 %v832
    %862 = vmatpush.msra.mxu0 %v831
    %863 = vmatpush.msra.mxu0 %v830
    %864 = vmatpush.msra.mxu0 %v829
    %865 = vmatpush.msra.mxu0 %v828
    %866 = vmatpush.msra.mxu0 %v827
    %867 = vmatpush.msra.mxu0 %v826
    %868 = vmatpush.msra.mxu0 %v825
    %869 = vmatpush.msra.mxu0 %v824
    %870 = vmatpush.msra.mxu0 %v823
    %871 = vmatpush.msra.mxu0 %v822
    %872 = vmatmul.f32.gmra.mxu0 %v846
    %v873 = vpop.f32.mrf.mxu0
    %v874 = vadd.f32 0.0, %v873
    %875 = vdwg.mxu0
    %v877 = vsel %vm436, %v874, 0
    %879 = vmatpush.msra.mxu0 0.0
    %880 = vmatpush.msra.mxu0 0.0
    %881 = vmatpush.msra.mxu0 0.0
    %882 = vmatpush.msra.mxu0 0.0
    %883 = vmatpush.msra.mxu0 0.0
    %884 = vmatpush.msra.mxu0 0.0
    %885 = vmatpush.msra.mxu0 0.0
    %886 = vmatpush.msra.mxu0 0.0
    %887 = vmatpush.msra.mxu0 0.0
    %888 = vmatpush.msra.mxu0 0.0
    %889 = vmatpush.msra.mxu0 0.0
    %890 = vmatpush.msra.mxu0 0.0
    %891 = vmatpush.msra.mxu0 0.0
    %892 = vmatpush.msra.mxu0 0.0
    %893 = vmatpush.msra.mxu0 %v839
    %894 = vmatpush.msra.mxu0 %v838
    %895 = vmatmul.f32.gmra.mxu0 %v877
    %v896 = vpop.f32.mrf.mxu0
    %v897 = vadd.f32 0.0, %v896
    %898 = vdwg.mxu0
    %v899 = vmul.f32 %v897, 0.0078125
    %900 = vmatpush.msra.mxu0 %v837
    %901 = vmatpush.msra.mxu0 %v836
    %902 = vmatpush.msra.mxu0 %v835
    %903 = vmatpush.msra.mxu0 %v834
    %904 = vmatpush.msra.mxu0 %v833
    %905 = vmatpush.msra.mxu0 %v832
    %906 = vmatpush.msra.mxu0 %v831
    %907 = vmatpush.msra.mxu0 %v830
    %908 = vmatpush.msra.mxu0 %v829
    %909 = vmatpush.msra.mxu0 %v828
    %910 = vmatpush.msra.mxu0 %v827
    %911 = vmatpush.msra.mxu0 %v826
    %912 = vmatpush.msra.mxu0 %v825
    %913 = vmatpush.msra.mxu0 %v824
    %914 = vmatpush.msra.mxu0 %v823
    %915 = vmatpush.msra.mxu0 %v822
    %916 = vmatmul.f32.gmra.mxu0 %v855
    %v917 = vpop.f32.mrf.mxu0
    %v918 = vadd.f32 0.0, %v917
    %919 = vdwg.mxu0
    %v921 = vsel %vm436, %v918, 0
    %923 = vmatpush.msra.mxu0 0.0
    %924 = vmatpush.msra.mxu0 0.0
    %925 = vmatpush.msra.mxu0 0.0
    %926 = vmatpush.msra.mxu0 0.0
    %927 = vmatpush.msra.mxu0 0.0
    %928 = vmatpush.msra.mxu0 0.0
    %929 = vmatpush.msra.mxu0 0.0
    %930 = vmatpush.msra.mxu0 0.0
    %931 = vmatpush.msra.mxu0 0.0
    %932 = vmatpush.msra.mxu0 0.0
    %933 = vmatpush.msra.mxu0 0.0
    %934 = vmatpush.msra.mxu0 0.0
    %935 = vmatpush.msra.mxu0 0.0
    %936 = vmatpush.msra.mxu0 0.0
    %937 = vmatpush.msra.mxu0 %v839
    %938 = vmatpush.msra.mxu0 %v838
    %939 = vmatmul.f32.gmra.mxu0 %v921
    %v940 = vpop.f32.mrf.mxu0
    %v941 = vadd.f32 0.0, %v940
    %942 = vdwg.mxu0
    %v943 = vmul.f32 %v941, 0.0078125
    %v944 = vmul.f32 %v899, %v899
    %v945 = vsub.f32 %v943, %v944
    %s946 = scalar_lea.vmem [#allocation9], 4
    %v947 = vld [vmem:[%s946] sm:$0x1]
    %v948 = vld [vmem:[%s946 + $0x1] sm:$0x1]
    %v949 = vadd.f32 %v945, 1e-05
    %v950 = vrsqrt.pop %v949
    %v951 = vmul.f32 %v950, %v949
    %v952 = vmul.f32 %v951, %v950
    %v953 = vmul.f32 0.5, %v952
    %v954 = vsub.f32 1.5, %v953
    %v955 = vmul.f32 %v950, %v954
    %vm956 = vweird.f32 %v949
    %vm957 = vweird.f32 %v950
    %vm958 = vmor %vm956, %vm957
    %v959 = vsel %vm958, %v950, %v955
    %v960 = vmul.f32 %v947, %v959
    %v961 = vmul.f32 %v899, %v960
    %v962 = vsub.f32 %v948, %v961
    %v963 = vperm.slane %v960, 0
    %v964 = vmul.f32 %v820, %v963
    %v965 = vmul.f32 %v821, %v963
    %v966 = vperm.slane %v962, 0
    %v967 = vadd.f32 %v964, %v966
    %v968 = vadd.f32 %v965, %v966
    %vm969 = vcmp.gt.f32.partialorder %v967, 0.0
    %vm970 = vcmp.gt.f32.partialorder %v968, 0.0
    %v971 = vmul.f32 %v967, 0.2
    %v972 = vmul.f32 %v968, 0.2
    %v973 = vsel %vm969, %v967, %v971
    %v974 = vsel %vm970, %v968, %v972
    %975 = vst [vmem:[#allocation3] sm:$0xff] %v973
    %976 = vst [vmem:[#allocation3 + $0x8] sm:$0xff] %v974
    %s977 = scalar_lea.vmem %s1, 64
    %v978 = vld [vmem:[%s977] sm:$0xf]
    %v979 = vld [vmem:[%s977 + $0x4] sm:$0xf]
    %v980 = vld [vmem:[#allocation3] sm:$0xff]
    %v981 = vpack.c.bf16 %v980, %v980
    %v984 = vunpack.c.l.b16 %v978
    %v985 = vunpack.c.l.b16 %v979
    %v986 = vpack.c.b16 %v985, %v984
    %vm987 = vcmask 64512
    %v989 = vsel %vm987, %v986, 0
    %vm991 = vcmask 1043456
    %v993 = vsel %vm991, %v981, 0
    %995 = vmatpush.bf16.msra.mxu0 0
    %996 = vmatpush.bf16.msra.mxu0 0
    %997 = vmatpush.bf16.msra.mxu0 0
    %998 = vmatpush.bf16.msra.mxu0 0
    %999 = vmatpush.bf16.msra.mxu0 0
    %1000 = vmatpush.bf16.msra.mxu0 0
    %1001 = vmatpush.bf16.msra.mxu0 0
    %1002 = vmatpush.bf16.msra.mxu0 %v993
    %1003 = vmatmul.bf16.gmra.mxu0 %v989
    %v1004 = vpop.f32.mrf.mxu0
    %v1005 = vadd.f32 0.0, %v1004
    %v1006 = vpop.f32.mrf.mxu0
    %v1007 = vadd.f32 0.0, %v1006
    %1008 = vdwg.mxu0
    %1009 = vst [vmem:[#allocation6] sm:$0xf] %v1005
    %v1011 = vrot.slane %v1005, 4
    %1013 = vst [vmem:[%s149] sm:$0xf] %v1011
    %1014 = vst [vmem:[%s152] sm:$0xf] %v1007
    %v1016 = vrot.slane %v1007, 4
    %1018 = vst [vmem:[%s155] sm:$0xf] %v1016
    %v1019 = vld [vmem:[#allocation3 + $0x8] sm:$0xff]
    %v1020 = vpack.c.bf16 %v1019, %v1019
    %v1022 = vsel %vm991, %v1020, 0
    %1024 = vmatpush.bf16.msra.mxu0 0
    %1025 = vmatpush.bf16.msra.mxu0 0
    %1026 = vmatpush.bf16.msra.mxu0 0
    %1027 = vmatpush.bf16.msra.mxu0 0
    %1028 = vmatpush.bf16.msra.mxu0 0
    %1029 = vmatpush.bf16.msra.mxu0 0
    %1030 = vmatpush.bf16.msra.mxu0 0
    %1031 = vmatpush.bf16.msra.mxu0 %v1022
    %1032 = vmatmul.bf16.gmra.mxu0 %v989
    %v1033 = vpop.f32.mrf.mxu0
    %v1034 = vadd.f32 0.0, %v1033
    %v1035 = vpop.f32.mrf.mxu0
    %v1036 = vadd.f32 0.0, %v1035
    %1037 = vdwg.mxu0
    %v1039 = vrot.slane %v1034, 4
    %1041 = vst [vmem:[#allocation6] sm:$0xf0] %v1039
    %1042 = vst [vmem:[%s149] sm:$0xf0] %v1034
    %v1044 = vrot.slane %v1036, 4
    %1046 = vst [vmem:[%s152] sm:$0xf0] %v1044
    %1047 = vst [vmem:[%s155] sm:$0xf0] %v1036
    %v1048 = vld [vmem:[#allocation6] sm:$0xff]
    %v1049 = vpack.c.bf16 %v1048, %v1048
    %s1050 = scalar_lea.vmem [#allocation7], 1536
    %v1051 = vld [vmem:[%s1050] sm:$0xf]
    %v1052 = vld [vmem:[%s1050 + $0x8] sm:$0xf]
    %v1053 = vld [vmem:[%s1050 + $0x10] sm:$0xf]
    %v1054 = vld [vmem:[%s1050 + $0x18] sm:$0xf]
    %v1055 = vld [vmem:[%s1050 + $0x20] sm:$0xf]
    %v1056 = vld [vmem:[%s1050 + $0x28] sm:$0xf]
    %v1057 = vld [vmem:[%s1050 + $0x30] sm:$0xf]
    %v1058 = vld [vmem:[%s1050 + $0x38] sm:$0xf]
    %v1059 = vld [vmem:[%s1050 + $0x40] sm:$0xf]
    %v1060 = vld [vmem:[%s1050 + $0x48] sm:$0xf]
    %v1061 = vld [vmem:[%s1050 + $0x50] sm:$0xf]
    %v1062 = vld [vmem:[%s1050 + $0x58] sm:$0xf]
    %v1063 = vld [vmem:[%s1050 + $0x60] sm:$0xf]
    %v1064 = vld [vmem:[%s1050 + $0x68] sm:$0xf]
    %v1065 = vld [vmem:[%s1050 + $0x70] sm:$0xf]
    %v1066 = vld [vmem:[%s1050 + $0x78] sm:$0xf]
    %v1067 = vld [vmem:[%s149] sm:$0xff]
    %v1068 = vpack.c.bf16 %v1067, %v1067
    %s1069 = scalar_lea.vmem [#allocation7], 1728
    %v1070 = vld [vmem:[%s1069] sm:$0xf]
    %v1071 = vld [vmem:[%s1069 + $0x8] sm:$0xf]
    %v1072 = vld [vmem:[%s1069 + $0x10] sm:$0xf]
    %v1073 = vld [vmem:[%s1069 + $0x18] sm:$0xf]
    %v1074 = vld [vmem:[%s1069 + $0x20] sm:$0xf]
    %v1075 = vld [vmem:[%s1069 + $0x28] sm:$0xf]
    %v1076 = vld [vmem:[%s1069 + $0x30] sm:$0xf]
    %v1077 = vld [vmem:[%s1069 + $0x38] sm:$0xf]
    %v1078 = vld [vmem:[%s1069 + $0x40] sm:$0xf]
    %v1079 = vld [vmem:[%s1069 + $0x48] sm:$0xf]
    %v1080 = vld [vmem:[%s1069 + $0x50] sm:$0xf]
    %v1081 = vld [vmem:[%s1069 + $0x58] sm:$0xf]
    %v1082 = vld [vmem:[%s1069 + $0x60] sm:$0xf]
    %v1083 = vld [vmem:[%s1069 + $0x68] sm:$0xf]
    %v1084 = vld [vmem:[%s1069 + $0x70] sm:$0xf]
    %v1085 = vld [vmem:[%s1069 + $0x78] sm:$0xf]
    %v1102 = vunpack.c.l.b16 %v1070
    %v1103 = vunpack.c.l.b16 %v1071
    %v1104 = vunpack.c.l.b16 %v1072
    %v1105 = vunpack.c.l.b16 %v1073
    %v1106 = vunpack.c.l.b16 %v1074
    %v1107 = vunpack.c.l.b16 %v1075
    %v1108 = vunpack.c.l.b16 %v1076
    %v1109 = vunpack.c.l.b16 %v1077
    %v1110 = vunpack.c.l.b16 %v1078
    %v1111 = vunpack.c.l.b16 %v1079
    %v1112 = vunpack.c.l.b16 %v1080
    %v1113 = vunpack.c.l.b16 %v1081
    %v1114 = vunpack.c.l.b16 %v1082
    %v1115 = vunpack.c.l.b16 %v1083
    %v1116 = vunpack.c.l.b16 %v1084
    %v1117 = vunpack.c.l.b16 %v1085
    %v1118 = vpack.c.b16 %v1103, %v1102
    %v1119 = vpack.c.b16 %v1105, %v1104
    %v1120 = vpack.c.b16 %v1107, %v1106
    %v1121 = vpack.c.b16 %v1109, %v1108
    %v1122 = vpack.c.b16 %v1111, %v1110
    %v1123 = vpack.c.b16 %v1113, %v1112
    %v1124 = vpack.c.b16 %v1115, %v1114
    %v1125 = vpack.c.b16 %v1117, %v1116
    %1134 = vmatpush.bf16.msra.mxu0 %v1125
    %1135 = vmatpush.bf16.msra.mxu0 %v1124
    %1136 = vmatpush.bf16.msra.mxu0 %v1123
    %1137 = vmatpush.bf16.msra.mxu0 %v1122
    %1138 = vmatpush.bf16.msra.mxu0 %v1121
    %1139 = vmatpush.bf16.msra.mxu0 %v1120
    %1140 = vmatpush.bf16.msra.mxu0 %v1119
    %1141 = vmatpush.bf16.msra.mxu0 %v1118
    %1142 = vmatmul.bf16.gmra.mxu0 %v1068
    %v1143 = vpop.f32.mrf.mxu0
    %v1144 = vadd.f32 0.0, %v1143
    %v1145 = vpop.f32.mrf.mxu0
    %1146 = vdwg.mxu0
    %v1147 = vld [vmem:[%s152] sm:$0xff]
    %v1148 = vpack.c.bf16 %v1147, %v1147
    %s1149 = scalar_lea.vmem [#allocation7], 1920
    %v1150 = vld [vmem:[%s1149] sm:$0xf]
    %v1151 = vld [vmem:[%s1149 + $0x8] sm:$0xf]
    %v1152 = vld [vmem:[%s1149 + $0x10] sm:$0xf]
    %v1153 = vld [vmem:[%s1149 + $0x18] sm:$0xf]
    %v1154 = vld [vmem:[%s1149 + $0x20] sm:$0xf]
    %v1155 = vld [vmem:[%s1149 + $0x28] sm:$0xf]
    %v1156 = vld [vmem:[%s1149 + $0x30] sm:$0xf]
    %v1157 = vld [vmem:[%s1149 + $0x38] sm:$0xf]
    %v1158 = vld [vmem:[%s1149 + $0x40] sm:$0xf]
    %v1159 = vld [vmem:[%s1149 + $0x48] sm:$0xf]
    %v1160 = vld [vmem:[%s1149 + $0x50] sm:$0xf]
    %v1161 = vld [vmem:[%s1149 + $0x58] sm:$0xf]
    %v1162 = vld [vmem:[%s1149 + $0x60] sm:$0xf]
    %v1163 = vld [vmem:[%s1149 + $0x68] sm:$0xf]
    %v1164 = vld [vmem:[%s1149 + $0x70] sm:$0xf]
    %v1165 = vld [vmem:[%s1149 + $0x78] sm:$0xf]
    %v1166 = vld [vmem:[%s155] sm:$0xff]
    %v1167 = vpack.c.bf16 %v1166, %v1166
    %s1168 = scalar_lea.vmem [#allocation7], 2112
    %v1169 = vld [vmem:[%s1168] sm:$0xf]
    %v1170 = vld [vmem:[%s1168 + $0x8] sm:$0xf]
    %v1171 = vld [vmem:[%s1168 + $0x10] sm:$0xf]
    %v1172 = vld [vmem:[%s1168 + $0x18] sm:$0xf]
    %v1173 = vld [vmem:[%s1168 + $0x20] sm:$0xf]
    %v1174 = vld [vmem:[%s1168 + $0x28] sm:$0xf]
    %v1175 = vld [vmem:[%s1168 + $0x30] sm:$0xf]
    %v1176 = vld [vmem:[%s1168 + $0x38] sm:$0xf]
    %v1177 = vld [vmem:[%s1168 + $0x40] sm:$0xf]
    %v1178 = vld [vmem:[%s1168 + $0x48] sm:$0xf]
    %v1179 = vld [vmem:[%s1168 + $0x50] sm:$0xf]
    %v1180 = vld [vmem:[%s1168 + $0x58] sm:$0xf]
    %v1181 = vld [vmem:[%s1168 + $0x60] sm:$0xf]
    %v1182 = vld [vmem:[%s1168 + $0x68] sm:$0xf]
    %v1183 = vld [vmem:[%s1168 + $0x70] sm:$0xf]
    %v1184 = vld [vmem:[%s1168 + $0x78] sm:$0xf]
    %v1201 = vunpack.c.l.b16 %v1169
    %v1202 = vunpack.c.l.b16 %v1170
    %v1203 = vunpack.c.l.b16 %v1171
    %v1204 = vunpack.c.l.b16 %v1172
    %v1205 = vunpack.c.l.b16 %v1173
    %v1206 = vunpack.c.l.b16 %v1174
    %v1207 = vunpack.c.l.b16 %v1175
    %v1208 = vunpack.c.l.b16 %v1176
    %v1209 = vunpack.c.l.b16 %v1177
    %v1210 = vunpack.c.l.b16 %v1178
    %v1211 = vunpack.c.l.b16 %v1179
    %v1212 = vunpack.c.l.b16 %v1180
    %v1213 = vunpack.c.l.b16 %v1181
    %v1214 = vunpack.c.l.b16 %v1182
    %v1215 = vunpack.c.l.b16 %v1183
    %v1216 = vunpack.c.l.b16 %v1184
    %v1217 = vpack.c.b16 %v1202, %v1201
    %v1218 = vpack.c.b16 %v1204, %v1203
    %v1219 = vpack.c.b16 %v1206, %v1205
    %v1220 = vpack.c.b16 %v1208, %v1207
    %v1221 = vpack.c.b16 %v1210, %v1209
    %v1222 = vpack.c.b16 %v1212, %v1211
    %v1223 = vpack.c.b16 %v1214, %v1213
    %v1224 = vpack.c.b16 %v1216, %v1215
    %1233 = vmatpush.bf16.msra.mxu0 %v1224
    %1234 = vmatpush.bf16.msra.mxu0 %v1223
    %1235 = vmatpush.bf16.msra.mxu0 %v1222
    %1236 = vmatpush.bf16.msra.mxu0 %v1221
    %1237 = vmatpush.bf16.msra.mxu0 %v1220
    %1238 = vmatpush.bf16.msra.mxu0 %v1219
    %1239 = vmatpush.bf16.msra.mxu0 %v1218
    %1240 = vmatpush.bf16.msra.mxu0 %v1217
    %1241 = vmatmul.bf16.gmra.mxu0 %v1167
    %v1242 = vpop.f32.mrf.mxu0
    %v1243 = vadd.f32 0.0, %v1242
    %v1244 = vpop.f32.mrf.mxu0
    %1245 = vdwg.mxu0
    %v1262 = vunpack.c.l.b16 %v1051
    %v1263 = vunpack.c.l.b16 %v1052
    %v1264 = vunpack.c.l.b16 %v1053
    %v1265 = vunpack.c.l.b16 %v1054
    %v1266 = vunpack.c.l.b16 %v1055
    %v1267 = vunpack.c.l.b16 %v1056
    %v1268 = vunpack.c.l.b16 %v1057
    %v1269 = vunpack.c.l.b16 %v1058
    %v1270 = vunpack.c.l.b16 %v1059
    %v1271 = vunpack.c.l.b16 %v1060
    %v1272 = vunpack.c.l.b16 %v1061
    %v1273 = vunpack.c.l.b16 %v1062
    %v1274 = vunpack.c.l.b16 %v1063
    %v1275 = vunpack.c.l.b16 %v1064
    %v1276 = vunpack.c.l.b16 %v1065
    %v1277 = vunpack.c.l.b16 %v1066
    %v1278 = vpack.c.b16 %v1263, %v1262
    %v1279 = vpack.c.b16 %v1265, %v1264
    %v1280 = vpack.c.b16 %v1267, %v1266
    %v1281 = vpack.c.b16 %v1269, %v1268
    %v1282 = vpack.c.b16 %v1271, %v1270
    %v1283 = vpack.c.b16 %v1273, %v1272
    %v1284 = vpack.c.b16 %v1275, %v1274
    %v1285 = vpack.c.b16 %v1277, %v1276
    %1294 = vmatpush.bf16.msra.mxu0 %v1285
    %1295 = vmatpush.bf16.msra.mxu0 %v1284
    %1296 = vmatpush.bf16.msra.mxu0 %v1283
    %1297 = vmatpush.bf16.msra.mxu0 %v1282
    %1298 = vmatpush.bf16.msra.mxu0 %v1281
    %1299 = vmatpush.bf16.msra.mxu0 %v1280
    %1300 = vmatpush.bf16.msra.mxu0 %v1279
    %1301 = vmatpush.bf16.msra.mxu0 %v1278
    %1302 = vmatmul.bf16.gmra.mxu0 %v1049
    %v1303 = vpop.f32.mrf.mxu0
    %v1304 = vadd.f32 %v1144, %v1303
    %v1305 = vpop.f32.mrf.mxu0
    %1306 = vdwg.mxu0
    %v1323 = vunpack.c.l.b16 %v1150
    %v1324 = vunpack.c.l.b16 %v1151
    %v1325 = vunpack.c.l.b16 %v1152
    %v1326 = vunpack.c.l.b16 %v1153
    %v1327 = vunpack.c.l.b16 %v1154
    %v1328 = vunpack.c.l.b16 %v1155
    %v1329 = vunpack.c.l.b16 %v1156
    %v1330 = vunpack.c.l.b16 %v1157
    %v1331 = vunpack.c.l.b16 %v1158
    %v1332 = vunpack.c.l.b16 %v1159
    %v1333 = vunpack.c.l.b16 %v1160
    %v1334 = vunpack.c.l.b16 %v1161
    %v1335 = vunpack.c.l.b16 %v1162
    %v1336 = vunpack.c.l.b16 %v1163
    %v1337 = vunpack.c.l.b16 %v1164
    %v1338 = vunpack.c.l.b16 %v1165
    %v1339 = vpack.c.b16 %v1324, %v1323
    %v1340 = vpack.c.b16 %v1326, %v1325
    %v1341 = vpack.c.b16 %v1328, %v1327
    %v1342 = vpack.c.b16 %v1330, %v1329
    %v1343 = vpack.c.b16 %v1332, %v1331
    %v1344 = vpack.c.b16 %v1334, %v1333
    %v1345 = vpack.c.b16 %v1336, %v1335
    %v1346 = vpack.c.b16 %v1338, %v1337
    %1355 = vmatpush.bf16.msra.mxu0 %v1346
    %1356 = vmatpush.bf16.msra.mxu0 %v1345
    %1357 = vmatpush.bf16.msra.mxu0 %v1344
    %1358 = vmatpush.bf16.msra.mxu0 %v1343
    %1359 = vmatpush.bf16.msra.mxu0 %v1342
    %1360 = vmatpush.bf16.msra.mxu0 %v1341
    %1361 = vmatpush.bf16.msra.mxu0 %v1340
    %1362 = vmatpush.bf16.msra.mxu0 %v1339
    %1363 = vmatmul.bf16.gmra.mxu0 %v1148
    %v1364 = vpop.f32.mrf.mxu0
    %v1365 = vadd.f32 %v1243, %v1364
    %v1366 = vpop.f32.mrf.mxu0
    %1367 = vdwg.mxu0
    %v1368 = vadd.f32 %v1304, %v1365
    %s1369 = scalar_lea.vmem %s4, 192
    %v1370 = vld [vmem:[%s1369] sm:$0xff]
    %v1371 = vld [vmem:[%s1369 + $0x8] sm:$0xff]
    %v1372 = vld [vmem:[%s1369 + $0x10] sm:$0xff]
    %v1373 = vld [vmem:[%s1369 + $0x18] sm:$0xff]
    %v1374 = vld [vmem:[%s1369 + $0x20] sm:$0xff]
    %v1375 = vld [vmem:[%s1369 + $0x28] sm:$0xff]
    %v1376 = vld [vmem:[%s1369 + $0x30] sm:$0xff]
    %v1377 = vld [vmem:[%s1369 + $0x38] sm:$0xff]
    %v1378 = vld [vmem:[%s1369 + $0x40] sm:$0xff]
    %v1379 = vld [vmem:[%s1369 + $0x48] sm:$0xff]
    %v1380 = vld [vmem:[%s1369 + $0x50] sm:$0xff]
    %v1381 = vld [vmem:[%s1369 + $0x58] sm:$0xff]
    %v1382 = vld [vmem:[%s1369 + $0x60] sm:$0xff]
    %v1383 = vld [vmem:[%s1369 + $0x68] sm:$0xff]
    %v1384 = vld [vmem:[%s1369 + $0x70] sm:$0xff]
    %v1385 = vld [vmem:[%s1369 + $0x78] sm:$0xff]
    %s1386 = scalar_lea.vmem [#allocation11], 128
    %v1387 = vld [vmem:[%s1386] sm:$0xff]
    %v1388 = vld [vmem:[%s1386 + $0x10] sm:$0xff]
    %v1389 = vld [vmem:[%s1386 + $0x20] sm:$0xff]
    %v1390 = vld [vmem:[%s1386 + $0x30] sm:$0xff]
    %v1391 = vrot.slane %v1368, 4
    %v1392 = vadd.f32 %v1368, %v1391
    %v1393 = vrot.slane %v1392, 2
    %v1394 = vadd.f32 %v1392, %v1393
    %v1395 = vrot.slane %v1394, 1
    %v1396 = vadd.f32 %v1394, %v1395
    %v1397 = vmul.f32 %v1368, %v1368
    %v1398 = vrot.slane %v1397, 4
    %v1399 = vadd.f32 %v1397, %v1398
    %v1400 = vrot.slane %v1399, 2
    %v1401 = vadd.f32 %v1399, %v1400
    %v1402 = vrot.slane %v1401, 1
    %v1403 = vadd.f32 %v1401, %v1402
    %1404 = vmatpush.msra.mxu0 %v1385
    %1405 = vmatpush.msra.mxu0 %v1384
    %1406 = vmatpush.msra.mxu0 %v1383
    %1407 = vmatpush.msra.mxu0 %v1382
    %1408 = vmatpush.msra.mxu0 %v1381
    %1409 = vmatpush.msra.mxu0 %v1380
    %1410 = vmatpush.msra.mxu0 %v1379
    %1411 = vmatpush.msra.mxu0 %v1378
    %1412 = vmatpush.msra.mxu0 %v1377
    %1413 = vmatpush.msra.mxu0 %v1376
    %1414 = vmatpush.msra.mxu0 %v1375
    %1415 = vmatpush.msra.mxu0 %v1374
    %1416 = vmatpush.msra.mxu0 %v1373
    %1417 = vmatpush.msra.mxu0 %v1372
    %1418 = vmatpush.msra.mxu0 %v1371
    %1419 = vmatpush.msra.mxu0 %v1370
    %1420 = vmatmul.f32.gmra.mxu0 %v1396
    %v1421 = vpop.f32.mrf.mxu0
    %v1422 = vadd.f32 0.0, %v1421
    %1423 = vdwg.mxu0
    %v1425 = vsel %vm105, %v1422, 0
    %1427 = vmatpush.msra.mxu0 0.0
    %1428 = vmatpush.msra.mxu0 0.0
    %1429 = vmatpush.msra.mxu0 0.0
    %1430 = vmatpush.msra.mxu0 0.0
    %1431 = vmatpush.msra.mxu0 0.0
    %1432 = vmatpush.msra.mxu0 0.0
    %1433 = vmatpush.msra.mxu0 0.0
    %1434 = vmatpush.msra.mxu0 0.0
    %1435 = vmatpush.msra.mxu0 0.0
    %1436 = vmatpush.msra.mxu0 0.0
    %1437 = vmatpush.msra.mxu0 0.0
    %1438 = vmatpush.msra.mxu0 0.0
    %1439 = vmatpush.msra.mxu0 %v1390
    %1440 = vmatpush.msra.mxu0 %v1389
    %1441 = vmatpush.msra.mxu0 %v1388
    %1442 = vmatpush.msra.mxu0 %v1387
    %1443 = vmatmul.f32.gmra.mxu0 %v1425
    %v1444 = vpop.f32.mrf.mxu0
    %v1445 = vadd.f32 0.0, %v1444
    %1446 = vdwg.mxu0
    %v1447 = vmul.f32 %v1445, 0.03125
    %1448 = vmatpush.msra.mxu0 %v1385
    %1449 = vmatpush.msra.mxu0 %v1384
    %1450 = vmatpush.msra.mxu0 %v1383
    %1451 = vmatpush.msra.mxu0 %v1382
    %1452 = vmatpush.msra.mxu0 %v1381
    %1453 = vmatpush.msra.mxu0 %v1380
    %1454 = vmatpush.msra.mxu0 %v1379
    %1455 = vmatpush.msra.mxu0 %v1378
    %1456 = vmatpush.msra.mxu0 %v1377
    %1457 = vmatpush.msra.mxu0 %v1376
    %1458 = vmatpush.msra.mxu0 %v1375
    %1459 = vmatpush.msra.mxu0 %v1374
    %1460 = vmatpush.msra.mxu0 %v1373
    %1461 = vmatpush.msra.mxu0 %v1372
    %1462 = vmatpush.msra.mxu0 %v1371
    %1463 = vmatpush.msra.mxu0 %v1370
    %1464 = vmatmul.f32.gmra.mxu0 %v1403
    %v1465 = vpop.f32.mrf.mxu0
    %v1466 = vadd.f32 0.0, %v1465
    %1467 = vdwg.mxu0
    %v1469 = vsel %vm105, %v1466, 0
    %1471 = vmatpush.msra.mxu0 0.0
    %1472 = vmatpush.msra.mxu0 0.0
    %1473 = vmatpush.msra.mxu0 0.0
    %1474 = vmatpush.msra.mxu0 0.0
    %1475 = vmatpush.msra.mxu0 0.0
    %1476 = vmatpush.msra.mxu0 0.0
    %1477 = vmatpush.msra.mxu0 0.0
    %1478 = vmatpush.msra.mxu0 0.0
    %1479 = vmatpush.msra.mxu0 0.0
    %1480 = vmatpush.msra.mxu0 0.0
    %1481 = vmatpush.msra.mxu0 0.0
    %1482 = vmatpush.msra.mxu0 0.0
    %1483 = vmatpush.msra.mxu0 %v1390
    %1484 = vmatpush.msra.mxu0 %v1389
    %1485 = vmatpush.msra.mxu0 %v1388
    %1486 = vmatpush.msra.mxu0 %v1387
    %1487 = vmatmul.f32.gmra.mxu0 %v1469
    %v1488 = vpop.f32.mrf.mxu0
    %v1489 = vadd.f32 0.0, %v1488
    %1490 = vdwg.mxu0
    %v1491 = vmul.f32 %v1489, 0.03125
    %v1492 = vmul.f32 %v1447, %v1447
    %v1493 = vsub.f32 %v1491, %v1492
    %s1494 = scalar_lea.vmem [#allocation9], 8
    %v1495 = vld [vmem:[%s1494] sm:$0x1]
    %v1496 = vld [vmem:[%s1494 + $0x1] sm:$0x1]
    %v1497 = vadd.f32 %v1493, 1e-05
    %v1498 = vrsqrt.pop %v1497
    %v1499 = vmul.f32 %v1498, %v1497
    %v1500 = vmul.f32 %v1499, %v1498
    %v1501 = vmul.f32 0.5, %v1500
    %v1502 = vsub.f32 1.5, %v1501
    %v1503 = vmul.f32 %v1498, %v1502
    %vm1504 = vweird.f32 %v1497
    %vm1505 = vweird.f32 %v1498
    %vm1506 = vmor %vm1504, %vm1505
    %v1507 = vsel %vm1506, %v1498, %v1503
    %v1508 = vmul.f32 %v1495, %v1507
    %v1509 = vmul.f32 %v1447, %v1508
    %v1510 = vsub.f32 %v1496, %v1509
    %v1511 = vperm.slane %v1508, 0
    %v1512 = vmul.f32 %v1368, %v1511
    %v1513 = vperm.slane %v1510, 0
    %v1514 = vadd.f32 %v1512, %v1513
    %vm1515 = vcmp.gt.f32.partialorder %v1514, 0.0
    %v1516 = vmul.f32 %v1514, 0.2
    %v1517 = vsel %vm1515, %v1514, %v1516
    %1518 = vst [vmem:[#allocation4] sm:$0xff] %v1517
    %s1519 = scalar_lea.vmem %s1, 96
    %v1520 = vld [vmem:[%s1519] sm:$0xf]
    %v1521 = vld [vmem:[%s1519 + $0x4] sm:$0x3]
    %v1522 = vld [vmem:[#allocation4] sm:$0xf]
    %v1523 = vpack.c.bf16 %v1522, %v1522
    %v1526 = vunpack.c.l.b16 %v1520
    %v1527 = vunpack.c.l.b16 %v1521
    %v1528 = vpack.c.b16 %v1527, %v1526
    %vm1529 = vcmask 31744
    %v1531 = vsel %vm1529, %v1528, 0
    %vm1533 = vcmask 1041408
    %v1535 = vsel %vm1533, %v1523, 0
    %1537 = vmatpush.bf16.msra.mxu0 0
    %1538 = vmatpush.bf16.msra.mxu0 0
    %1539 = vmatpush.bf16.msra.mxu0 0
    %1540 = vmatpush.bf16.msra.mxu0 0
    %1541 = vmatpush.bf16.msra.mxu0 0
    %1542 = vmatpush.bf16.msra.mxu0 0
    %1543 = vmatpush.bf16.msra.mxu0 0
    %1544 = vmatpush.bf16.msra.mxu0 %v1535
    %1545 = vmatmul.bf16.gmra.mxu0 %v1531
    %v1546 = vpop.f32.mrf.mxu0
    %v1547 = vadd.f32 0.0, %v1546
    %v1548 = vpop.f32.mrf.mxu0
    %v1549 = vadd.f32 0.0, %v1548
    %1550 = vdwg.mxu0
    %1551 = vst [vmem:[#allocation6] sm:$0x7] %v1547
    %v1553 = vrot.slane %v1547, 3
    %1555 = vst [vmem:[%s149] sm:$0x7] %v1553
    %v1557 = vrot.slane %v1547, 6
    %v1558 = vrot.slane %v1549, 6
    %v1559 = vsel %vm1533, %v1557, %v1558
    %1561 = vst [vmem:[%s152] sm:$0x7] %v1559
    %v1562 = vrot.slane %v1549, 1
    %1564 = vst [vmem:[%s155] sm:$0x7] %v1562
    %v1565 = vld [vmem:[#allocation4 + $0x4] sm:$0xf]
    %v1566 = vpack.c.bf16 %v1565, %v1565
    %v1568 = vsel %vm1533, %v1566, 0
    %1570 = vmatpush.bf16.msra.mxu0 0
    %1571 = vmatpush.bf16.msra.mxu0 0
    %1572 = vmatpush.bf16.msra.mxu0 0
    %1573 = vmatpush.bf16.msra.mxu0 0
    %1574 = vmatpush.bf16.msra.mxu0 0
    %1575 = vmatpush.bf16.msra.mxu0 0
    %1576 = vmatpush.bf16.msra.mxu0 0
    %1577 = vmatpush.bf16.msra.mxu0 %v1568
    %1578 = vmatmul.bf16.gmra.mxu0 %v1531
    %v1579 = vpop.f32.mrf.mxu0
    %v1580 = vadd.f32 0.0, %v1579
    %v1581 = vpop.f32.mrf.mxu0
    %v1582 = vadd.f32 0.0, %v1581
    %1583 = vdwg.mxu0
    %v1585 = vrot.slane %v1580, 5
    %1587 = vst [vmem:[#allocation6] sm:$0x38] %v1585
    %1588 = vst [vmem:[%s149] sm:$0x38] %v1580
    %vm1590 = vcmask 1044480
    %v1591 = vrot.slane %v1580, 3
    %v1592 = vrot.slane %v1582, 3
    %v1593 = vsel %vm1590, %v1591, %v1592
    %1595 = vst [vmem:[%s152] sm:$0x38] %v1593
    %v1596 = vrot.slane %v1582, 6
    %1598 = vst [vmem:[%s155] sm:$0x38] %v1596
    %v1599 = vld [vmem:[#allocation6] sm:$0x3f]
    %v1600 = vpack.c.bf16 %v1599, %v1599
    %s1601 = scalar_lea.vmem [#allocation7], 2304
    %v1602 = vld [vmem:[%s1601] sm:$0xff]
    %v1603 = vld [vmem:[%s1601 + $0x8] sm:$0xff]
    %v1604 = vld [vmem:[%s1601 + $0x10] sm:$0xff]
    %v1605 = vld [vmem:[%s1601 + $0x18] sm:$0xff]
    %v1606 = vld [vmem:[%s1601 + $0x20] sm:$0xff]
    %v1607 = vld [vmem:[%s1601 + $0x28] sm:$0xff]
    %v1608 = vld [vmem:[%s1601 + $0x30] sm:$0xff]
    %v1609 = vld [vmem:[%s1601 + $0x38] sm:$0xff]
    %v1610 = vld [vmem:[%s1601 + $0x40] sm:$0xff]
    %v1611 = vld [vmem:[%s1601 + $0x48] sm:$0xff]
    %v1612 = vld [vmem:[%s1601 + $0x50] sm:$0xff]
    %v1613 = vld [vmem:[%s1601 + $0x58] sm:$0xff]
    %v1614 = vld [vmem:[%s1601 + $0x60] sm:$0xff]
    %v1615 = vld [vmem:[%s1601 + $0x68] sm:$0xff]
    %v1616 = vld [vmem:[%s1601 + $0x70] sm:$0xff]
    %v1617 = vld [vmem:[%s1601 + $0x78] sm:$0xff]
    %v1618 = vld [vmem:[%s149] sm:$0x3f]
    %v1619 = vpack.c.bf16 %v1618, %v1618
    %s1620 = scalar_lea.vmem [#allocation7], 2496
    %v1621 = vld [vmem:[%s1620] sm:$0xff]
    %v1622 = vld [vmem:[%s1620 + $0x8] sm:$0xff]
    %v1623 = vld [vmem:[%s1620 + $0x10] sm:$0xff]
    %v1624 = vld [vmem:[%s1620 + $0x18] sm:$0xff]
    %v1625 = vld [vmem:[%s1620 + $0x20] sm:$0xff]
    %v1626 = vld [vmem:[%s1620 + $0x28] sm:$0xff]
    %v1627 = vld [vmem:[%s1620 + $0x30] sm:$0xff]
    %v1628 = vld [vmem:[%s1620 + $0x38] sm:$0xff]
    %v1629 = vld [vmem:[%s1620 + $0x40] sm:$0xff]
    %v1630 = vld [vmem:[%s1620 + $0x48] sm:$0xff]
    %v1631 = vld [vmem:[%s1620 + $0x50] sm:$0xff]
    %v1632 = vld [vmem:[%s1620 + $0x58] sm:$0xff]
    %v1633 = vld [vmem:[%s1620 + $0x60] sm:$0xff]
    %v1634 = vld [vmem:[%s1620 + $0x68] sm:$0xff]
    %v1635 = vld [vmem:[%s1620 + $0x70] sm:$0xff]
    %v1636 = vld [vmem:[%s1620 + $0x78] sm:$0xff]
    %v1653 = vunpack.c.l.b16 %v1621
    %v1654 = vunpack.c.h.b16 %v1621
    %v1655 = vunpack.c.l.b16 %v1622
    %v1656 = vunpack.c.h.b16 %v1622
    %v1657 = vunpack.c.l.b16 %v1623
    %v1658 = vunpack.c.h.b16 %v1623
    %v1659 = vunpack.c.l.b16 %v1624
    %v1660 = vunpack.c.h.b16 %v1624
    %v1661 = vunpack.c.l.b16 %v1625
    %v1662 = vunpack.c.h.b16 %v1625
    %v1663 = vunpack.c.l.b16 %v1626
    %v1664 = vunpack.c.h.b16 %v1626
    %v1665 = vunpack.c.l.b16 %v1627
    %v1666 = vunpack.c.h.b16 %v1627
    %v1667 = vunpack.c.l.b16 %v1628
    %v1668 = vunpack.c.h.b16 %v1628
    %v1669 = vunpack.c.l.b16 %v1629
    %v1670 = vunpack.c.h.b16 %v1629
    %v1671 = vunpack.c.l.b16 %v1630
    %v1672 = vunpack.c.h.b16 %v1630
    %v1673 = vunpack.c.l.b16 %v1631
    %v1674 = vunpack.c.h.b16 %v1631
    %v1675 = vunpack.c.l.b16 %v1632
    %v1676 = vunpack.c.h.b16 %v1632
    %v1677 = vunpack.c.l.b16 %v1633
    %v1678 = vunpack.c.h.b16 %v1633
    %v1679 = vunpack.c.l.b16 %v1634
    %v1680 = vunpack.c.h.b16 %v1634
    %v1681 = vunpack.c.l.b16 %v1635
    %v1682 = vunpack.c.h.b16 %v1635
    %v1683 = vunpack.c.l.b16 %v1636
    %v1684 = vunpack.c.h.b16 %v1636
    %v1685 = vpack.c.b16 %v1655, %v1653
    %v1686 = vpack.c.b16 %v1656, %v1654
    %v1687 = vpack.c.b16 %v1659, %v1657
    %v1688 = vpack.c.b16 %v1660, %v1658
    %v1689 = vpack.c.b16 %v1663, %v1661
    %v1690 = vpack.c.b16 %v1664, %v1662
    %v1691 = vpack.c.b16 %v1667, %v1665
    %v1692 = vpack.c.b16 %v1668, %v1666
    %v1693 = vpack.c.b16 %v1671, %v1669
    %v1694 = vpack.c.b16 %v1672, %v1670
    %v1695 = vpack.c.b16 %v1675, %v1673
    %v1696 = vpack.c.b16 %v1676, %v1674
    %v1697 = vpack.c.b16 %v1679, %v1677
    %v1698 = vpack.c.b16 %v1680, %v1678
    %v1699 = vpack.c.b16 %v1683, %v1681
    %v1700 = vpack.c.b16 %v1684, %v1682
    %1717 = vmatpush.bf16.msra.mxu0 %v1699
    %1718 = vmatpush.bf16.msra.mxu0 %v1697
    %1719 = vmatpush.bf16.msra.mxu0 %v1695
    %1720 = vmatpush.bf16.msra.mxu0 %v1693
    %1721 = vmatpush.bf16.msra.mxu0 %v1691
    %1722 = vmatpush.bf16.msra.mxu0 %v1689
    %1723 = vmatpush.bf16.msra.mxu0 %v1687
    %1724 = vmatpush.bf16.msra.mxu0 %v1685
    %1725 = vmatmul.bf16.gmra.mxu0 %v1619
    %v1726 = vpop.f32.mrf.mxu0
    %v1727 = vadd.f32 0.0, %v1726
    %v1728 = vpop.f32.mrf.mxu0
    %1729 = vdwg.mxu0
    %1730 = vmatpush.bf16.msra.mxu0 %v1700
    %1731 = vmatpush.bf16.msra.mxu0 %v1698
    %1732 = vmatpush.bf16.msra.mxu0 %v1696
    %1733 = vmatpush.bf16.msra.mxu0 %v1694
    %1734 = vmatpush.bf16.msra.mxu0 %v1692
    %1735 = vmatpush.bf16.msra.mxu0 %v1690
    %1736 = vmatpush.bf16.msra.mxu0 %v1688
    %1737 = vmatpush.bf16.msra.mxu0 %v1686
    %1738 = vmatmul.bf16.gmra.mxu0 %v1619
    %v1739 = vpop.f32.mrf.mxu0
    %v1740 = vadd.f32 0.0, %v1739
    %v1741 = vpop.f32.mrf.mxu0
    %1742 = vdwg.mxu0
    %v1743 = vld [vmem:[%s152] sm:$0x3f]
    %v1744 = vpack.c.bf16 %v1743, %v1743
    %s1745 = scalar_lea.vmem [#allocation7], 2688
    %v1746 = vld [vmem:[%s1745] sm:$0xff]
    %v1747 = vld [vmem:[%s1745 + $0x8] sm:$0xff]
    %v1748 = vld [vmem:[%s1745 + $0x10] sm:$0xff]
    %v1749 = vld [vmem:[%s1745 + $0x18] sm:$0xff]
    %v1750 = vld [vmem:[%s1745 + $0x20] sm:$0xff]
    %v1751 = vld [vmem:[%s1745 + $0x28] sm:$0xff]
    %v1752 = vld [vmem:[%s1745 + $0x30] sm:$0xff]
    %v1753 = vld [vmem:[%s1745 + $0x38] sm:$0xff]
    %v1754 = vld [vmem:[%s1745 + $0x40] sm:$0xff]
    %v1755 = vld [vmem:[%s1745 + $0x48] sm:$0xff]
    %v1756 = vld [vmem:[%s1745 + $0x50] sm:$0xff]
    %v1757 = vld [vmem:[%s1745 + $0x58] sm:$0xff]
    %v1758 = vld [vmem:[%s1745 + $0x60] sm:$0xff]
    %v1759 = vld [vmem:[%s1745 + $0x68] sm:$0xff]
    %v1760 = vld [vmem:[%s1745 + $0x70] sm:$0xff]
    %v1761 = vld [vmem:[%s1745 + $0x78] sm:$0xff]
    %v1762 = vld [vmem:[%s155] sm:$0x3f]
    %v1763 = vpack.c.bf16 %v1762, %v1762
    %s1764 = scalar_lea.vmem [#allocation7], 2880
    %v1765 = vld [vmem:[%s1764] sm:$0xff]
    %v1766 = vld [vmem:[%s1764 + $0x8] sm:$0xff]
    %v1767 = vld [vmem:[%s1764 + $0x10] sm:$0xff]
    %v1768 = vld [vmem:[%s1764 + $0x18] sm:$0xff]
    %v1769 = vld [vmem:[%s1764 + $0x20] sm:$0xff]
    %v1770 = vld [vmem:[%s1764 + $0x28] sm:$0xff]
    %v1771 = vld [vmem:[%s1764 + $0x30] sm:$0xff]
    %v1772 = vld [vmem:[%s1764 + $0x38] sm:$0xff]
    %v1773 = vld [vmem:[%s1764 + $0x40] sm:$0xff]
    %v1774 = vld [vmem:[%s1764 + $0x48] sm:$0xff]
    %v1775 = vld [vmem:[%s1764 + $0x50] sm:$0xff]
    %v1776 = vld [vmem:[%s1764 + $0x58] sm:$0xff]
    %v1777 = vld [vmem:[%s1764 + $0x60] sm:$0xff]
    %v1778 = vld [vmem:[%s1764 + $0x68] sm:$0xff]
    %v1779 = vld [vmem:[%s1764 + $0x70] sm:$0xff]
    %v1780 = vld [vmem:[%s1764 + $0x78] sm:$0xff]
    %v1797 = vunpack.c.l.b16 %v1765
    %v1798 = vunpack.c.h.b16 %v1765
    %v1799 = vunpack.c.l.b16 %v1766
    %v1800 = vunpack.c.h.b16 %v1766
    %v1801 = vunpack.c.l.b16 %v1767
    %v1802 = vunpack.c.h.b16 %v1767
    %v1803 = vunpack.c.l.b16 %v1768
    %v1804 = vunpack.c.h.b16 %v1768
    %v1805 = vunpack.c.l.b16 %v1769
    %v1806 = vunpack.c.h.b16 %v1769
    %v1807 = vunpack.c.l.b16 %v1770
    %v1808 = vunpack.c.h.b16 %v1770
    %v1809 = vunpack.c.l.b16 %v1771
    %v1810 = vunpack.c.h.b16 %v1771
    %v1811 = vunpack.c.l.b16 %v1772
    %v1812 = vunpack.c.h.b16 %v1772
    %v1813 = vunpack.c.l.b16 %v1773
    %v1814 = vunpack.c.h.b16 %v1773
    %v1815 = vunpack.c.l.b16 %v1774
    %v1816 = vunpack.c.h.b16 %v1774
    %v1817 = vunpack.c.l.b16 %v1775
    %v1818 = vunpack.c.h.b16 %v1775
    %v1819 = vunpack.c.l.b16 %v1776
    %v1820 = vunpack.c.h.b16 %v1776
    %v1821 = vunpack.c.l.b16 %v1777
    %v1822 = vunpack.c.h.b16 %v1777
    %v1823 = vunpack.c.l.b16 %v1778
    %v1824 = vunpack.c.h.b16 %v1778
    %v1825 = vunpack.c.l.b16 %v1779
    %v1826 = vunpack.c.h.b16 %v1779
    %v1827 = vunpack.c.l.b16 %v1780
    %v1828 = vunpack.c.h.b16 %v1780
    %v1829 = vpack.c.b16 %v1799, %v1797
    %v1830 = vpack.c.b16 %v1800, %v1798
    %v1831 = vpack.c.b16 %v1803, %v1801
    %v1832 = vpack.c.b16 %v1804, %v1802
    %v1833 = vpack.c.b16 %v1807, %v1805
    %v1834 = vpack.c.b16 %v1808, %v1806
    %v1835 = vpack.c.b16 %v1811, %v1809
    %v1836 = vpack.c.b16 %v1812, %v1810
    %v1837 = vpack.c.b16 %v1815, %v1813
    %v1838 = vpack.c.b16 %v1816, %v1814
    %v1839 = vpack.c.b16 %v1819, %v1817
    %v1840 = vpack.c.b16 %v1820, %v1818
    %v1841 = vpack.c.b16 %v1823, %v1821
    %v1842 = vpack.c.b16 %v1824, %v1822
    %v1843 = vpack.c.b16 %v1827, %v1825
    %v1844 = vpack.c.b16 %v1828, %v1826
    %1861 = vmatpush.bf16.msra.mxu0 %v1843
    %1862 = vmatpush.bf16.msra.mxu0 %v1841
    %1863 = vmatpush.bf16.msra.mxu0 %v1839
    %1864 = vmatpush.bf16.msra.mxu0 %v1837
    %1865 = vmatpush.bf16.msra.mxu0 %v1835
    %1866 = vmatpush.bf16.msra.mxu0 %v1833
    %1867 = vmatpush.bf16.msra.mxu0 %v1831
    %1868 = vmatpush.bf16.msra.mxu0 %v1829
    %1869 = vmatmul.bf16.gmra.mxu0 %v1763
    %v1870 = vpop.f32.mrf.mxu0
    %v1871 = vadd.f32 0.0, %v1870
    %v1872 = vpop.f32.mrf.mxu0
    %1873 = vdwg.mxu0
    %1874 = vmatpush.bf16.msra.mxu0 %v1844
    %1875 = vmatpush.bf16.msra.mxu0 %v1842
    %1876 = vmatpush.bf16.msra.mxu0 %v1840
    %1877 = vmatpush.bf16.msra.mxu0 %v1838
    %1878 = vmatpush.bf16.msra.mxu0 %v1836
    %1879 = vmatpush.bf16.msra.mxu0 %v1834
    %1880 = vmatpush.bf16.msra.mxu0 %v1832
    %1881 = vmatpush.bf16.msra.mxu0 %v1830
    %1882 = vmatmul.bf16.gmra.mxu0 %v1763
    %v1883 = vpop.f32.mrf.mxu0
    %v1884 = vadd.f32 0.0, %v1883
    %v1885 = vpop.f32.mrf.mxu0
    %1886 = vdwg.mxu0
    %v1903 = vunpack.c.l.b16 %v1602
    %v1904 = vunpack.c.h.b16 %v1602
    %v1905 = vunpack.c.l.b16 %v1603
    %v1906 = vunpack.c.h.b16 %v1603
    %v1907 = vunpack.c.l.b16 %v1604
    %v1908 = vunpack.c.h.b16 %v1604
    %v1909 = vunpack.c.l.b16 %v1605
    %v1910 = vunpack.c.h.b16 %v1605
    %v1911 = vunpack.c.l.b16 %v1606
    %v1912 = vunpack.c.h.b16 %v1606
    %v1913 = vunpack.c.l.b16 %v1607
    %v1914 = vunpack.c.h.b16 %v1607
    %v1915 = vunpack.c.l.b16 %v1608
    %v1916 = vunpack.c.h.b16 %v1608
    %v1917 = vunpack.c.l.b16 %v1609
    %v1918 = vunpack.c.h.b16 %v1609
    %v1919 = vunpack.c.l.b16 %v1610
    %v1920 = vunpack.c.h.b16 %v1610
    %v1921 = vunpack.c.l.b16 %v1611
    %v1922 = vunpack.c.h.b16 %v1611
    %v1923 = vunpack.c.l.b16 %v1612
    %v1924 = vunpack.c.h.b16 %v1612
    %v1925 = vunpack.c.l.b16 %v1613
    %v1926 = vunpack.c.h.b16 %v1613
    %v1927 = vunpack.c.l.b16 %v1614
    %v1928 = vunpack.c.h.b16 %v1614
    %v1929 = vunpack.c.l.b16 %v1615
    %v1930 = vunpack.c.h.b16 %v1615
    %v1931 = vunpack.c.l.b16 %v1616
    %v1932 = vunpack.c.h.b16 %v1616
    %v1933 = vunpack.c.l.b16 %v1617
    %v1934 = vunpack.c.h.b16 %v1617
    %v1935 = vpack.c.b16 %v1905, %v1903
    %v1936 = vpack.c.b16 %v1906, %v1904
    %v1937 = vpack.c.b16 %v1909, %v1907
    %v1938 = vpack.c.b16 %v1910, %v1908
    %v1939 = vpack.c.b16 %v1913, %v1911
    %v1940 = vpack.c.b16 %v1914, %v1912
    %v1941 = vpack.c.b16 %v1917, %v1915
    %v1942 = vpack.c.b16 %v1918, %v1916
    %v1943 = vpack.c.b16 %v1921, %v1919
    %v1944 = vpack.c.b16 %v1922, %v1920
    %v1945 = vpack.c.b16 %v1925, %v1923
    %v1946 = vpack.c.b16 %v1926, %v1924
    %v1947 = vpack.c.b16 %v1929, %v1927
    %v1948 = vpack.c.b16 %v1930, %v1928
    %v1949 = vpack.c.b16 %v1933, %v1931
    %v1950 = vpack.c.b16 %v1934, %v1932
    %1967 = vmatpush.bf16.msra.mxu0 %v1949
    %1968 = vmatpush.bf16.msra.mxu0 %v1947
    %1969 = vmatpush.bf16.msra.mxu0 %v1945
    %1970 = vmatpush.bf16.msra.mxu0 %v1943
    %1971 = vmatpush.bf16.msra.mxu0 %v1941
    %1972 = vmatpush.bf16.msra.mxu0 %v1939
    %1973 = vmatpush.bf16.msra.mxu0 %v1937
    %1974 = vmatpush.bf16.msra.mxu0 %v1935
    %1975 = vmatmul.bf16.gmra.mxu0 %v1600
    %v1976 = vpop.f32.mrf.mxu0
    %v1977 = vadd.f32 %v1727, %v1976
    %v1978 = vpop.f32.mrf.mxu0
    %1979 = vdwg.mxu0
    %1980 = vmatpush.bf16.msra.mxu0 %v1950
    %1981 = vmatpush.bf16.msra.mxu0 %v1948
    %1982 = vmatpush.bf16.msra.mxu0 %v1946
    %1983 = vmatpush.bf16.msra.mxu0 %v1944
    %1984 = vmatpush.bf16.msra.mxu0 %v1942
    %1985 = vmatpush.bf16.msra.mxu0 %v1940
    %1986 = vmatpush.bf16.msra.mxu0 %v1938
    %1987 = vmatpush.bf16.msra.mxu0 %v1936
    %1988 = vmatmul.bf16.gmra.mxu0 %v1600
    %v1989 = vpop.f32.mrf.mxu0
    %v1990 = vadd.f32 %v1740, %v1989
    %v1991 = vpop.f32.mrf.mxu0
    %1992 = vdwg.mxu0
    %v2009 = vunpack.c.l.b16 %v1746
    %v2010 = vunpack.c.h.b16 %v1746
    %v2011 = vunpack.c.l.b16 %v1747
    %v2012 = vunpack.c.h.b16 %v1747
    %v2013 = vunpack.c.l.b16 %v1748
    %v2014 = vunpack.c.h.b16 %v1748
    %v2015 = vunpack.c.l.b16 %v1749
    %v2016 = vunpack.c.h.b16 %v1749
    %v2017 = vunpack.c.l.b16 %v1750
    %v2018 = vunpack.c.h.b16 %v1750
    %v2019 = vunpack.c.l.b16 %v1751
    %v2020 = vunpack.c.h.b16 %v1751
    %v2021 = vunpack.c.l.b16 %v1752
    %v2022 = vunpack.c.h.b16 %v1752
    %v2023 = vunpack.c.l.b16 %v1753
    %v2024 = vunpack.c.h.b16 %v1753
    %v2025 = vunpack.c.l.b16 %v1754
    %v2026 = vunpack.c.h.b16 %v1754
    %v2027 = vunpack.c.l.b16 %v1755
    %v2028 = vunpack.c.h.b16 %v1755
    %v2029 = vunpack.c.l.b16 %v1756
    %v2030 = vunpack.c.h.b16 %v1756
    %v2031 = vunpack.c.l.b16 %v1757
    %v2032 = vunpack.c.h.b16 %v1757
    %v2033 = vunpack.c.l.b16 %v1758
    %v2034 = vunpack.c.h.b16 %v1758
    %v2035 = vunpack.c.l.b16 %v1759
    %v2036 = vunpack.c.h.b16 %v1759
    %v2037 = vunpack.c.l.b16 %v1760
    %v2038 = vunpack.c.h.b16 %v1760
    %v2039 = vunpack.c.l.b16 %v1761
    %v2040 = vunpack.c.h.b16 %v1761
    %v2041 = vpack.c.b16 %v2011, %v2009
    %v2042 = vpack.c.b16 %v2012, %v2010
    %v2043 = vpack.c.b16 %v2015, %v2013
    %v2044 = vpack.c.b16 %v2016, %v2014
    %v2045 = vpack.c.b16 %v2019, %v2017
    %v2046 = vpack.c.b16 %v2020, %v2018
    %v2047 = vpack.c.b16 %v2023, %v2021
    %v2048 = vpack.c.b16 %v2024, %v2022
    %v2049 = vpack.c.b16 %v2027, %v2025
    %v2050 = vpack.c.b16 %v2028, %v2026
    %v2051 = vpack.c.b16 %v2031, %v2029
    %v2052 = vpack.c.b16 %v2032, %v2030
    %v2053 = vpack.c.b16 %v2035, %v2033
    %v2054 = vpack.c.b16 %v2036, %v2034
    %v2055 = vpack.c.b16 %v2039, %v2037
    %v2056 = vpack.c.b16 %v2040, %v2038
    %2073 = vmatpush.bf16.msra.mxu0 %v2055
    %2074 = vmatpush.bf16.msra.mxu0 %v2053
    %2075 = vmatpush.bf16.msra.mxu0 %v2051
    %2076 = vmatpush.bf16.msra.mxu0 %v2049
    %2077 = vmatpush.bf16.msra.mxu0 %v2047
    %2078 = vmatpush.bf16.msra.mxu0 %v2045
    %2079 = vmatpush.bf16.msra.mxu0 %v2043
    %2080 = vmatpush.bf16.msra.mxu0 %v2041
    %2081 = vmatmul.bf16.gmra.mxu0 %v1744
    %v2082 = vpop.f32.mrf.mxu0
    %v2083 = vadd.f32 %v1871, %v2082
    %v2084 = vpop.f32.mrf.mxu0
    %2085 = vdwg.mxu0
    %2086 = vmatpush.bf16.msra.mxu0 %v2056
    %2087 = vmatpush.bf16.msra.mxu0 %v2054
    %2088 = vmatpush.bf16.msra.mxu0 %v2052
    %2089 = vmatpush.bf16.msra.mxu0 %v2050
    %2090 = vmatpush.bf16.msra.mxu0 %v2048
    %2091 = vmatpush.bf16.msra.mxu0 %v2046
    %2092 = vmatpush.bf16.msra.mxu0 %v2044
    %2093 = vmatpush.bf16.msra.mxu0 %v2042
    %2094 = vmatmul.bf16.gmra.mxu0 %v1744
    %v2095 = vpop.f32.mrf.mxu0
    %v2096 = vadd.f32 %v1884, %v2095
    %v2097 = vpop.f32.mrf.mxu0
    %2098 = vdwg.mxu0
    %v2099 = vadd.f32 %v1977, %v2083
    %v2100 = vadd.f32 %v1990, %v2096
    %s2101 = scalar_lea.vmem %s4, 384
    %v2102 = vld [vmem:[%s2101] sm:$0xff]
    %v2103 = vld [vmem:[%s2101 + $0x8] sm:$0xff]
    %v2104 = vld [vmem:[%s2101 + $0x10] sm:$0xff]
    %v2105 = vld [vmem:[%s2101 + $0x18] sm:$0xff]
    %v2106 = vld [vmem:[%s2101 + $0x20] sm:$0xff]
    %v2107 = vld [vmem:[%s2101 + $0x28] sm:$0xff]
    %v2108 = vld [vmem:[%s2101 + $0x30] sm:$0xff]
    %v2109 = vld [vmem:[%s2101 + $0x38] sm:$0xff]
    %v2110 = vld [vmem:[%s2101 + $0x40] sm:$0xff]
    %v2111 = vld [vmem:[%s2101 + $0x48] sm:$0xff]
    %v2112 = vld [vmem:[%s2101 + $0x50] sm:$0xff]
    %v2113 = vld [vmem:[%s2101 + $0x58] sm:$0xff]
    %v2114 = vld [vmem:[%s2101 + $0x60] sm:$0xff]
    %v2115 = vld [vmem:[%s2101 + $0x68] sm:$0xff]
    %v2116 = vld [vmem:[%s2101 + $0x70] sm:$0xff]
    %v2117 = vld [vmem:[%s2101 + $0x78] sm:$0xff]
    %v2118 = vld [vmem:[%s2101 + $0x80] sm:$0xff]
    %v2119 = vld [vmem:[%s2101 + $0x88] sm:$0xff]
    %v2120 = vld [vmem:[%s2101 + $0x90] sm:$0xff]
    %v2121 = vld [vmem:[%s2101 + $0x98] sm:$0xff]
    %v2122 = vld [vmem:[%s2101 + $0xa0] sm:$0xff]
    %v2123 = vld [vmem:[%s2101 + $0xa8] sm:$0xff]
    %v2124 = vld [vmem:[%s2101 + $0xb0] sm:$0xff]
    %v2125 = vld [vmem:[%s2101 + $0xb8] sm:$0xff]
    %s2126 = scalar_lea.vmem [#allocation11], 256
    %v2127 = vld [vmem:[%s2126] sm:$0xff]
    %v2128 = vld [vmem:[%s2126 + $0x8] sm:$0xff]
    %v2129 = vld [vmem:[%s2126 + $0x10] sm:$0xff]
    %v2130 = vld [vmem:[%s2126 + $0x18] sm:$0xff]
    %v2131 = vld [vmem:[%s2126 + $0x20] sm:$0xff]
    %v2132 = vld [vmem:[%s2126 + $0x28] sm:$0xff]
    %v2133 = vld [vmem:[%s2126 + $0x30] sm:$0xff]
    %v2134 = vld [vmem:[%s2126 + $0x38] sm:$0xff]
    %v2135 = vld [vmem:[%s2126 + $0x40] sm:$0xff]
    %v2136 = vld [vmem:[%s2126 + $0x48] sm:$0xff]
    %v2137 = vld [vmem:[%s2126 + $0x50] sm:$0xff]
    %v2138 = vld [vmem:[%s2126 + $0x58] sm:$0xff]
    %v2139 = vld [vmem:[%s2126 + $0x60] sm:$0xff]
    %v2140 = vld [vmem:[%s2126 + $0x68] sm:$0xff]
    %v2141 = vld [vmem:[%s2126 + $0x70] sm:$0xff]
    %v2142 = vld [vmem:[%s2126 + $0x78] sm:$0xff]
    %vm2143 = vcmask 1045504
    %v2144 = vsel %vm2143, %v2099, 0.0
    %v2145 = vrot.slane %v2144, 4
    %v2146 = vadd.f32 %v2144, %v2145
    %v2147 = vrot.slane %v2146, 2
    %v2148 = vadd.f32 %v2146, %v2147
    %v2149 = vrot.slane %v2148, 1
    %v2150 = vadd.f32 %v2148, %v2149
    %vm2151 = vcmask 521216
    %v2152 = vsel %vm2151, %v2100, 0.0
    %v2153 = vrot.slane %v2152, 4
    %v2154 = vadd.f32 %v2152, %v2153
    %v2155 = vrot.slane %v2154, 2
    %v2156 = vadd.f32 %v2154, %v2155
    %v2157 = vrot.slane %v2156, 1
    %v2158 = vadd.f32 %v2156, %v2157
    %v2159 = vmul.f32 %v2099, %v2099
    %v2160 = vmul.f32 %v2100, %v2100
    %v2161 = vsel %vm2143, %v2159, 0.0
    %v2162 = vrot.slane %v2161, 4
    %v2163 = vadd.f32 %v2161, %v2162
    %v2164 = vrot.slane %v2163, 2
    %v2165 = vadd.f32 %v2163, %v2164
    %v2166 = vrot.slane %v2165, 1
    %v2167 = vadd.f32 %v2165, %v2166
    %v2168 = vsel %vm2151, %v2160, 0.0
    %v2169 = vrot.slane %v2168, 4
    %v2170 = vadd.f32 %v2168, %v2169
    %v2171 = vrot.slane %v2170, 2
    %v2172 = vadd.f32 %v2170, %v2171
    %v2173 = vrot.slane %v2172, 1
    %v2174 = vadd.f32 %v2172, %v2173
    %vm2175 = vcmask 523264
    %v2177 = vsel %vm2175, %v2158, 0
    %2179 = vmatpush.msra.mxu0 %v2117
    %2180 = vmatpush.msra.mxu0 %v2116
    %2181 = vmatpush.msra.mxu0 %v2115
    %2182 = vmatpush.msra.mxu0 %v2114
    %2183 = vmatpush.msra.mxu0 %v2113
    %2184 = vmatpush.msra.mxu0 %v2112
    %2185 = vmatpush.msra.mxu0 %v2111
    %2186 = vmatpush.msra.mxu0 %v2110
    %2187 = vmatpush.msra.mxu0 %v2109
    %2188 = vmatpush.msra.mxu0 %v2108
    %2189 = vmatpush.msra.mxu0 %v2107
    %2190 = vmatpush.msra.mxu0 %v2106
    %2191 = vmatpush.msra.mxu0 %v2105
    %2192 = vmatpush.msra.mxu0 %v2104
    %2193 = vmatpush.msra.mxu0 %v2103
    %2194 = vmatpush.msra.mxu0 %v2102
    %2195 = vmatmul.f32.gmra.mxu0 %v2150
    %v2196 = vpop.f32.mrf.mxu0
    %v2197 = vadd.f32 0.0, %v2196
    %2198 = vdwg.mxu0
    %2199 = vmatpush.msra.mxu0 0.0
    %2200 = vmatpush.msra.mxu0 0.0
    %2201 = vmatpush.msra.mxu0 0.0
    %2202 = vmatpush.msra.mxu0 0.0
    %2203 = vmatpush.msra.mxu0 0.0
    %2204 = vmatpush.msra.mxu0 0.0
    %2205 = vmatpush.msra.mxu0 0.0
    %2206 = vmatpush.msra.mxu0 0.0
    %2207 = vmatpush.msra.mxu0 %v2125
    %2208 = vmatpush.msra.mxu0 %v2124
    %2209 = vmatpush.msra.mxu0 %v2123
    %2210 = vmatpush.msra.mxu0 %v2122
    %2211 = vmatpush.msra.mxu0 %v2121
    %2212 = vmatpush.msra.mxu0 %v2120
    %2213 = vmatpush.msra.mxu0 %v2119
    %2214 = vmatpush.msra.mxu0 %v2118
    %2215 = vmatmul.f32.gmra.mxu0 %v2177
    %v2216 = vpop.f32.mrf.mxu0
    %v2217 = vadd.f32 %v2197, %v2216
    %2218 = vdwg.mxu0
    %v2220 = vsel %vm2175, %v2217, 0
    %2222 = vmatpush.msra.mxu0 0.0
    %2223 = vmatpush.msra.mxu0 0.0
    %2224 = vmatpush.msra.mxu0 0.0
    %2225 = vmatpush.msra.mxu0 0.0
    %2226 = vmatpush.msra.mxu0 0.0
    %2227 = vmatpush.msra.mxu0 0.0
    %2228 = vmatpush.msra.mxu0 0.0
    %2229 = vmatpush.msra.mxu0 0.0
    %2230 = vmatpush.msra.mxu0 %v2141
    %2231 = vmatpush.msra.mxu0 %v2139
    %2232 = vmatpush.msra.mxu0 %v2137
    %2233 = vmatpush.msra.mxu0 %v2135
    %2234 = vmatpush.msra.mxu0 %v2133
    %2235 = vmatpush.msra.mxu0 %v2131
    %2236 = vmatpush.msra.mxu0 %v2129
    %2237 = vmatpush.msra.mxu0 %v2127
    %2238 = vmatmul.f32.gmra.mxu0 %v2220
    %v2239 = vpop.f32.mrf.mxu0
    %v2240 = vadd.f32 0.0, %v2239
    %2241 = vdwg.mxu0
    %2242 = vmatpush.msra.mxu0 0.0
    %2243 = vmatpush.msra.mxu0 0.0
    %2244 = vmatpush.msra.mxu0 0.0
    %2245 = vmatpush.msra.mxu0 0.0
    %2246 = vmatpush.msra.mxu0 0.0
    %2247 = vmatpush.msra.mxu0 0.0
    %2248 = vmatpush.msra.mxu0 0.0
    %2249 = vmatpush.msra.mxu0 0.0
    %2250 = vmatpush.msra.mxu0 %v2142
    %2251 = vmatpush.msra.mxu0 %v2140
    %2252 = vmatpush.msra.mxu0 %v2138
    %2253 = vmatpush.msra.mxu0 %v2136
    %2254 = vmatpush.msra.mxu0 %v2134
    %2255 = vmatpush.msra.mxu0 %v2132
    %2256 = vmatpush.msra.mxu0 %v2130
    %2257 = vmatpush.msra.mxu0 %v2128
    %2258 = vmatmul.f32.gmra.mxu0 %v2220
    %v2259 = vpop.f32.mrf.mxu0
    %v2260 = vadd.f32 0.0, %v2259
    %2261 = vdwg.mxu0
    %v2262 = vmul.f32 %v2240, 0.055555556
    %v2263 = vmul.f32 %v2260, 0.055555556
    %v2265 = vsel %vm2175, %v2174, 0
    %2267 = vmatpush.msra.mxu0 %v2117
    %2268 = vmatpush.msra.mxu0 %v2116
    %2269 = vmatpush.msra.mxu0 %v2115
    %2270 = vmatpush.msra.mxu0 %v2114
    %2271 = vmatpush.msra.mxu0 %v2113
    %2272 = vmatpush.msra.mxu0 %v2112
    %2273 = vmatpush.msra.mxu0 %v2111
    %2274 = vmatpush.msra.mxu0 %v2110
    %2275 = vmatpush.msra.mxu0 %v2109
    %2276 = vmatpush.msra.mxu0 %v2108
    %2277 = vmatpush.msra.mxu0 %v2107
    %2278 = vmatpush.msra.mxu0 %v2106
    %2279 = vmatpush.msra.mxu0 %v2105
    %2280 = vmatpush.msra.mxu0 %v2104
    %2281 = vmatpush.msra.mxu0 %v2103
    %2282 = vmatpush.msra.mxu0 %v2102
    %2283 = vmatmul.f32.gmra.mxu0 %v2167
    %v2284 = vpop.f32.mrf.mxu0
    %v2285 = vadd.f32 0.0, %v2284
    %2286 = vdwg.mxu0
    %2287 = vmatpush.msra.mxu0 0.0
    %2288 = vmatpush.msra.mxu0 0.0
    %2289 = vmatpush.msra.mxu0 0.0
    %2290 = vmatpush.msra.mxu0 0.0
    %2291 = vmatpush.msra.mxu0 0.0
    %2292 = vmatpush.msra.mxu0 0.0
    %2293 = vmatpush.msra.mxu0 0.0
    %2294 = vmatpush.msra.mxu0 0.0
    %2295 = vmatpush.msra.mxu0 %v2125
    %2296 = vmatpush.msra.mxu0 %v2124
    %2297 = vmatpush.msra.mxu0 %v2123
    %2298 = vmatpush.msra.mxu0 %v2122
    %2299 = vmatpush.msra.mxu0 %v2121
    %2300 = vmatpush.msra.mxu0 %v2120
    %2301 = vmatpush.msra.mxu0 %v2119
    %2302 = vmatpush.msra.mxu0 %v2118
    %2303 = vmatmul.f32.gmra.mxu0 %v2265
    %v2304 = vpop.f32.mrf.mxu0
    %v2305 = vadd.f32 %v2285, %v2304
    %2306 = vdwg.mxu0
    %v2308 = vsel %vm2175, %v2305, 0
    %2310 = vmatpush.msra.mxu0 0.0
    %2311 = vmatpush.msra.mxu0 0.0
    %2312 = vmatpush.msra.mxu0 0.0
    %2313 = vmatpush.msra.mxu0 0.0
    %2314 = vmatpush.msra.mxu0 0.0
    %2315 = vmatpush.msra.mxu0 0.0
    %2316 = vmatpush.msra.mxu0 0.0
    %2317 = vmatpush.msra.mxu0 0.0
    %2318 = vmatpush.msra.mxu0 %v2141
    %2319 = vmatpush.msra.mxu0 %v2139
    %2320 = vmatpush.msra.mxu0 %v2137
    %2321 = vmatpush.msra.mxu0 %v2135
    %2322 = vmatpush.msra.mxu0 %v2133
    %2323 = vmatpush.msra.mxu0 %v2131
    %2324 = vmatpush.msra.mxu0 %v2129
    %2325 = vmatpush.msra.mxu0 %v2127
    %2326 = vmatmul.f32.gmra.mxu0 %v2308
    %v2327 = vpop.f32.mrf.mxu0
    %v2328 = vadd.f32 0.0, %v2327
    %2329 = vdwg.mxu0
    %2330 = vmatpush.msra.mxu0 0.0
    %2331 = vmatpush.msra.mxu0 0.0
    %2332 = vmatpush.msra.mxu0 0.0
    %2333 = vmatpush.msra.mxu0 0.0
    %2334 = vmatpush.msra.mxu0 0.0
    %2335 = vmatpush.msra.mxu0 0.0
    %2336 = vmatpush.msra.mxu0 0.0
    %2337 = vmatpush.msra.mxu0 0.0
    %2338 = vmatpush.msra.mxu0 %v2142
    %2339 = vmatpush.msra.mxu0 %v2140
    %2340 = vmatpush.msra.mxu0 %v2138
    %2341 = vmatpush.msra.mxu0 %v2136
    %2342 = vmatpush.msra.mxu0 %v2134
    %2343 = vmatpush.msra.mxu0 %v2132
    %2344 = vmatpush.msra.mxu0 %v2130
    %2345 = vmatpush.msra.mxu0 %v2128
    %2346 = vmatmul.f32.gmra.mxu0 %v2308
    %v2347 = vpop.f32.mrf.mxu0
    %v2348 = vadd.f32 0.0, %v2347
    %2349 = vdwg.mxu0
    %v2350 = vmul.f32 %v2328, 0.055555556
    %v2351 = vmul.f32 %v2348, 0.055555556
    %v2352 = vmul.f32 %v2262, %v2262
    %v2353 = vmul.f32 %v2263, %v2263
    %v2354 = vsub.f32 %v2350, %v2352
    %v2355 = vsub.f32 %v2351, %v2353
    %s2356 = scalar_lea.vmem [#allocation9], 12
    %v2357 = vld [vmem:[%s2356] ss:$2 sm:$0x3]
    %s2358 = scalar_lea.vmem %s2356, 1 [#allocation9]
    %v2359 = vld [vmem:[%s2358] ss:$2 sm:$0x3]
    %v2360 = vadd.f32 %v2354, 1e-05
    %v2361 = vadd.f32 %v2355, 1e-05
    %v2362 = vrsqrt.pop %v2360
    %v2363 = vmul.f32 %v2362, %v2360
    %v2364 = vmul.f32 %v2363, %v2362
    %v2365 = vmul.f32 0.5, %v2364
    %v2366 = vsub.f32 1.5, %v2365
    %v2367 = vmul.f32 %v2362, %v2366
    %vm2368 = vweird.f32 %v2360
    %vm2369 = vweird.f32 %v2362
    %vm2370 = vmor %vm2368, %vm2369
    %v2371 = vsel %vm2370, %v2362, %v2367
    %v2372 = vrsqrt.pop %v2361
    %v2373 = vmul.f32 %v2372, %v2361
    %v2374 = vmul.f32 %v2373, %v2372
    %v2375 = vmul.f32 0.5, %v2374
    %v2376 = vsub.f32 1.5, %v2375
    %v2377 = vmul.f32 %v2372, %v2376
    %vm2378 = vweird.f32 %v2361
    %vm2379 = vweird.f32 %v2372
    %vm2380 = vmor %vm2378, %vm2379
    %v2381 = vsel %vm2380, %v2372, %v2377
    %v2384 = vrot.slane %v2381, 7
    %vm2385 = vcmask 1040384
    %v2386 = vsel %vm2385, %v2371, %v2384
    %v2388 = vmul.f32 %v2357, %v2386
    %v2390 = vperm.slane %v2388, 0
    %v2391 = vperm.slane %v2388, 1
    %v2394 = vmul.f32 %v2262, %v2390
    %v2395 = vmul.f32 %v2263, %v2391
    %v2398 = vrot.slane %v2395, 7
    %v2399 = vsel %vm2385, %v2394, %v2398
    %v2401 = vsub.f32 %v2359, %v2399
    %v2402 = vmul.f32 %v2099, %v2390
    %v2403 = vmul.f32 %v2100, %v2391
    %v2405 = vperm.slane %v2401, 0
    %v2406 = vperm.slane %v2401, 1
    %v2409 = vadd.f32 %v2402, %v2405
    %v2410 = vadd.f32 %v2403, %v2406
    %vm2411 = vcmp.gt.f32.partialorder %v2409, 0.0
    %vm2412 = vcmp.gt.f32.partialorder %v2410, 0.0
    %v2413 = vmul.f32 %v2409, 0.2
    %v2414 = vmul.f32 %v2410, 0.2
    %v2415 = vsel %vm2411, %v2409, %v2413
    %v2416 = vsel %vm2412, %v2410, %v2414
    %2417 = vst [vmem:[#allocation5] sm:$0x3f] %v2415
    %2418 = vst.msk [vmem:[#allocation5 + $0x8] sm:$0x3f] %vm2151, %v2416
    %s2419 = scalar_lea.vmem %s1, 128
    %v2420 = vld [vmem:[%s2419] sm:$0xf]
    %v2421 = vld [vmem:[#allocation5] sm:$0x7]
    %v2422 = vld [vmem:[#allocation5 + $0x8] sm:$0x7]
    %v2423 = vpack.c.bf16 %v2421, %v2421
    %v2424 = vpack.c.bf16 %v2422, %v2422
    %vm2425 = vcmask 23552
    %v2427 = vsel %vm2425, %v2420, 0
    %v2429 = vsel %vm2385, 4294967295, 65535
    %v2430 = vsel %vm1533, %v2429, 0
    %v2432 = vand.u32 %v2423, %v2430
    %v2435 = vand.u32 %v2424, %v2430
    %2437 = vmatpush.bf16.msra.mxu0 0
    %2438 = vmatpush.bf16.msra.mxu0 0
    %2439 = vmatpush.bf16.msra.mxu0 0
    %2440 = vmatpush.bf16.msra.mxu0 0
    %2441 = vmatpush.bf16.msra.mxu0 0
    %2442 = vmatpush.bf16.msra.mxu0 0
    %2443 = vmatpush.bf16.msra.mxu0 0
    %2444 = vmatpush.bf16.msra.mxu0 %v2432
    %2445 = vmatmul.bf16.gmra.mxu0 %v2427
    %v2446 = vpop.f32.mrf.mxu0
    %v2447 = vadd.f32 0.0, %v2446
    %v2448 = vpop.f32.mrf.mxu0
    %2449 = vdwg.mxu0
    %2450 = vmatpush.bf16.msra.mxu0 0
    %2451 = vmatpush.bf16.msra.mxu0 0
    %2452 = vmatpush.bf16.msra.mxu0 0
    %2453 = vmatpush.bf16.msra.mxu0 0
    %2454 = vmatpush.bf16.msra.mxu0 0
    %2455 = vmatpush.bf16.msra.mxu0 0
    %2456 = vmatpush.bf16.msra.mxu0 0
    %2457 = vmatpush.bf16.msra.mxu0 %v2435
    %2458 = vmatmul.bf16.gmra.mxu0 %v2427
    %v2459 = vpop.f32.mrf.mxu0
    %v2460 = vadd.f32 0.0, %v2459
    %v2461 = vpop.f32.mrf.mxu0
    %2462 = vdwg.mxu0
    %2463 = vst [vmem:[#allocation6] sm:$0x3] %v2447
    %vm2464 = vcmask 517120
    %2465 = vst.msk [vmem:[#allocation6 + $0x8] sm:$0x3] %vm2464, %v2460
    %v2468 = vrot.slane %v2447, 2
    %v2469 = vrot.slane %v2460, 2
    %2472 = vst [vmem:[%s149] sm:$0x3] %v2468
    %2473 = vst.msk [vmem:[%s149 + $0x8] sm:$0x3] %vm2464, %v2469
    %v2474 = vrot.slane %v2447, 4
    %v2475 = vrot.slane %v2460, 4
    %2478 = vst [vmem:[%s152] sm:$0x3] %v2474
    %2479 = vst.msk [vmem:[%s152 + $0x8] sm:$0x3] %vm2464, %v2475
    %v2480 = vrot.slane %v2447, 6
    %v2481 = vrot.slane %v2460, 6
    %2484 = vst [vmem:[%s155] sm:$0x3] %v2480
    %2485 = vst.msk [vmem:[%s155 + $0x8] sm:$0x3] %vm2464, %v2481
    %v2486 = vld [vmem:[#allocation5] sm:$0x38]
    %v2487 = vld [vmem:[#allocation5 + $0x8] sm:$0x38]
    %v2488 = vpack.c.bf16 %v2486, %v2486
    %v2489 = vpack.c.bf16 %v2487, %v2487
    %v2491 = vshrl.u32 %v2488, 16
    %v2493 = vrot.slane %v2491, 1
    %v2494 = vshll.u32 %v2488, 16
    %v2496 = vrot.slane %v2494, 2
    %v2497 = vor.u32 %v2493, %v2496
    %v2499 = vshrl.u32 %v2489, 16
    %v2501 = vrot.slane %v2499, 1
    %v2502 = vshll.u32 %v2489, 16
    %v2504 = vrot.slane %v2502, 2
    %v2505 = vor.u32 %v2501, %v2504
    %v2507 = vand.u32 %v2497, %v2430
    %v2510 = vand.u32 %v2505, %v2430
    %2512 = vmatpush.bf16.msra.mxu0 0
    %2513 = vmatpush.bf16.msra.mxu0 0
    %2514 = vmatpush.bf16.msra.mxu0 0
    %2515 = vmatpush.bf16.msra.mxu0 0
    %2516 = vmatpush.bf16.msra.mxu0 0
    %2517 = vmatpush.bf16.msra.mxu0 0
    %2518 = vmatpush.bf16.msra.mxu0 0
    %2519 = vmatpush.bf16.msra.mxu0 %v2507
    %2520 = vmatmul.bf16.gmra.mxu0 %v2427
    %v2521 = vpop.f32.mrf.mxu0
    %v2522 = vadd.f32 0.0, %v2521
    %v2523 = vpop.f32.mrf.mxu0
    %2524 = vdwg.mxu0
    %2525 = vmatpush.bf16.msra.mxu0 0
    %2526 = vmatpush.bf16.msra.mxu0 0
    %2527 = vmatpush.bf16.msra.mxu0 0
    %2528 = vmatpush.bf16.msra.mxu0 0
    %2529 = vmatpush.bf16.msra.mxu0 0
    %2530 = vmatpush.bf16.msra.mxu0 0
    %2531 = vmatpush.bf16.msra.mxu0 0
    %2532 = vmatpush.bf16.msra.mxu0 %v2510
    %2533 = vmatmul.bf16.gmra.mxu0 %v2427
    %v2534 = vpop.f32.mrf.mxu0
    %v2535 = vadd.f32 0.0, %v2534
    %v2536 = vpop.f32.mrf.mxu0
    %2537 = vdwg.mxu0
    %v2540 = vrot.slane %v2522, 6
    %v2541 = vrot.slane %v2535, 6
    %2544 = vst [vmem:[#allocation6] sm:$0xc] %v2540
    %vm2545 = vcmask 519170
    %2546 = vst.msk [vmem:[#allocation6 + $0x8] sm:$0xc] %vm2545, %v2541
    %2547 = vst [vmem:[%s149] sm:$0xc] %v2522
    %2548 = vst.msk [vmem:[%s149 + $0x8] sm:$0xc] %vm2545, %v2535
    %v2549 = vrot.slane %v2522, 2
    %v2550 = vrot.slane %v2535, 2
    %2553 = vst [vmem:[%s152] sm:$0xc] %v2549
    %2554 = vst.msk [vmem:[%s152 + $0x8] sm:$0xc] %vm2545, %v2550
    %v2555 = vrot.slane %v2522, 4
    %v2556 = vrot.slane %v2535, 4
    %2559 = vst [vmem:[%s155] sm:$0xc] %v2555
    %2560 = vst.msk [vmem:[%s155 + $0x8] sm:$0xc] %vm2545, %v2556
    %v2561 = vld [vmem:[#allocation6] sm:$0xf]
    %v2562 = vld [vmem:[#allocation6 + $0x8] sm:$0xf]
    %v2563 = vpack.c.bf16 %v2561, %v2561
    %v2564 = vpack.c.bf16 %v2562, %v2562
    %s2565 = scalar_lea.vmem [#allocation7], 3072
    %v2566 = vld [vmem:[%s2565] sm:$0xf]
    %v2567 = vld [vmem:[%s2565 + $0x8] sm:$0xf]
    %v2568 = vld [vmem:[%s2565 + $0x10] sm:$0xf]
    %v2569 = vld [vmem:[%s2565 + $0x18] sm:$0xf]
    %v2570 = vld [vmem:[%s2565 + $0x20] sm:$0xf]
    %v2571 = vld [vmem:[%s2565 + $0x28] sm:$0xf]
    %v2572 = vld [vmem:[%s2565 + $0x30] sm:$0xf]
    %v2573 = vld [vmem:[%s2565 + $0x38] sm:$0xf]
    %v2574 = vld [vmem:[%s2565 + $0x40] sm:$0xf]
    %v2575 = vld [vmem:[%s2565 + $0x48] sm:$0xf]
    %v2576 = vld [vmem:[%s2565 + $0x50] sm:$0xf]
    %v2577 = vld [vmem:[%s2565 + $0x58] sm:$0xf]
    %v2578 = vld [vmem:[%s2565 + $0x60] sm:$0xf]
    %v2579 = vld [vmem:[%s2565 + $0x68] sm:$0xf]
    %v2580 = vld [vmem:[%s2565 + $0x70] sm:$0xf]
    %v2581 = vld [vmem:[%s2565 + $0x78] sm:$0xf]
    %v2582 = vld [vmem:[%s2565 + $0x80] sm:$0xf]
    %v2583 = vld [vmem:[%s2565 + $0x88] sm:$0xf]
    %v2584 = vld [vmem:[%s2565 + $0x90] sm:$0xf]
    %v2585 = vld [vmem:[%s2565 + $0x98] sm:$0xf]
    %v2586 = vld [vmem:[%s2565 + $0xa0] sm:$0xf]
    %v2587 = vld [vmem:[%s2565 + $0xa8] sm:$0xf]
    %v2588 = vld [vmem:[%s2565 + $0xb0] sm:$0xf]
    %v2589 = vld [vmem:[%s2565 + $0xb8] sm:$0xf]
    %v2590 = vld [vmem:[%s149] sm:$0xf]
    %v2591 = vld [vmem:[%s149 + $0x8] sm:$0xf]
    %v2592 = vpack.c.bf16 %v2590, %v2590
    %v2593 = vpack.c.bf16 %v2591, %v2591
    %s2594 = scalar_lea.vmem [#allocation7], 3264
    %v2595 = vld [vmem:[%s2594] sm:$0xf]
    %v2596 = vld [vmem:[%s2594 + $0x8] sm:$0xf]
    %v2597 = vld [vmem:[%s2594 + $0x10] sm:$0xf]
    %v2598 = vld [vmem:[%s2594 + $0x18] sm:$0xf]
    %v2599 = vld [vmem:[%s2594 + $0x20] sm:$0xf]
    %v2600 = vld [vmem:[%s2594 + $0x28] sm:$0xf]
    %v2601 = vld [vmem:[%s2594 + $0x30] sm:$0xf]
    %v2602 = vld [vmem:[%s2594 + $0x38] sm:$0xf]
    %v2603 = vld [vmem:[%s2594 + $0x40] sm:$0xf]
    %v2604 = vld [vmem:[%s2594 + $0x48] sm:$0xf]
    %v2605 = vld [vmem:[%s2594 + $0x50] sm:$0xf]
    %v2606 = vld [vmem:[%s2594 + $0x58] sm:$0xf]
    %v2607 = vld [vmem:[%s2594 + $0x60] sm:$0xf]
    %v2608 = vld [vmem:[%s2594 + $0x68] sm:$0xf]
    %v2609 = vld [vmem:[%s2594 + $0x70] sm:$0xf]
    %v2610 = vld [vmem:[%s2594 + $0x78] sm:$0xf]
    %v2611 = vld [vmem:[%s2594 + $0x80] sm:$0xf]
    %v2612 = vld [vmem:[%s2594 + $0x88] sm:$0xf]
    %v2613 = vld [vmem:[%s2594 + $0x90] sm:$0xf]
    %v2614 = vld [vmem:[%s2594 + $0x98] sm:$0xf]
    %v2615 = vld [vmem:[%s2594 + $0xa0] sm:$0xf]
    %v2616 = vld [vmem:[%s2594 + $0xa8] sm:$0xf]
    %v2617 = vld [vmem:[%s2594 + $0xb0] sm:$0xf]
    %v2618 = vld [vmem:[%s2594 + $0xb8] sm:$0xf]
    %v2643 = vunpack.c.l.b16 %v2595
    %v2644 = vunpack.c.l.b16 %v2596
    %v2645 = vunpack.c.l.b16 %v2597
    %v2646 = vunpack.c.l.b16 %v2598
    %v2647 = vunpack.c.l.b16 %v2599
    %v2648 = vunpack.c.l.b16 %v2600
    %v2649 = vunpack.c.l.b16 %v2601
    %v2650 = vunpack.c.l.b16 %v2602
    %v2651 = vunpack.c.l.b16 %v2603
    %v2652 = vunpack.c.l.b16 %v2604
    %v2653 = vunpack.c.l.b16 %v2605
    %v2654 = vunpack.c.l.b16 %v2606
    %v2655 = vunpack.c.l.b16 %v2607
    %v2656 = vunpack.c.l.b16 %v2608
    %v2657 = vunpack.c.l.b16 %v2609
    %v2658 = vunpack.c.l.b16 %v2610
    %v2659 = vunpack.c.l.b16 %v2611
    %v2660 = vunpack.c.l.b16 %v2612
    %v2661 = vunpack.c.l.b16 %v2613
    %v2662 = vunpack.c.l.b16 %v2614
    %v2663 = vunpack.c.l.b16 %v2615
    %v2664 = vunpack.c.l.b16 %v2616
    %v2665 = vunpack.c.l.b16 %v2617
    %v2666 = vunpack.c.l.b16 %v2618
    %v2667 = vpack.c.b16 %v2644, %v2643
    %v2668 = vpack.c.b16 %v2646, %v2645
    %v2669 = vpack.c.b16 %v2648, %v2647
    %v2670 = vpack.c.b16 %v2650, %v2649
    %v2671 = vpack.c.b16 %v2652, %v2651
    %v2672 = vpack.c.b16 %v2654, %v2653
    %v2673 = vpack.c.b16 %v2656, %v2655
    %v2674 = vpack.c.b16 %v2658, %v2657
    %v2675 = vpack.c.b16 %v2660, %v2659
    %v2676 = vpack.c.b16 %v2662, %v2661
    %v2677 = vpack.c.b16 %v2664, %v2663
    %v2678 = vpack.c.b16 %v2666, %v2665
    %v2692 = vsel %vm2175, %v2593, 0
    %2694 = vmatpush.bf16.msra.mxu0 %v2674
    %2695 = vmatpush.bf16.msra.mxu0 %v2673
    %2696 = vmatpush.bf16.msra.mxu0 %v2672
    %2697 = vmatpush.bf16.msra.mxu0 %v2671
    %2698 = vmatpush.bf16.msra.mxu0 %v2670
    %2699 = vmatpush.bf16.msra.mxu0 %v2669
    %2700 = vmatpush.bf16.msra.mxu0 %v2668
    %2701 = vmatpush.bf16.msra.mxu0 %v2667
    %2702 = vmatmul.bf16.gmra.mxu0 %v2592
    %v2703 = vpop.f32.mrf.mxu0
    %v2704 = vadd.f32 0.0, %v2703
    %v2705 = vpop.f32.mrf.mxu0
    %2706 = vdwg.mxu0
    %2707 = vmatpush.bf16.msra.mxu0 0
    %2708 = vmatpush.bf16.msra.mxu0 0
    %2709 = vmatpush.bf16.msra.mxu0 0
    %2710 = vmatpush.bf16.msra.mxu0 0
    %2711 = vmatpush.bf16.msra.mxu0 %v2678
    %2712 = vmatpush.bf16.msra.mxu0 %v2677
    %2713 = vmatpush.bf16.msra.mxu0 %v2676
    %2714 = vmatpush.bf16.msra.mxu0 %v2675
    %2715 = vmatmul.bf16.gmra.mxu0 %v2692
    %v2716 = vpop.f32.mrf.mxu0
    %v2717 = vadd.f32 %v2704, %v2716
    %v2718 = vpop.f32.mrf.mxu0
    %2719 = vdwg.mxu0
    %v2720 = vld [vmem:[%s152] sm:$0xf]
    %v2721 = vld [vmem:[%s152 + $0x8] sm:$0xf]
    %v2722 = vpack.c.bf16 %v2720, %v2720
    %v2723 = vpack.c.bf16 %v2721, %v2721
    %s2724 = scalar_lea.vmem [#allocation7], 3456
    %v2725 = vld [vmem:[%s2724] sm:$0xf]
    %v2726 = vld [vmem:[%s2724 + $0x8] sm:$0xf]
    %v2727 = vld [vmem:[%s2724 + $0x10] sm:$0xf]
    %v2728 = vld [vmem:[%s2724 + $0x18] sm:$0xf]
    %v2729 = vld [vmem:[%s2724 + $0x20] sm:$0xf]
    %v2730 = vld [vmem:[%s2724 + $0x28] sm:$0xf]
    %v2731 = vld [vmem:[%s2724 + $0x30] sm:$0xf]
    %v2732 = vld [vmem:[%s2724 + $0x38] sm:$0xf]
    %v2733 = vld [vmem:[%s2724 + $0x40] sm:$0xf]
    %v2734 = vld [vmem:[%s2724 + $0x48] sm:$0xf]
    %v2735 = vld [vmem:[%s2724 + $0x50] sm:$0xf]
    %v2736 = vld [vmem:[%s2724 + $0x58] sm:$0xf]
    %v2737 = vld [vmem:[%s2724 + $0x60] sm:$0xf]
    %v2738 = vld [vmem:[%s2724 + $0x68] sm:$0xf]
    %v2739 = vld [vmem:[%s2724 + $0x70] sm:$0xf]
    %v2740 = vld [vmem:[%s2724 + $0x78] sm:$0xf]
    %v2741 = vld [vmem:[%s2724 + $0x80] sm:$0xf]
    %v2742 = vld [vmem:[%s2724 + $0x88] sm:$0xf]
    %v2743 = vld [vmem:[%s2724 + $0x90] sm:$0xf]
    %v2744 = vld [vmem:[%s2724 + $0x98] sm:$0xf]
    %v2745 = vld [vmem:[%s2724 + $0xa0] sm:$0xf]
    %v2746 = vld [vmem:[%s2724 + $0xa8] sm:$0xf]
    %v2747 = vld [vmem:[%s2724 + $0xb0] sm:$0xf]
    %v2748 = vld [vmem:[%s2724 + $0xb8] sm:$0xf]
    %v2749 = vld [vmem:[%s155] sm:$0xf]
    %v2750 = vld [vmem:[%s155 + $0x8] sm:$0xf]
    %v2751 = vpack.c.bf16 %v2749, %v2749
    %v2752 = vpack.c.bf16 %v2750, %v2750
    %s2753 = scalar_lea.vmem [#allocation7], 3648
    %v2754 = vld [vmem:[%s2753] sm:$0xf]
    %v2755 = vld [vmem:[%s2753 + $0x8] sm:$0xf]
    %v2756 = vld [vmem:[%s2753 + $0x10] sm:$0xf]
    %v2757 = vld [vmem:[%s2753 + $0x18] sm:$0xf]
    %v2758 = vld [vmem:[%s2753 + $0x20] sm:$0xf]
    %v2759 = vld [vmem:[%s2753 + $0x28] sm:$0xf]
    %v2760 = vld [vmem:[%s2753 + $0x30] sm:$0xf]
    %v2761 = vld [vmem:[%s2753 + $0x38] sm:$0xf]
    %v2762 = vld [vmem:[%s2753 + $0x40] sm:$0xf]
    %v2763 = vld [vmem:[%s2753 + $0x48] sm:$0xf]
    %v2764 = vld [vmem:[%s2753 + $0x50] sm:$0xf]
    %v2765 = vld [vmem:[%s2753 + $0x58] sm:$0xf]
    %v2766 = vld [vmem:[%s2753 + $0x60] sm:$0xf]
    %v2767 = vld [vmem:[%s2753 + $0x68] sm:$0xf]
    %v2768 = vld [vmem:[%s2753 + $0x70] sm:$0xf]
    %v2769 = vld [vmem:[%s2753 + $0x78] sm:$0xf]
    %v2770 = vld [vmem:[%s2753 + $0x80] sm:$0xf]
    %v2771 = vld [vmem:[%s2753 + $0x88] sm:$0xf]
    %v2772 = vld [vmem:[%s2753 + $0x90] sm:$0xf]
    %v2773 = vld [vmem:[%s2753 + $0x98] sm:$0xf]
    %v2774 = vld [vmem:[%s2753 + $0xa0] sm:$0xf]
    %v2775 = vld [vmem:[%s2753 + $0xa8] sm:$0xf]
    %v2776 = vld [vmem:[%s2753 + $0xb0] sm:$0xf]
    %v2777 = vld [vmem:[%s2753 + $0xb8] sm:$0xf]
    %v2802 = vunpack.c.l.b16 %v2754
    %v2803 = vunpack.c.l.b16 %v2755
    %v2804 = vunpack.c.l.b16 %v2756
    %v2805 = vunpack.c.l.b16 %v2757
    %v2806 = vunpack.c.l.b16 %v2758
    %v2807 = vunpack.c.l.b16 %v2759
    %v2808 = vunpack.c.l.b16 %v2760
    %v2809 = vunpack.c.l.b16 %v2761
    %v2810 = vunpack.c.l.b16 %v2762
    %v2811 = vunpack.c.l.b16 %v2763
    %v2812 = vunpack.c.l.b16 %v2764
    %v2813 = vunpack.c.l.b16 %v2765
    %v2814 = vunpack.c.l.b16 %v2766
    %v2815 = vunpack.c.l.b16 %v2767
    %v2816 = vunpack.c.l.b16 %v2768
    %v2817 = vunpack.c.l.b16 %v2769
    %v2818 = vunpack.c.l.b16 %v2770
    %v2819 = vunpack.c.l.b16 %v2771
    %v2820 = vunpack.c.l.b16 %v2772
    %v2821 = vunpack.c.l.b16 %v2773
    %v2822 = vunpack.c.l.b16 %v2774
    %v2823 = vunpack.c.l.b16 %v2775
    %v2824 = vunpack.c.l.b16 %v2776
    %v2825 = vunpack.c.l.b16 %v2777
    %v2826 = vpack.c.b16 %v2803, %v2802
    %v2827 = vpack.c.b16 %v2805, %v2804
    %v2828 = vpack.c.b16 %v2807, %v2806
    %v2829 = vpack.c.b16 %v2809, %v2808
    %v2830 = vpack.c.b16 %v2811, %v2810
    %v2831 = vpack.c.b16 %v2813, %v2812
    %v2832 = vpack.c.b16 %v2815, %v2814
    %v2833 = vpack.c.b16 %v2817, %v2816
    %v2834 = vpack.c.b16 %v2819, %v2818
    %v2835 = vpack.c.b16 %v2821, %v2820
    %v2836 = vpack.c.b16 %v2823, %v2822
    %v2837 = vpack.c.b16 %v2825, %v2824
    %v2851 = vsel %vm2175, %v2752, 0
    %2853 = vmatpush.bf16.msra.mxu0 %v2833
    %2854 = vmatpush.bf16.msra.mxu0 %v2832
    %2855 = vmatpush.bf16.msra.mxu0 %v2831
    %2856 = vmatpush.bf16.msra.mxu0 %v2830
    %2857 = vmatpush.bf16.msra.mxu0 %v2829
    %2858 = vmatpush.bf16.msra.mxu0 %v2828
    %2859 = vmatpush.bf16.msra.mxu0 %v2827
    %2860 = vmatpush.bf16.msra.mxu0 %v2826
    %2861 = vmatmul.bf16.gmra.mxu0 %v2751
    %v2862 = vpop.f32.mrf.mxu0
    %v2863 = vadd.f32 0.0, %v2862
    %v2864 = vpop.f32.mrf.mxu0
    %2865 = vdwg.mxu0
    %2866 = vmatpush.bf16.msra.mxu0 0
    %2867 = vmatpush.bf16.msra.mxu0 0
    %2868 = vmatpush.bf16.msra.mxu0 0
    %2869 = vmatpush.bf16.msra.mxu0 0
    %2870 = vmatpush.bf16.msra.mxu0 %v2837
    %2871 = vmatpush.bf16.msra.mxu0 %v2836
    %2872 = vmatpush.bf16.msra.mxu0 %v2835
    %2873 = vmatpush.bf16.msra.mxu0 %v2834
    %2874 = vmatmul.bf16.gmra.mxu0 %v2851
    %v2875 = vpop.f32.mrf.mxu0
    %v2876 = vadd.f32 %v2863, %v2875
    %v2877 = vpop.f32.mrf.mxu0
    %2878 = vdwg.mxu0
    %v2903 = vunpack.c.l.b16 %v2566
    %v2904 = vunpack.c.l.b16 %v2567
    %v2905 = vunpack.c.l.b16 %v2568
    %v2906 = vunpack.c.l.b16 %v2569
    %v2907 = vunpack.c.l.b16 %v2570
    %v2908 = vunpack.c.l.b16 %v2571
    %v2909 = vunpack.c.l.b16 %v2572
    %v2910 = vunpack.c.l.b16 %v2573
    %v2911 = vunpack.c.l.b16 %v2574
    %v2912 = vunpack.c.l.b16 %v2575
    %v2913 = vunpack.c.l.b16 %v2576
    %v2914 = vunpack.c.l.b16 %v2577
    %v2915 = vunpack.c.l.b16 %v2578
    %v2916 = vunpack.c.l.b16 %v2579
    %v2917 = vunpack.c.l.b16 %v2580
    %v2918 = vunpack.c.l.b16 %v2581
    %v2919 = vunpack.c.l.b16 %v2582
    %v2920 = vunpack.c.l.b16 %v2583
    %v2921 = vunpack.c.l.b16 %v2584
    %v2922 = vunpack.c.l.b16 %v2585
    %v2923 = vunpack.c.l.b16 %v2586
    %v2924 = vunpack.c.l.b16 %v2587
    %v2925 = vunpack.c.l.b16 %v2588
    %v2926 = vunpack.c.l.b16 %v2589
    %v2927 = vpack.c.b16 %v2904, %v2903
    %v2928 = vpack.c.b16 %v2906, %v2905
    %v2929 = vpack.c.b16 %v2908, %v2907
    %v2930 = vpack.c.b16 %v2910, %v2909
    %v2931 = vpack.c.b16 %v2912, %v2911
    %v2932 = vpack.c.b16 %v2914, %v2913
    %v2933 = vpack.c.b16 %v2916, %v2915
    %v2934 = vpack.c.b16 %v2918, %v2917
    %v2935 = vpack.c.b16 %v2920, %v2919
    %v2936 = vpack.c.b16 %v2922, %v2921
    %v2937 = vpack.c.b16 %v2924, %v2923
    %v2938 = vpack.c.b16 %v2926, %v2925
    %v2952 = vsel %vm2175, %v2564, 0
    %2954 = vmatpush.bf16.msra.mxu0 %v2934
    %2955 = vmatpush.bf16.msra.mxu0 %v2933
    %2956 = vmatpush.bf16.msra.mxu0 %v2932
    %2957 = vmatpush.bf16.msra.mxu0 %v2931
    %2958 = vmatpush.bf16.msra.mxu0 %v2930
    %2959 = vmatpush.bf16.msra.mxu0 %v2929
    %2960 = vmatpush.bf16.msra.mxu0 %v2928
    %2961 = vmatpush.bf16.msra.mxu0 %v2927
    %2962 = vmatmul.bf16.gmra.mxu0 %v2563
    %v2963 = vpop.f32.mrf.mxu0
    %v2964 = vadd.f32 %v2717, %v2963
    %v2965 = vpop.f32.mrf.mxu0
    %2966 = vdwg.mxu0
    %2967 = vmatpush.bf16.msra.mxu0 0
    %2968 = vmatpush.bf16.msra.mxu0 0
    %2969 = vmatpush.bf16.msra.mxu0 0
    %2970 = vmatpush.bf16.msra.mxu0 0
    %2971 = vmatpush.bf16.msra.mxu0 %v2938
    %2972 = vmatpush.bf16.msra.mxu0 %v2937
    %2973 = vmatpush.bf16.msra.mxu0 %v2936
    %2974 = vmatpush.bf16.msra.mxu0 %v2935
    %2975 = vmatmul.bf16.gmra.mxu0 %v2952
    %v2976 = vpop.f32.mrf.mxu0
    %v2977 = vadd.f32 %v2964, %v2976
    %v2978 = vpop.f32.mrf.mxu0
    %2979 = vdwg.mxu0
    %v3004 = vunpack.c.l.b16 %v2725
    %v3005 = vunpack.c.l.b16 %v2726
    %v3006 = vunpack.c.l.b16 %v2727
    %v3007 = vunpack.c.l.b16 %v2728
    %v3008 = vunpack.c.l.b16 %v2729
    %v3009 = vunpack.c.l.b16 %v2730
    %v3010 = vunpack.c.l.b16 %v2731
    %v3011 = vunpack.c.l.b16 %v2732
    %v3012 = vunpack.c.l.b16 %v2733
    %v3013 = vunpack.c.l.b16 %v2734
    %v3014 = vunpack.c.l.b16 %v2735
    %v3015 = vunpack.c.l.b16 %v2736
    %v3016 = vunpack.c.l.b16 %v2737
    %v3017 = vunpack.c.l.b16 %v2738
    %v3018 = vunpack.c.l.b16 %v2739
    %v3019 = vunpack.c.l.b16 %v2740
    %v3020 = vunpack.c.l.b16 %v2741
    %v3021 = vunpack.c.l.b16 %v2742
    %v3022 = vunpack.c.l.b16 %v2743
    %v3023 = vunpack.c.l.b16 %v2744
    %v3024 = vunpack.c.l.b16 %v2745
    %v3025 = vunpack.c.l.b16 %v2746
    %v3026 = vunpack.c.l.b16 %v2747
    %v3027 = vunpack.c.l.b16 %v2748
    %v3028 = vpack.c.b16 %v3005, %v3004
    %v3029 = vpack.c.b16 %v3007, %v3006
    %v3030 = vpack.c.b16 %v3009, %v3008
    %v3031 = vpack.c.b16 %v3011, %v3010
    %v3032 = vpack.c.b16 %v3013, %v3012
    %v3033 = vpack.c.b16 %v3015, %v3014
    %v3034 = vpack.c.b16 %v3017, %v3016
    %v3035 = vpack.c.b16 %v3019, %v3018
    %v3036 = vpack.c.b16 %v3021, %v3020
    %v3037 = vpack.c.b16 %v3023, %v3022
    %v3038 = vpack.c.b16 %v3025, %v3024
    %v3039 = vpack.c.b16 %v3027, %v3026
    %v3053 = vsel %vm2175, %v2723, 0
    %3055 = vmatpush.bf16.msra.mxu0 %v3035
    %3056 = vmatpush.bf16.msra.mxu0 %v3034
    %3057 = vmatpush.bf16.msra.mxu0 %v3033
    %3058 = vmatpush.bf16.msra.mxu0 %v3032
    %3059 = vmatpush.bf16.msra.mxu0 %v3031
    %3060 = vmatpush.bf16.msra.mxu0 %v3030
    %3061 = vmatpush.bf16.msra.mxu0 %v3029
    %3062 = vmatpush.bf16.msra.mxu0 %v3028
    %3063 = vmatmul.bf16.gmra.mxu0 %v2722
    %v3064 = vpop.f32.mrf.mxu0
    %v3065 = vadd.f32 %v2876, %v3064
    %v3066 = vpop.f32.mrf.mxu0
    %3067 = vdwg.mxu0
    %3068 = vmatpush.bf16.msra.mxu0 0
    %3069 = vmatpush.bf16.msra.mxu0 0
    %3070 = vmatpush.bf16.msra.mxu0 0
    %3071 = vmatpush.bf16.msra.mxu0 0
    %3072 = vmatpush.bf16.msra.mxu0 %v3039
    %3073 = vmatpush.bf16.msra.mxu0 %v3038
    %3074 = vmatpush.bf16.msra.mxu0 %v3037
    %3075 = vmatpush.bf16.msra.mxu0 %v3036
    %3076 = vmatmul.bf16.gmra.mxu0 %v3053
    %v3077 = vpop.f32.mrf.mxu0
    %v3078 = vadd.f32 %v3065, %v3077
    %v3079 = vpop.f32.mrf.mxu0
    %3080 = vdwg.mxu0
    %v3081 = vadd.f32 %v2977, %v3078
    %s3082 = scalar_lea.vmem [#allocation9], 16
    %v3083 = vld [vmem:[%s3082] sm:$0x1]
    %v3084 = vperm.slane %v3083, 0
    %v3085 = vadd.f32 %v3081, %v3084
    %vm3086 = vcmask 11264
    %3087 = vst.msk [vmem:[%s6] sm:$0xf] %vm3086, %v3085
    // Predicated region
    $region38: #{tpu_custom_call.1} parent=1 // pred_check
      _
    $region39: #{tpu_custom_call.1} parent=1 // pred_check_branch
      %3089 = sbr.rel (0) target = $region41
    $region40: #{tpu_custom_call.1} parent=1 // pred_region
      _
    $region41: #{tpu_custom_call.1} parent=1 // pred_fallthru
      _
    // Predicated region
    $region42: #{tpu_custom_call.1} parent=1 // pred_check
      _
    $region43: #{tpu_custom_call.1} parent=1 // pred_check_branch
      %3091 = sbr.rel (0) target = $region45
    $region44: #{tpu_custom_call.1} parent=1 // pred_region
      _
    $region45: #{tpu_custom_call.1} parent=1 // pred_fallthru
      _
    %3092 = vsyncpa [#allocation8], 1
    %3093 = vsyncpa [#allocation10], 1

</llo_original>
